<compile_context>
chip_gen: v6e
topology: v6e:2x2x1
jax: 0.10.0
libtpu: 0.0.40
codegen_flags: <defaults>
</compile_context>

<pallas_src>
import jax
import jax.numpy as jnp
from jax import lax
from jax.experimental import pallas as pl


# ----------------------------------------------------------------------------
# Fused SiameseNet kernel (built per num_layers)
# ----------------------------------------------------------------------------
def _make_siamese_kernel(num_layers):
    def kernel(*refs):
        xs_ref = refs[0]                              # (T, 2B, E)  x1 | x2
        layer_refs = refs[1:1 + 3 * num_layers]       # (wih_t, whh_t, bias)*L
        wh_ref, bh_ref, ws_ref, bs_ref, out_ref = refs[1 + 3 * num_layers:]

        T, BB, _ = xs_ref.shape                       # BB = 2 * batch
        B = BB // 2
        H = layer_refs[1].shape[0]                    # whh_t: (H, 4H)
        O = wh_ref.shape[1]                           # head output dim (50)
        N = out_ref.shape[1]                          # similarity length (= T)

        # Load weights once; hoist bias broadcasts out of the time loop.
        layers = []
        for l in range(num_layers):
            wih = layer_refs[3 * l][...]
            whh = layer_refs[3 * l + 1][...]
            bias = jnp.broadcast_to(layer_refs[3 * l + 2][...], (BB, 4 * H))
            layers.append((wih, whh, bias))
        w_head = wh_ref[...]
        b_head = jnp.broadcast_to(bh_ref[...], (BB, O))

        def lstm_cell(x_t, h_prev, c_prev, wih, whh, bias):
            gates = (jnp.dot(x_t, wih, preferred_element_type=jnp.float32)
                     + jnp.dot(h_prev, whh, preferred_element_type=jnp.float32)
                     + bias)                           # (BB, 4H), order [i,f,g,o]
            sig = jax.nn.sigmoid(gates)                # full-width EUP pass
            tnh = jnp.tanh(gates)                      # full-width EUP pass
            i_g = sig[:, 0 * H:1 * H]
            f_g = sig[:, 1 * H:2 * H]
            g_g = tnh[:, 2 * H:3 * H]
            o_g = sig[:, 3 * H:4 * H]
            c_new = f_g * c_prev + i_g * g_g
            h_new = o_g * jnp.tanh(c_new)
            return h_new, c_new

        zeros = jnp.zeros((BB, H), jnp.float32)
        init = tuple([zeros] * (2 * num_layers)) + (jnp.zeros((1, 1), jnp.float32),)

        def step(t, carry):
            states = list(carry[:-1])
            dist = carry[-1]
            inp = xs_ref[t]                            # (2B, E)
            for l, (wih, whh, bias) in enumerate(layers):
                h, c = lstm_cell(inp, states[2 * l], states[2 * l + 1],
                                 wih, whh, bias)
                states[2 * l], states[2 * l + 1] = h, c
                inp = h
            # Encoder head for this timestep, both inputs at once.
            emb = jnp.dot(inp, w_head, preferred_element_type=jnp.float32) + b_head
            diff = emb[:B, :] - emb[B:, :]             # embed1_t - embed2_t
            dist = dist + jnp.sum(jnp.abs(diff), keepdims=True)   # (1, 1)
            return tuple(states) + (dist,)

        carry = lax.fori_loop(0, T, step, init, unroll=True)
        dist = carry[-1]                               # (1, 1)

        # SiameseNet head. similarity_score is a length-N vector whose every
        # entry equals d = exp(-dist) (exactly what the PyTorch loop writes).
        # Linear(N, N): logits[j] = sum_i d * W^T[i, j] + b[j]; computed as a
        # VPU multiply + sublane reduce (avoids a degenerate 1xN MXU op).
        d = jnp.exp(-dist)                             # (1, 1)
        sim = jnp.broadcast_to(d, (N, N))              # sim vector per column
        logits = jnp.sum(sim * ws_ref[...], axis=0, keepdims=True) + bs_ref[...]
        out_ref[...] = jax.nn.sigmoid(logits).astype(out_ref.dtype)

    return kernel


# ----------------------------------------------------------------------------
# Wrapper: one pallas_call for the whole SiameseNet forward
# ----------------------------------------------------------------------------
@jax.jit
def siamese_forward(x1, x2, params):
    num_layers = len(params["layers"])
    T, B, E = x1.shape
    N = T                                              # embed1.size()[0]

    # One bulk input slab: input1 batch rows first, input2 batch rows second.
    xs = jnp.concatenate([x1, x2], axis=1)             # (T, 2B, E)

    inputs = [xs]
    in_specs = [pl.BlockSpec(xs.shape, lambda: (0, 0, 0))]
    for (wih_t, whh_t, b) in params["layers"]:
        for w in (wih_t, whh_t, b):
            inputs.append(w)
            in_specs.append(pl.BlockSpec(w.shape, lambda: (0, 0)))
    for w in (params["head_w_t"], params["head_b"],
              params["sim_w_t"], params["sim_b"]):
        inputs.append(w)
        in_specs.append(pl.BlockSpec(w.shape, lambda: (0, 0)))

    out = pl.pallas_call(
        _make_siamese_kernel(num_layers),
        out_shape=jax.ShapeDtypeStruct((1, N), jnp.float32),
        in_specs=in_specs,
        out_specs=pl.BlockSpec((1, N), lambda: (0, 0)),
    )(*inputs)
    return out.reshape(N)


# ----------------------------------------------------------------------------
# Deterministic parameter init (mimics PyTorch uniform(-k, k))
# ----------------------------------------------------------------------------
def init_params(key, embedding_dim, hidden, num_layers, emb_out=50, sim_dim=8):
    layers = []
    k = 1.0 / float(hidden) ** 0.5
    for l in range(num_layers):
        in_dim = embedding_dim if l == 0 else hidden
        key, k1, k2, k3, k4 = jax.random.split(key, 5)
        w_ih = jax.random.uniform(k1, (4 * hidden, in_dim), jnp.float32, -k, k)
        w_hh = jax.random.uniform(k2, (4 * hidden, hidden), jnp.float32, -k, k)
        b_ih = jax.random.uniform(k3, (4 * hidden,), jnp.float32, -k, k)
        b_hh = jax.random.uniform(k4, (4 * hidden,), jnp.float32, -k, k)
        layers.append((w_ih.T, w_hh.T, (b_ih + b_hh).reshape(1, 4 * hidden)))
    key, k5, k6, k7, k8 = jax.random.split(key, 5)
    kh = 1.0 / float(hidden) ** 0.5
    head_w = jax.random.uniform(k5, (emb_out, hidden), jnp.float32, -kh, kh)
    head_b = jax.random.uniform(k6, (emb_out,), jnp.float32, -kh, kh)
    ks = 1.0 / float(sim_dim) ** 0.5
    sim_w = jax.random.uniform(k7, (sim_dim, sim_dim), jnp.float32, -ks, ks)
    sim_b = jax.random.uniform(k8, (sim_dim,), jnp.float32, -ks, ks)
    return {"layers": layers,
            "head_w_t": head_w.T, "head_b": head_b.reshape(1, emb_out),
            "sim_w_t": sim_w.T, "sim_b": sim_b.reshape(1, sim_dim)}


# ----------------------------------------------------------------------------
# Pure-JAX reference (matches torch semantics) for verification
# ----------------------------------------------------------------------------
def reference_forward(x1, x2, params):
    def encoder(x):
        out = x
        for (w_ih_t, w_hh_t, b) in params["layers"]:
            T, B, _ = out.shape
            H = w_hh_t.shape[0]

            def stepfn(carry, x_t):
                h, c = carry
                gates = x_t @ w_ih_t + h @ w_hh_t + b[0]
                i = jax.nn.sigmoid(gates[:, 0 * H:1 * H])
                f = jax.nn.sigmoid(gates[:, 1 * H:2 * H])
                g = jnp.tanh(gates[:, 2 * H:3 * H])
                o = jax.nn.sigmoid(gates[:, 3 * H:4 * H])
                c = f * c + i * g
                h = o * jnp.tanh(c)
                return (h, c), h

            init = (jnp.zeros((B, H), jnp.float32),
                    jnp.zeros((B, H), jnp.float32))
            _, out = lax.scan(stepfn, init, out)
        return out @ params["head_w_t"] + params["head_b"][0]

    e1 = encoder(x1)
    e2 = encoder(x2)
    d = jnp.exp(-jnp.sum(jnp.abs(e1 - e2)))
    n = e1.shape[0]
    sim = jnp.full((n,), d, jnp.float32)
    logits = sim @ params["sim_w_t"] + params["sim_b"][0]
    return jax.nn.sigmoid(logits)


if __name__ == "__main__":
    # Small shapes consistent with the module's forward.
    seq_len, batch, embedding_dim = 8, 4, 16
    hidden_cells, num_layers = 32, 2
    # embed1.size()[0] == seq_len for the batch_first=False encoder output,
    # so the SiameseNet Linear is (input_batch, input_batch) with:
    input_batch = seq_len

    key = jax.random.PRNGKey(0)
    key, kx1, kx2 = jax.random.split(key, 3)
    x1 = jax.random.normal(kx1, (seq_len, batch, embedding_dim), jnp.float32)
    # Second input close to the first so exp(-manhattan_distance) is non-trivial.
    x2 = x1 + 0.005 * jax.random.normal(kx2, x1.shape, jnp.float32)

    params = init_params(key, embedding_dim, hidden_cells, num_layers,
                         emb_out=50, sim_dim=input_batch)

    out = jax.block_until_ready(siamese_forward(x1, x2, params))
    ref = reference_forward(x1, x2, params)

    assert out.shape == (input_batch,), out.shape
    assert bool(jnp.all(jnp.isfinite(out)))
    assert jnp.allclose(out, ref, atol=1e-3, rtol=1e-3), \
        float(jnp.max(jnp.abs(out - ref)))

    print("KERNEL_OK")
</pallas_src>

<mosaic_0001>
module attributes {stable_mosaic.version = 11 : i64} {
  func.func @kernel(%arg0: memref<8x8x16xf32, #tpu.memory_space<vmem>>, %arg1: memref<16x128xf32, #tpu.memory_space<vmem>>, %arg2: memref<32x128xf32, #tpu.memory_space<vmem>>, %arg3: memref<1x128xf32, #tpu.memory_space<vmem>>, %arg4: memref<32x128xf32, #tpu.memory_space<vmem>>, %arg5: memref<32x128xf32, #tpu.memory_space<vmem>>, %arg6: memref<1x128xf32, #tpu.memory_space<vmem>>, %arg7: memref<32x50xf32, #tpu.memory_space<vmem>>, %arg8: memref<1x50xf32, #tpu.memory_space<vmem>>, %arg9: memref<8x8xf32, #tpu.memory_space<vmem>>, %arg10: memref<1x8xf32, #tpu.memory_space<vmem>>, %arg11: memref<1x8xf32, #tpu.memory_space<vmem>>) attributes {dimension_semantics = [], scalar_prefetch = 0 : i64, scratch_operands = 0 : i64, tpu.core_type = #tpu.core_type<tc>} {
    %c0 = arith.constant 0 : index
    %c0_0 = arith.constant 0 : index
    %0 = vector.load %arg1[%c0, %c0_0] : memref<16x128xf32, #tpu.memory_space<vmem>>, vector<16x128xf32>
    %c0_1 = arith.constant 0 : index
    %c0_2 = arith.constant 0 : index
    %1 = vector.load %arg2[%c0_1, %c0_2] : memref<32x128xf32, #tpu.memory_space<vmem>>, vector<32x128xf32>
    %c0_3 = arith.constant 0 : index
    %c0_4 = arith.constant 0 : index
    %2 = vector.load %arg3[%c0_3, %c0_4] : memref<1x128xf32, #tpu.memory_space<vmem>>, vector<1x128xf32>
    %3 = vector.shape_cast %2 : vector<1x128xf32> to vector<1x128xf32>
    %4 = vector.broadcast %3 : vector<1x128xf32> to vector<8x128xf32>
    %c0_5 = arith.constant 0 : index
    %c0_6 = arith.constant 0 : index
    %5 = vector.load %arg4[%c0_5, %c0_6] : memref<32x128xf32, #tpu.memory_space<vmem>>, vector<32x128xf32>
    %c0_7 = arith.constant 0 : index
    %c0_8 = arith.constant 0 : index
    %6 = vector.load %arg5[%c0_7, %c0_8] : memref<32x128xf32, #tpu.memory_space<vmem>>, vector<32x128xf32>
    %c0_9 = arith.constant 0 : index
    %c0_10 = arith.constant 0 : index
    %7 = vector.load %arg6[%c0_9, %c0_10] : memref<1x128xf32, #tpu.memory_space<vmem>>, vector<1x128xf32>
    %8 = vector.shape_cast %7 : vector<1x128xf32> to vector<1x128xf32>
    %9 = vector.broadcast %8 : vector<1x128xf32> to vector<8x128xf32>
    %c0_11 = arith.constant 0 : index
    %c0_12 = arith.constant 0 : index
    %10 = vector.load %arg7[%c0_11, %c0_12] : memref<32x50xf32, #tpu.memory_space<vmem>>, vector<32x50xf32>
    %c0_13 = arith.constant 0 : index
    %c0_14 = arith.constant 0 : index
    %11 = vector.load %arg8[%c0_13, %c0_14] : memref<1x50xf32, #tpu.memory_space<vmem>>, vector<1x50xf32>
    %12 = vector.shape_cast %11 : vector<1x50xf32> to vector<1x50xf32>
    %13 = vector.broadcast %12 : vector<1x50xf32> to vector<8x50xf32>
    %cst = arith.constant 0.000000e+00 : f32
    %14 = vector.broadcast %cst : f32 to vector<8x32xf32>
    %cst_15 = arith.constant 0.000000e+00 : f32
    %15 = vector.broadcast %cst_15 : f32 to vector<1x1xf32>
    %c0_i32 = arith.constant 0 : i32
    %16 = arith.index_cast %c0_i32 : i32 to index
    %c0_16 = arith.constant 0 : index
    %c0_17 = arith.constant 0 : index
    %17 = vector.load %arg0[%16, %c0_16, %c0_17] : memref<8x8x16xf32, #tpu.memory_space<vmem>>, vector<1x8x16xf32>
    %18 = vector.shape_cast %17 : vector<1x8x16xf32> to vector<8x16xf32>
    %cst_18 = arith.constant dense<0.000000e+00> : vector<8x128xf32>
    %19 = tpu.matmul %18, %0, %cst_18 {dimension_numbers = #tpu.dot_dimension_numbers<[1], [0], [0], [1], [0, 0, 1, 1], [], []>} : vector<8x16xf32>, vector<16x128xf32>, vector<8x128xf32> -> vector<8x128xf32>
    %cst_19 = arith.constant dense<0.000000e+00> : vector<8x128xf32>
    %20 = tpu.matmul %14, %1, %cst_19 {dimension_numbers = #tpu.dot_dimension_numbers<[1], [0], [0], [1], [0, 0, 1, 1], [], []>} : vector<8x32xf32>, vector<32x128xf32>, vector<8x128xf32> -> vector<8x128xf32>
    %21 = arith.addf %19, %20 : vector<8x128xf32>
    %22 = arith.addf %21, %4 : vector<8x128xf32>
    %23 = arith.negf %22 : vector<8x128xf32>
    %24 = math.exp %23 : vector<8x128xf32>
    %cst_20 = arith.constant 1.000000e+00 : f32
    %25 = vector.broadcast %cst_20 : f32 to vector<8x128xf32>
    %26 = arith.addf %25, %24 : vector<8x128xf32>
    %27 = arith.divf %25, %26 : vector<8x128xf32>
    %28 = math.tanh %22 : vector<8x128xf32>
    %29 = vector.extract_strided_slice %27 {offsets = [0, 0], sizes = [8, 32], strides = [1, 1]} : vector<8x128xf32> to vector<8x32xf32>
    %30 = vector.extract_strided_slice %27 {offsets = [0, 32], sizes = [8, 32], strides = [1, 1]} : vector<8x128xf32> to vector<8x32xf32>
    %31 = vector.extract_strided_slice %28 {offsets = [0, 64], sizes = [8, 32], strides = [1, 1]} : vector<8x128xf32> to vector<8x32xf32>
    %32 = vector.extract_strided_slice %27 {offsets = [0, 96], sizes = [8, 32], strides = [1, 1]} : vector<8x128xf32> to vector<8x32xf32>
    %33 = arith.mulf %30, %14 : vector<8x32xf32>
    %34 = arith.mulf %29, %31 : vector<8x32xf32>
    %35 = arith.addf %33, %34 : vector<8x32xf32>
    %36 = math.tanh %35 : vector<8x32xf32>
    %37 = arith.mulf %32, %36 : vector<8x32xf32>
    %cst_21 = arith.constant dense<0.000000e+00> : vector<8x128xf32>
    %38 = tpu.matmul %37, %5, %cst_21 {dimension_numbers = #tpu.dot_dimension_numbers<[1], [0], [0], [1], [0, 0, 1, 1], [], []>} : vector<8x32xf32>, vector<32x128xf32>, vector<8x128xf32> -> vector<8x128xf32>
    %cst_22 = arith.constant dense<0.000000e+00> : vector<8x128xf32>
    %39 = tpu.matmul %14, %6, %cst_22 {dimension_numbers = #tpu.dot_dimension_numbers<[1], [0], [0], [1], [0, 0, 1, 1], [], []>} : vector<8x32xf32>, vector<32x128xf32>, vector<8x128xf32> -> vector<8x128xf32>
    %40 = arith.addf %38, %39 : vector<8x128xf32>
    %41 = arith.addf %40, %9 : vector<8x128xf32>
    %42 = arith.negf %41 : vector<8x128xf32>
    %43 = math.exp %42 : vector<8x128xf32>
    %cst_23 = arith.constant 1.000000e+00 : f32
    %44 = vector.broadcast %cst_23 : f32 to vector<8x128xf32>
    %45 = arith.addf %44, %43 : vector<8x128xf32>
    %46 = arith.divf %44, %45 : vector<8x128xf32>
    %47 = math.tanh %41 : vector<8x128xf32>
    %48 = vector.extract_strided_slice %46 {offsets = [0, 0], sizes = [8, 32], strides = [1, 1]} : vector<8x128xf32> to vector<8x32xf32>
    %49 = vector.extract_strided_slice %46 {offsets = [0, 32], sizes = [8, 32], strides = [1, 1]} : vector<8x128xf32> to vector<8x32xf32>
    %50 = vector.extract_strided_slice %47 {offsets = [0, 64], sizes = [8, 32], strides = [1, 1]} : vector<8x128xf32> to vector<8x32xf32>
    %51 = vector.extract_strided_slice %46 {offsets = [0, 96], sizes = [8, 32], strides = [1, 1]} : vector<8x128xf32> to vector<8x32xf32>
    %52 = arith.mulf %49, %14 : vector<8x32xf32>
    %53 = arith.mulf %48, %50 : vector<8x32xf32>
    %54 = arith.addf %52, %53 : vector<8x32xf32>
    %55 = math.tanh %54 : vector<8x32xf32>
    %56 = arith.mulf %51, %55 : vector<8x32xf32>
    %cst_24 = arith.constant dense<0.000000e+00> : vector<8x50xf32>
    %57 = tpu.matmul %56, %10, %cst_24 {dimension_numbers = #tpu.dot_dimension_numbers<[1], [0], [0], [1], [0, 0, 1, 1], [], []>} : vector<8x32xf32>, vector<32x50xf32>, vector<8x50xf32> -> vector<8x50xf32>
    %58 = arith.addf %57, %13 : vector<8x50xf32>
    %59 = vector.extract_strided_slice %58 {offsets = [0, 0], sizes = [4, 50], strides = [1, 1]} : vector<8x50xf32> to vector<4x50xf32>
    %60 = vector.extract_strided_slice %58 {offsets = [4, 0], sizes = [4, 50], strides = [1, 1]} : vector<8x50xf32> to vector<4x50xf32>
    %61 = arith.subf %59, %60 : vector<4x50xf32>
    %62 = math.absf %61 : vector<4x50xf32>
    %63 = vector.shape_cast %62 : vector<4x50xf32> to vector<1x4x50xf32>
    %cst_25 = arith.constant dense<0.000000e+00> : vector<1xf32>
    %64 = vector.multi_reduction <add>, %63, %cst_25 [1, 2] : vector<1x4x50xf32> to vector<1xf32>
    %65 = vector.shape_cast %64 : vector<1xf32> to vector<1x1x1xf32>
    %66 = vector.extract %65[0, 0, 0] : f32 from vector<1x1x1xf32>
    %67 = vector.broadcast %66 : f32 to vector<1x1xf32>
    %68 = arith.addf %15, %67 : vector<1x1xf32>
    %c1_i32 = arith.constant 1 : i32
    %69 = arith.index_cast %c1_i32 : i32 to index
    %c0_26 = arith.constant 0 : index
    %c0_27 = arith.constant 0 : index
    %70 = vector.load %arg0[%69, %c0_26, %c0_27] : memref<8x8x16xf32, #tpu.memory_space<vmem>>, vector<1x8x16xf32>
    %71 = vector.shape_cast %70 : vector<1x8x16xf32> to vector<8x16xf32>
    %cst_28 = arith.constant dense<0.000000e+00> : vector<8x128xf32>
    %72 = tpu.matmul %71, %0, %cst_28 {dimension_numbers = #tpu.dot_dimension_numbers<[1], [0], [0], [1], [0, 0, 1, 1], [], []>} : vector<8x16xf32>, vector<16x128xf32>, vector<8x128xf32> -> vector<8x128xf32>
    %cst_29 = arith.constant dense<0.000000e+00> : vector<8x128xf32>
    %73 = tpu.matmul %37, %1, %cst_29 {dimension_numbers = #tpu.dot_dimension_numbers<[1], [0], [0], [1], [0, 0, 1, 1], [], []>} : vector<8x32xf32>, vector<32x128xf32>, vector<8x128xf32> -> vector<8x128xf32>
    %74 = arith.addf %72, %73 : vector<8x128xf32>
    %75 = arith.addf %74, %4 : vector<8x128xf32>
    %76 = arith.negf %75 : vector<8x128xf32>
    %77 = math.exp %76 : vector<8x128xf32>
    %cst_30 = arith.constant 1.000000e+00 : f32
    %78 = vector.broadcast %cst_30 : f32 to vector<8x128xf32>
    %79 = arith.addf %78, %77 : vector<8x128xf32>
    %80 = arith.divf %78, %79 : vector<8x128xf32>
    %81 = math.tanh %75 : vector<8x128xf32>
    %82 = vector.extract_strided_slice %80 {offsets = [0, 0], sizes = [8, 32], strides = [1, 1]} : vector<8x128xf32> to vector<8x32xf32>
    %83 = vector.extract_strided_slice %80 {offsets = [0, 32], sizes = [8, 32], strides = [1, 1]} : vector<8x128xf32> to vector<8x32xf32>
    %84 = vector.extract_strided_slice %81 {offsets = [0, 64], sizes = [8, 32], strides = [1, 1]} : vector<8x128xf32> to vector<8x32xf32>
    %85 = vector.extract_strided_slice %80 {offsets = [0, 96], sizes = [8, 32], strides = [1, 1]} : vector<8x128xf32> to vector<8x32xf32>
    %86 = arith.mulf %83, %35 : vector<8x32xf32>
    %87 = arith.mulf %82, %84 : vector<8x32xf32>
    %88 = arith.addf %86, %87 : vector<8x32xf32>
    %89 = math.tanh %88 : vector<8x32xf32>
    %90 = arith.mulf %85, %89 : vector<8x32xf32>
    %cst_31 = arith.constant dense<0.000000e+00> : vector<8x128xf32>
    %91 = tpu.matmul %90, %5, %cst_31 {dimension_numbers = #tpu.dot_dimension_numbers<[1], [0], [0], [1], [0, 0, 1, 1], [], []>} : vector<8x32xf32>, vector<32x128xf32>, vector<8x128xf32> -> vector<8x128xf32>
    %cst_32 = arith.constant dense<0.000000e+00> : vector<8x128xf32>
    %92 = tpu.matmul %56, %6, %cst_32 {dimension_numbers = #tpu.dot_dimension_numbers<[1], [0], [0], [1], [0, 0, 1, 1], [], []>} : vector<8x32xf32>, vector<32x128xf32>, vector<8x128xf32> -> vector<8x128xf32>
    %93 = arith.addf %91, %92 : vector<8x128xf32>
    %94 = arith.addf %93, %9 : vector<8x128xf32>
    %95 = arith.negf %94 : vector<8x128xf32>
    %96 = math.exp %95 : vector<8x128xf32>
    %cst_33 = arith.constant 1.000000e+00 : f32
    %97 = vector.broadcast %cst_33 : f32 to vector<8x128xf32>
    %98 = arith.addf %97, %96 : vector<8x128xf32>
    %99 = arith.divf %97, %98 : vector<8x128xf32>
    %100 = math.tanh %94 : vector<8x128xf32>
    %101 = vector.extract_strided_slice %99 {offsets = [0, 0], sizes = [8, 32], strides = [1, 1]} : vector<8x128xf32> to vector<8x32xf32>
    %102 = vector.extract_strided_slice %99 {offsets = [0, 32], sizes = [8, 32], strides = [1, 1]} : vector<8x128xf32> to vector<8x32xf32>
    %103 = vector.extract_strided_slice %100 {offsets = [0, 64], sizes = [8, 32], strides = [1, 1]} : vector<8x128xf32> to vector<8x32xf32>
    %104 = vector.extract_strided_slice %99 {offsets = [0, 96], sizes = [8, 32], strides = [1, 1]} : vector<8x128xf32> to vector<8x32xf32>
    %105 = arith.mulf %102, %54 : vector<8x32xf32>
    %106 = arith.mulf %101, %103 : vector<8x32xf32>
    %107 = arith.addf %105, %106 : vector<8x32xf32>
    %108 = math.tanh %107 : vector<8x32xf32>
    %109 = arith.mulf %104, %108 : vector<8x32xf32>
    %cst_34 = arith.constant dense<0.000000e+00> : vector<8x50xf32>
    %110 = tpu.matmul %109, %10, %cst_34 {dimension_numbers = #tpu.dot_dimension_numbers<[1], [0], [0], [1], [0, 0, 1, 1], [], []>} : vector<8x32xf32>, vector<32x50xf32>, vector<8x50xf32> -> vector<8x50xf32>
    %111 = arith.addf %110, %13 : vector<8x50xf32>
    %112 = vector.extract_strided_slice %111 {offsets = [0, 0], sizes = [4, 50], strides = [1, 1]} : vector<8x50xf32> to vector<4x50xf32>
    %113 = vector.extract_strided_slice %111 {offsets = [4, 0], sizes = [4, 50], strides = [1, 1]} : vector<8x50xf32> to vector<4x50xf32>
    %114 = arith.subf %112, %113 : vector<4x50xf32>
    %115 = math.absf %114 : vector<4x50xf32>
    %116 = vector.shape_cast %115 : vector<4x50xf32> to vector<1x4x50xf32>
    %cst_35 = arith.constant dense<0.000000e+00> : vector<1xf32>
    %117 = vector.multi_reduction <add>, %116, %cst_35 [1, 2] : vector<1x4x50xf32> to vector<1xf32>
    %118 = vector.shape_cast %117 : vector<1xf32> to vector<1x1x1xf32>
    %119 = vector.extract %118[0, 0, 0] : f32 from vector<1x1x1xf32>
    %120 = vector.broadcast %119 : f32 to vector<1x1xf32>
    %121 = arith.addf %68, %120 : vector<1x1xf32>
    %c2_i32 = arith.constant 2 : i32
    %122 = arith.index_cast %c2_i32 : i32 to index
    %c0_36 = arith.constant 0 : index
    %c0_37 = arith.constant 0 : index
    %123 = vector.load %arg0[%122, %c0_36, %c0_37] : memref<8x8x16xf32, #tpu.memory_space<vmem>>, vector<1x8x16xf32>
    %124 = vector.shape_cast %123 : vector<1x8x16xf32> to vector<8x16xf32>
    %cst_38 = arith.constant dense<0.000000e+00> : vector<8x128xf32>
    %125 = tpu.matmul %124, %0, %cst_38 {dimension_numbers = #tpu.dot_dimension_numbers<[1], [0], [0], [1], [0, 0, 1, 1], [], []>} : vector<8x16xf32>, vector<16x128xf32>, vector<8x128xf32> -> vector<8x128xf32>
    %cst_39 = arith.constant dense<0.000000e+00> : vector<8x128xf32>
    %126 = tpu.matmul %90, %1, %cst_39 {dimension_numbers = #tpu.dot_dimension_numbers<[1], [0], [0], [1], [0, 0, 1, 1], [], []>} : vector<8x32xf32>, vector<32x128xf32>, vector<8x128xf32> -> vector<8x128xf32>
    %127 = arith.addf %125, %126 : vector<8x128xf32>
    %128 = arith.addf %127, %4 : vector<8x128xf32>
    %129 = arith.negf %128 : vector<8x128xf32>
    %130 = math.exp %129 : vector<8x128xf32>
    %cst_40 = arith.constant 1.000000e+00 : f32
    %131 = vector.broadcast %cst_40 : f32 to vector<8x128xf32>
    %132 = arith.addf %131, %130 : vector<8x128xf32>
    %133 = arith.divf %131, %132 : vector<8x128xf32>
    %134 = math.tanh %128 : vector<8x128xf32>
    %135 = vector.extract_strided_slice %133 {offsets = [0, 0], sizes = [8, 32], strides = [1, 1]} : vector<8x128xf32> to vector<8x32xf32>
    %136 = vector.extract_strided_slice %133 {offsets = [0, 32], sizes = [8, 32], strides = [1, 1]} : vector<8x128xf32> to vector<8x32xf32>
    %137 = vector.extract_strided_slice %134 {offsets = [0, 64], sizes = [8, 32], strides = [1, 1]} : vector<8x128xf32> to vector<8x32xf32>
    %138 = vector.extract_strided_slice %133 {offsets = [0, 96], sizes = [8, 32], strides = [1, 1]} : vector<8x128xf32> to vector<8x32xf32>
    %139 = arith.mulf %136, %88 : vector<8x32xf32>
    %140 = arith.mulf %135, %137 : vector<8x32xf32>
    %141 = arith.addf %139, %140 : vector<8x32xf32>
    %142 = math.tanh %141 : vector<8x32xf32>
    %143 = arith.mulf %138, %142 : vector<8x32xf32>
    %cst_41 = arith.constant dense<0.000000e+00> : vector<8x128xf32>
    %144 = tpu.matmul %143, %5, %cst_41 {dimension_numbers = #tpu.dot_dimension_numbers<[1], [0], [0], [1], [0, 0, 1, 1], [], []>} : vector<8x32xf32>, vector<32x128xf32>, vector<8x128xf32> -> vector<8x128xf32>
    %cst_42 = arith.constant dense<0.000000e+00> : vector<8x128xf32>
    %145 = tpu.matmul %109, %6, %cst_42 {dimension_numbers = #tpu.dot_dimension_numbers<[1], [0], [0], [1], [0, 0, 1, 1], [], []>} : vector<8x32xf32>, vector<32x128xf32>, vector<8x128xf32> -> vector<8x128xf32>
    %146 = arith.addf %144, %145 : vector<8x128xf32>
    %147 = arith.addf %146, %9 : vector<8x128xf32>
    %148 = arith.negf %147 : vector<8x128xf32>
    %149 = math.exp %148 : vector<8x128xf32>
    %cst_43 = arith.constant 1.000000e+00 : f32
    %150 = vector.broadcast %cst_43 : f32 to vector<8x128xf32>
    %151 = arith.addf %150, %149 : vector<8x128xf32>
    %152 = arith.divf %150, %151 : vector<8x128xf32>
    %153 = math.tanh %147 : vector<8x128xf32>
    %154 = vector.extract_strided_slice %152 {offsets = [0, 0], sizes = [8, 32], strides = [1, 1]} : vector<8x128xf32> to vector<8x32xf32>
    %155 = vector.extract_strided_slice %152 {offsets = [0, 32], sizes = [8, 32], strides = [1, 1]} : vector<8x128xf32> to vector<8x32xf32>
    %156 = vector.extract_strided_slice %153 {offsets = [0, 64], sizes = [8, 32], strides = [1, 1]} : vector<8x128xf32> to vector<8x32xf32>
    %157 = vector.extract_strided_slice %152 {offsets = [0, 96], sizes = [8, 32], strides = [1, 1]} : vector<8x128xf32> to vector<8x32xf32>
    %158 = arith.mulf %155, %107 : vector<8x32xf32>
    %159 = arith.mulf %154, %156 : vector<8x32xf32>
    %160 = arith.addf %158, %159 : vector<8x32xf32>
    %161 = math.tanh %160 : vector<8x32xf32>
    %162 = arith.mulf %157, %161 : vector<8x32xf32>
    %cst_44 = arith.constant dense<0.000000e+00> : vector<8x50xf32>
    %163 = tpu.matmul %162, %10, %cst_44 {dimension_numbers = #tpu.dot_dimension_numbers<[1], [0], [0], [1], [0, 0, 1, 1], [], []>} : vector<8x32xf32>, vector<32x50xf32>, vector<8x50xf32> -> vector<8x50xf32>
    %164 = arith.addf %163, %13 : vector<8x50xf32>
    %165 = vector.extract_strided_slice %164 {offsets = [0, 0], sizes = [4, 50], strides = [1, 1]} : vector<8x50xf32> to vector<4x50xf32>
    %166 = vector.extract_strided_slice %164 {offsets = [4, 0], sizes = [4, 50], strides = [1, 1]} : vector<8x50xf32> to vector<4x50xf32>
    %167 = arith.subf %165, %166 : vector<4x50xf32>
    %168 = math.absf %167 : vector<4x50xf32>
    %169 = vector.shape_cast %168 : vector<4x50xf32> to vector<1x4x50xf32>
    %cst_45 = arith.constant dense<0.000000e+00> : vector<1xf32>
    %170 = vector.multi_reduction <add>, %169, %cst_45 [1, 2] : vector<1x4x50xf32> to vector<1xf32>
    %171 = vector.shape_cast %170 : vector<1xf32> to vector<1x1x1xf32>
    %172 = vector.extract %171[0, 0, 0] : f32 from vector<1x1x1xf32>
    %173 = vector.broadcast %172 : f32 to vector<1x1xf32>
    %174 = arith.addf %121, %173 : vector<1x1xf32>
    %c3_i32 = arith.constant 3 : i32
    %175 = arith.index_cast %c3_i32 : i32 to index
    %c0_46 = arith.constant 0 : index
    %c0_47 = arith.constant 0 : index
    %176 = vector.load %arg0[%175, %c0_46, %c0_47] : memref<8x8x16xf32, #tpu.memory_space<vmem>>, vector<1x8x16xf32>
    %177 = vector.shape_cast %176 : vector<1x8x16xf32> to vector<8x16xf32>
    %cst_48 = arith.constant dense<0.000000e+00> : vector<8x128xf32>
    %178 = tpu.matmul %177, %0, %cst_48 {dimension_numbers = #tpu.dot_dimension_numbers<[1], [0], [0], [1], [0, 0, 1, 1], [], []>} : vector<8x16xf32>, vector<16x128xf32>, vector<8x128xf32> -> vector<8x128xf32>
    %cst_49 = arith.constant dense<0.000000e+00> : vector<8x128xf32>
    %179 = tpu.matmul %143, %1, %cst_49 {dimension_numbers = #tpu.dot_dimension_numbers<[1], [0], [0], [1], [0, 0, 1, 1], [], []>} : vector<8x32xf32>, vector<32x128xf32>, vector<8x128xf32> -> vector<8x128xf32>
    %180 = arith.addf %178, %179 : vector<8x128xf32>
    %181 = arith.addf %180, %4 : vector<8x128xf32>
    %182 = arith.negf %181 : vector<8x128xf32>
    %183 = math.exp %182 : vector<8x128xf32>
    %cst_50 = arith.constant 1.000000e+00 : f32
    %184 = vector.broadcast %cst_50 : f32 to vector<8x128xf32>
    %185 = arith.addf %184, %183 : vector<8x128xf32>
    %186 = arith.divf %184, %185 : vector<8x128xf32>
    %187 = math.tanh %181 : vector<8x128xf32>
    %188 = vector.extract_strided_slice %186 {offsets = [0, 0], sizes = [8, 32], strides = [1, 1]} : vector<8x128xf32> to vector<8x32xf32>
    %189 = vector.extract_strided_slice %186 {offsets = [0, 32], sizes = [8, 32], strides = [1, 1]} : vector<8x128xf32> to vector<8x32xf32>
    %190 = vector.extract_strided_slice %187 {offsets = [0, 64], sizes = [8, 32], strides = [1, 1]} : vector<8x128xf32> to vector<8x32xf32>
    %191 = vector.extract_strided_slice %186 {offsets = [0, 96], sizes = [8, 32], strides = [1, 1]} : vector<8x128xf32> to vector<8x32xf32>
    %192 = arith.mulf %189, %141 : vector<8x32xf32>
    %193 = arith.mulf %188, %190 : vector<8x32xf32>
    %194 = arith.addf %192, %193 : vector<8x32xf32>
    %195 = math.tanh %194 : vector<8x32xf32>
    %196 = arith.mulf %191, %195 : vector<8x32xf32>
    %cst_51 = arith.constant dense<0.000000e+00> : vector<8x128xf32>
    %197 = tpu.matmul %196, %5, %cst_51 {dimension_numbers = #tpu.dot_dimension_numbers<[1], [0], [0], [1], [0, 0, 1, 1], [], []>} : vector<8x32xf32>, vector<32x128xf32>, vector<8x128xf32> -> vector<8x128xf32>
    %cst_52 = arith.constant dense<0.000000e+00> : vector<8x128xf32>
    %198 = tpu.matmul %162, %6, %cst_52 {dimension_numbers = #tpu.dot_dimension_numbers<[1], [0], [0], [1], [0, 0, 1, 1], [], []>} : vector<8x32xf32>, vector<32x128xf32>, vector<8x128xf32> -> vector<8x128xf32>
    %199 = arith.addf %197, %198 : vector<8x128xf32>
    %200 = arith.addf %199, %9 : vector<8x128xf32>
    %201 = arith.negf %200 : vector<8x128xf32>
    %202 = math.exp %201 : vector<8x128xf32>
    %cst_53 = arith.constant 1.000000e+00 : f32
    %203 = vector.broadcast %cst_53 : f32 to vector<8x128xf32>
    %204 = arith.addf %203, %202 : vector<8x128xf32>
    %205 = arith.divf %203, %204 : vector<8x128xf32>
    %206 = math.tanh %200 : vector<8x128xf32>
    %207 = vector.extract_strided_slice %205 {offsets = [0, 0], sizes = [8, 32], strides = [1, 1]} : vector<8x128xf32> to vector<8x32xf32>
    %208 = vector.extract_strided_slice %205 {offsets = [0, 32], sizes = [8, 32], strides = [1, 1]} : vector<8x128xf32> to vector<8x32xf32>
    %209 = vector.extract_strided_slice %206 {offsets = [0, 64], sizes = [8, 32], strides = [1, 1]} : vector<8x128xf32> to vector<8x32xf32>
    %210 = vector.extract_strided_slice %205 {offsets = [0, 96], sizes = [8, 32], strides = [1, 1]} : vector<8x128xf32> to vector<8x32xf32>
    %211 = arith.mulf %208, %160 : vector<8x32xf32>
    %212 = arith.mulf %207, %209 : vector<8x32xf32>
    %213 = arith.addf %211, %212 : vector<8x32xf32>
    %214 = math.tanh %213 : vector<8x32xf32>
    %215 = arith.mulf %210, %214 : vector<8x32xf32>
    %cst_54 = arith.constant dense<0.000000e+00> : vector<8x50xf32>
    %216 = tpu.matmul %215, %10, %cst_54 {dimension_numbers = #tpu.dot_dimension_numbers<[1], [0], [0], [1], [0, 0, 1, 1], [], []>} : vector<8x32xf32>, vector<32x50xf32>, vector<8x50xf32> -> vector<8x50xf32>
    %217 = arith.addf %216, %13 : vector<8x50xf32>
    %218 = vector.extract_strided_slice %217 {offsets = [0, 0], sizes = [4, 50], strides = [1, 1]} : vector<8x50xf32> to vector<4x50xf32>
    %219 = vector.extract_strided_slice %217 {offsets = [4, 0], sizes = [4, 50], strides = [1, 1]} : vector<8x50xf32> to vector<4x50xf32>
    %220 = arith.subf %218, %219 : vector<4x50xf32>
    %221 = math.absf %220 : vector<4x50xf32>
    %222 = vector.shape_cast %221 : vector<4x50xf32> to vector<1x4x50xf32>
    %cst_55 = arith.constant dense<0.000000e+00> : vector<1xf32>
    %223 = vector.multi_reduction <add>, %222, %cst_55 [1, 2] : vector<1x4x50xf32> to vector<1xf32>
    %224 = vector.shape_cast %223 : vector<1xf32> to vector<1x1x1xf32>
    %225 = vector.extract %224[0, 0, 0] : f32 from vector<1x1x1xf32>
    %226 = vector.broadcast %225 : f32 to vector<1x1xf32>
    %227 = arith.addf %174, %226 : vector<1x1xf32>
    %c4_i32 = arith.constant 4 : i32
    %228 = arith.index_cast %c4_i32 : i32 to index
    %c0_56 = arith.constant 0 : index
    %c0_57 = arith.constant 0 : index
    %229 = vector.load %arg0[%228, %c0_56, %c0_57] : memref<8x8x16xf32, #tpu.memory_space<vmem>>, vector<1x8x16xf32>
    %230 = vector.shape_cast %229 : vector<1x8x16xf32> to vector<8x16xf32>
    %cst_58 = arith.constant dense<0.000000e+00> : vector<8x128xf32>
    %231 = tpu.matmul %230, %0, %cst_58 {dimension_numbers = #tpu.dot_dimension_numbers<[1], [0], [0], [1], [0, 0, 1, 1], [], []>} : vector<8x16xf32>, vector<16x128xf32>, vector<8x128xf32> -> vector<8x128xf32>
    %cst_59 = arith.constant dense<0.000000e+00> : vector<8x128xf32>
    %232 = tpu.matmul %196, %1, %cst_59 {dimension_numbers = #tpu.dot_dimension_numbers<[1], [0], [0], [1], [0, 0, 1, 1], [], []>} : vector<8x32xf32>, vector<32x128xf32>, vector<8x128xf32> -> vector<8x128xf32>
    %233 = arith.addf %231, %232 : vector<8x128xf32>
    %234 = arith.addf %233, %4 : vector<8x128xf32>
    %235 = arith.negf %234 : vector<8x128xf32>
    %236 = math.exp %235 : vector<8x128xf32>
    %cst_60 = arith.constant 1.000000e+00 : f32
    %237 = vector.broadcast %cst_60 : f32 to vector<8x128xf32>
    %238 = arith.addf %237, %236 : vector<8x128xf32>
    %239 = arith.divf %237, %238 : vector<8x128xf32>
    %240 = math.tanh %234 : vector<8x128xf32>
    %241 = vector.extract_strided_slice %239 {offsets = [0, 0], sizes = [8, 32], strides = [1, 1]} : vector<8x128xf32> to vector<8x32xf32>
    %242 = vector.extract_strided_slice %239 {offsets = [0, 32], sizes = [8, 32], strides = [1, 1]} : vector<8x128xf32> to vector<8x32xf32>
    %243 = vector.extract_strided_slice %240 {offsets = [0, 64], sizes = [8, 32], strides = [1, 1]} : vector<8x128xf32> to vector<8x32xf32>
    %244 = vector.extract_strided_slice %239 {offsets = [0, 96], sizes = [8, 32], strides = [1, 1]} : vector<8x128xf32> to vector<8x32xf32>
    %245 = arith.mulf %242, %194 : vector<8x32xf32>
    %246 = arith.mulf %241, %243 : vector<8x32xf32>
    %247 = arith.addf %245, %246 : vector<8x32xf32>
    %248 = math.tanh %247 : vector<8x32xf32>
    %249 = arith.mulf %244, %248 : vector<8x32xf32>
    %cst_61 = arith.constant dense<0.000000e+00> : vector<8x128xf32>
    %250 = tpu.matmul %249, %5, %cst_61 {dimension_numbers = #tpu.dot_dimension_numbers<[1], [0], [0], [1], [0, 0, 1, 1], [], []>} : vector<8x32xf32>, vector<32x128xf32>, vector<8x128xf32> -> vector<8x128xf32>
    %cst_62 = arith.constant dense<0.000000e+00> : vector<8x128xf32>
    %251 = tpu.matmul %215, %6, %cst_62 {dimension_numbers = #tpu.dot_dimension_numbers<[1], [0], [0], [1], [0, 0, 1, 1], [], []>} : vector<8x32xf32>, vector<32x128xf32>, vector<8x128xf32> -> vector<8x128xf32>
    %252 = arith.addf %250, %251 : vector<8x128xf32>
    %253 = arith.addf %252, %9 : vector<8x128xf32>
    %254 = arith.negf %253 : vector<8x128xf32>
    %255 = math.exp %254 : vector<8x128xf32>
    %cst_63 = arith.constant 1.000000e+00 : f32
    %256 = vector.broadcast %cst_63 : f32 to vector<8x128xf32>
    %257 = arith.addf %256, %255 : vector<8x128xf32>
    %258 = arith.divf %256, %257 : vector<8x128xf32>
    %259 = math.tanh %253 : vector<8x128xf32>
    %260 = vector.extract_strided_slice %258 {offsets = [0, 0], sizes = [8, 32], strides = [1, 1]} : vector<8x128xf32> to vector<8x32xf32>
    %261 = vector.extract_strided_slice %258 {offsets = [0, 32], sizes = [8, 32], strides = [1, 1]} : vector<8x128xf32> to vector<8x32xf32>
    %262 = vector.extract_strided_slice %259 {offsets = [0, 64], sizes = [8, 32], strides = [1, 1]} : vector<8x128xf32> to vector<8x32xf32>
    %263 = vector.extract_strided_slice %258 {offsets = [0, 96], sizes = [8, 32], strides = [1, 1]} : vector<8x128xf32> to vector<8x32xf32>
    %264 = arith.mulf %261, %213 : vector<8x32xf32>
    %265 = arith.mulf %260, %262 : vector<8x32xf32>
    %266 = arith.addf %264, %265 : vector<8x32xf32>
    %267 = math.tanh %266 : vector<8x32xf32>
    %268 = arith.mulf %263, %267 : vector<8x32xf32>
    %cst_64 = arith.constant dense<0.000000e+00> : vector<8x50xf32>
    %269 = tpu.matmul %268, %10, %cst_64 {dimension_numbers = #tpu.dot_dimension_numbers<[1], [0], [0], [1], [0, 0, 1, 1], [], []>} : vector<8x32xf32>, vector<32x50xf32>, vector<8x50xf32> -> vector<8x50xf32>
    %270 = arith.addf %269, %13 : vector<8x50xf32>
    %271 = vector.extract_strided_slice %270 {offsets = [0, 0], sizes = [4, 50], strides = [1, 1]} : vector<8x50xf32> to vector<4x50xf32>
    %272 = vector.extract_strided_slice %270 {offsets = [4, 0], sizes = [4, 50], strides = [1, 1]} : vector<8x50xf32> to vector<4x50xf32>
    %273 = arith.subf %271, %272 : vector<4x50xf32>
    %274 = math.absf %273 : vector<4x50xf32>
    %275 = vector.shape_cast %274 : vector<4x50xf32> to vector<1x4x50xf32>
    %cst_65 = arith.constant dense<0.000000e+00> : vector<1xf32>
    %276 = vector.multi_reduction <add>, %275, %cst_65 [1, 2] : vector<1x4x50xf32> to vector<1xf32>
    %277 = vector.shape_cast %276 : vector<1xf32> to vector<1x1x1xf32>
    %278 = vector.extract %277[0, 0, 0] : f32 from vector<1x1x1xf32>
    %279 = vector.broadcast %278 : f32 to vector<1x1xf32>
    %280 = arith.addf %227, %279 : vector<1x1xf32>
    %c5_i32 = arith.constant 5 : i32
    %281 = arith.index_cast %c5_i32 : i32 to index
    %c0_66 = arith.constant 0 : index
    %c0_67 = arith.constant 0 : index
    %282 = vector.load %arg0[%281, %c0_66, %c0_67] : memref<8x8x16xf32, #tpu.memory_space<vmem>>, vector<1x8x16xf32>
    %283 = vector.shape_cast %282 : vector<1x8x16xf32> to vector<8x16xf32>
    %cst_68 = arith.constant dense<0.000000e+00> : vector<8x128xf32>
    %284 = tpu.matmul %283, %0, %cst_68 {dimension_numbers = #tpu.dot_dimension_numbers<[1], [0], [0], [1], [0, 0, 1, 1], [], []>} : vector<8x16xf32>, vector<16x128xf32>, vector<8x128xf32> -> vector<8x128xf32>
    %cst_69 = arith.constant dense<0.000000e+00> : vector<8x128xf32>
    %285 = tpu.matmul %249, %1, %cst_69 {dimension_numbers = #tpu.dot_dimension_numbers<[1], [0], [0], [1], [0, 0, 1, 1], [], []>} : vector<8x32xf32>, vector<32x128xf32>, vector<8x128xf32> -> vector<8x128xf32>
    %286 = arith.addf %284, %285 : vector<8x128xf32>
    %287 = arith.addf %286, %4 : vector<8x128xf32>
    %288 = arith.negf %287 : vector<8x128xf32>
    %289 = math.exp %288 : vector<8x128xf32>
    %cst_70 = arith.constant 1.000000e+00 : f32
    %290 = vector.broadcast %cst_70 : f32 to vector<8x128xf32>
    %291 = arith.addf %290, %289 : vector<8x128xf32>
    %292 = arith.divf %290, %291 : vector<8x128xf32>
    %293 = math.tanh %287 : vector<8x128xf32>
    %294 = vector.extract_strided_slice %292 {offsets = [0, 0], sizes = [8, 32], strides = [1, 1]} : vector<8x128xf32> to vector<8x32xf32>
    %295 = vector.extract_strided_slice %292 {offsets = [0, 32], sizes = [8, 32], strides = [1, 1]} : vector<8x128xf32> to vector<8x32xf32>
    %296 = vector.extract_strided_slice %293 {offsets = [0, 64], sizes = [8, 32], strides = [1, 1]} : vector<8x128xf32> to vector<8x32xf32>
    %297 = vector.extract_strided_slice %292 {offsets = [0, 96], sizes = [8, 32], strides = [1, 1]} : vector<8x128xf32> to vector<8x32xf32>
    %298 = arith.mulf %295, %247 : vector<8x32xf32>
    %299 = arith.mulf %294, %296 : vector<8x32xf32>
    %300 = arith.addf %298, %299 : vector<8x32xf32>
    %301 = math.tanh %300 : vector<8x32xf32>
    %302 = arith.mulf %297, %301 : vector<8x32xf32>
    %cst_71 = arith.constant dense<0.000000e+00> : vector<8x128xf32>
    %303 = tpu.matmul %302, %5, %cst_71 {dimension_numbers = #tpu.dot_dimension_numbers<[1], [0], [0], [1], [0, 0, 1, 1], [], []>} : vector<8x32xf32>, vector<32x128xf32>, vector<8x128xf32> -> vector<8x128xf32>
    %cst_72 = arith.constant dense<0.000000e+00> : vector<8x128xf32>
    %304 = tpu.matmul %268, %6, %cst_72 {dimension_numbers = #tpu.dot_dimension_numbers<[1], [0], [0], [1], [0, 0, 1, 1], [], []>} : vector<8x32xf32>, vector<32x128xf32>, vector<8x128xf32> -> vector<8x128xf32>
    %305 = arith.addf %303, %304 : vector<8x128xf32>
    %306 = arith.addf %305, %9 : vector<8x128xf32>
    %307 = arith.negf %306 : vector<8x128xf32>
    %308 = math.exp %307 : vector<8x128xf32>
    %cst_73 = arith.constant 1.000000e+00 : f32
    %309 = vector.broadcast %cst_73 : f32 to vector<8x128xf32>
    %310 = arith.addf %309, %308 : vector<8x128xf32>
    %311 = arith.divf %309, %310 : vector<8x128xf32>
    %312 = math.tanh %306 : vector<8x128xf32>
    %313 = vector.extract_strided_slice %311 {offsets = [0, 0], sizes = [8, 32], strides = [1, 1]} : vector<8x128xf32> to vector<8x32xf32>
    %314 = vector.extract_strided_slice %311 {offsets = [0, 32], sizes = [8, 32], strides = [1, 1]} : vector<8x128xf32> to vector<8x32xf32>
    %315 = vector.extract_strided_slice %312 {offsets = [0, 64], sizes = [8, 32], strides = [1, 1]} : vector<8x128xf32> to vector<8x32xf32>
    %316 = vector.extract_strided_slice %311 {offsets = [0, 96], sizes = [8, 32], strides = [1, 1]} : vector<8x128xf32> to vector<8x32xf32>
    %317 = arith.mulf %314, %266 : vector<8x32xf32>
    %318 = arith.mulf %313, %315 : vector<8x32xf32>
    %319 = arith.addf %317, %318 : vector<8x32xf32>
    %320 = math.tanh %319 : vector<8x32xf32>
    %321 = arith.mulf %316, %320 : vector<8x32xf32>
    %cst_74 = arith.constant dense<0.000000e+00> : vector<8x50xf32>
    %322 = tpu.matmul %321, %10, %cst_74 {dimension_numbers = #tpu.dot_dimension_numbers<[1], [0], [0], [1], [0, 0, 1, 1], [], []>} : vector<8x32xf32>, vector<32x50xf32>, vector<8x50xf32> -> vector<8x50xf32>
    %323 = arith.addf %322, %13 : vector<8x50xf32>
    %324 = vector.extract_strided_slice %323 {offsets = [0, 0], sizes = [4, 50], strides = [1, 1]} : vector<8x50xf32> to vector<4x50xf32>
    %325 = vector.extract_strided_slice %323 {offsets = [4, 0], sizes = [4, 50], strides = [1, 1]} : vector<8x50xf32> to vector<4x50xf32>
    %326 = arith.subf %324, %325 : vector<4x50xf32>
    %327 = math.absf %326 : vector<4x50xf32>
    %328 = vector.shape_cast %327 : vector<4x50xf32> to vector<1x4x50xf32>
    %cst_75 = arith.constant dense<0.000000e+00> : vector<1xf32>
    %329 = vector.multi_reduction <add>, %328, %cst_75 [1, 2] : vector<1x4x50xf32> to vector<1xf32>
    %330 = vector.shape_cast %329 : vector<1xf32> to vector<1x1x1xf32>
    %331 = vector.extract %330[0, 0, 0] : f32 from vector<1x1x1xf32>
    %332 = vector.broadcast %331 : f32 to vector<1x1xf32>
    %333 = arith.addf %280, %332 : vector<1x1xf32>
    %c6_i32 = arith.constant 6 : i32
    %334 = arith.index_cast %c6_i32 : i32 to index
    %c0_76 = arith.constant 0 : index
    %c0_77 = arith.constant 0 : index
    %335 = vector.load %arg0[%334, %c0_76, %c0_77] : memref<8x8x16xf32, #tpu.memory_space<vmem>>, vector<1x8x16xf32>
    %336 = vector.shape_cast %335 : vector<1x8x16xf32> to vector<8x16xf32>
    %cst_78 = arith.constant dense<0.000000e+00> : vector<8x128xf32>
    %337 = tpu.matmul %336, %0, %cst_78 {dimension_numbers = #tpu.dot_dimension_numbers<[1], [0], [0], [1], [0, 0, 1, 1], [], []>} : vector<8x16xf32>, vector<16x128xf32>, vector<8x128xf32> -> vector<8x128xf32>
    %cst_79 = arith.constant dense<0.000000e+00> : vector<8x128xf32>
    %338 = tpu.matmul %302, %1, %cst_79 {dimension_numbers = #tpu.dot_dimension_numbers<[1], [0], [0], [1], [0, 0, 1, 1], [], []>} : vector<8x32xf32>, vector<32x128xf32>, vector<8x128xf32> -> vector<8x128xf32>
    %339 = arith.addf %337, %338 : vector<8x128xf32>
    %340 = arith.addf %339, %4 : vector<8x128xf32>
    %341 = arith.negf %340 : vector<8x128xf32>
    %342 = math.exp %341 : vector<8x128xf32>
    %cst_80 = arith.constant 1.000000e+00 : f32
    %343 = vector.broadcast %cst_80 : f32 to vector<8x128xf32>
    %344 = arith.addf %343, %342 : vector<8x128xf32>
    %345 = arith.divf %343, %344 : vector<8x128xf32>
    %346 = math.tanh %340 : vector<8x128xf32>
    %347 = vector.extract_strided_slice %345 {offsets = [0, 0], sizes = [8, 32], strides = [1, 1]} : vector<8x128xf32> to vector<8x32xf32>
    %348 = vector.extract_strided_slice %345 {offsets = [0, 32], sizes = [8, 32], strides = [1, 1]} : vector<8x128xf32> to vector<8x32xf32>
    %349 = vector.extract_strided_slice %346 {offsets = [0, 64], sizes = [8, 32], strides = [1, 1]} : vector<8x128xf32> to vector<8x32xf32>
    %350 = vector.extract_strided_slice %345 {offsets = [0, 96], sizes = [8, 32], strides = [1, 1]} : vector<8x128xf32> to vector<8x32xf32>
    %351 = arith.mulf %348, %300 : vector<8x32xf32>
    %352 = arith.mulf %347, %349 : vector<8x32xf32>
    %353 = arith.addf %351, %352 : vector<8x32xf32>
    %354 = math.tanh %353 : vector<8x32xf32>
    %355 = arith.mulf %350, %354 : vector<8x32xf32>
    %cst_81 = arith.constant dense<0.000000e+00> : vector<8x128xf32>
    %356 = tpu.matmul %355, %5, %cst_81 {dimension_numbers = #tpu.dot_dimension_numbers<[1], [0], [0], [1], [0, 0, 1, 1], [], []>} : vector<8x32xf32>, vector<32x128xf32>, vector<8x128xf32> -> vector<8x128xf32>
    %cst_82 = arith.constant dense<0.000000e+00> : vector<8x128xf32>
    %357 = tpu.matmul %321, %6, %cst_82 {dimension_numbers = #tpu.dot_dimension_numbers<[1], [0], [0], [1], [0, 0, 1, 1], [], []>} : vector<8x32xf32>, vector<32x128xf32>, vector<8x128xf32> -> vector<8x128xf32>
    %358 = arith.addf %356, %357 : vector<8x128xf32>
    %359 = arith.addf %358, %9 : vector<8x128xf32>
    %360 = arith.negf %359 : vector<8x128xf32>
    %361 = math.exp %360 : vector<8x128xf32>
    %cst_83 = arith.constant 1.000000e+00 : f32
    %362 = vector.broadcast %cst_83 : f32 to vector<8x128xf32>
    %363 = arith.addf %362, %361 : vector<8x128xf32>
    %364 = arith.divf %362, %363 : vector<8x128xf32>
    %365 = math.tanh %359 : vector<8x128xf32>
    %366 = vector.extract_strided_slice %364 {offsets = [0, 0], sizes = [8, 32], strides = [1, 1]} : vector<8x128xf32> to vector<8x32xf32>
    %367 = vector.extract_strided_slice %364 {offsets = [0, 32], sizes = [8, 32], strides = [1, 1]} : vector<8x128xf32> to vector<8x32xf32>
    %368 = vector.extract_strided_slice %365 {offsets = [0, 64], sizes = [8, 32], strides = [1, 1]} : vector<8x128xf32> to vector<8x32xf32>
    %369 = vector.extract_strided_slice %364 {offsets = [0, 96], sizes = [8, 32], strides = [1, 1]} : vector<8x128xf32> to vector<8x32xf32>
    %370 = arith.mulf %367, %319 : vector<8x32xf32>
    %371 = arith.mulf %366, %368 : vector<8x32xf32>
    %372 = arith.addf %370, %371 : vector<8x32xf32>
    %373 = math.tanh %372 : vector<8x32xf32>
    %374 = arith.mulf %369, %373 : vector<8x32xf32>
    %cst_84 = arith.constant dense<0.000000e+00> : vector<8x50xf32>
    %375 = tpu.matmul %374, %10, %cst_84 {dimension_numbers = #tpu.dot_dimension_numbers<[1], [0], [0], [1], [0, 0, 1, 1], [], []>} : vector<8x32xf32>, vector<32x50xf32>, vector<8x50xf32> -> vector<8x50xf32>
    %376 = arith.addf %375, %13 : vector<8x50xf32>
    %377 = vector.extract_strided_slice %376 {offsets = [0, 0], sizes = [4, 50], strides = [1, 1]} : vector<8x50xf32> to vector<4x50xf32>
    %378 = vector.extract_strided_slice %376 {offsets = [4, 0], sizes = [4, 50], strides = [1, 1]} : vector<8x50xf32> to vector<4x50xf32>
    %379 = arith.subf %377, %378 : vector<4x50xf32>
    %380 = math.absf %379 : vector<4x50xf32>
    %381 = vector.shape_cast %380 : vector<4x50xf32> to vector<1x4x50xf32>
    %cst_85 = arith.constant dense<0.000000e+00> : vector<1xf32>
    %382 = vector.multi_reduction <add>, %381, %cst_85 [1, 2] : vector<1x4x50xf32> to vector<1xf32>
    %383 = vector.shape_cast %382 : vector<1xf32> to vector<1x1x1xf32>
    %384 = vector.extract %383[0, 0, 0] : f32 from vector<1x1x1xf32>
    %385 = vector.broadcast %384 : f32 to vector<1x1xf32>
    %386 = arith.addf %333, %385 : vector<1x1xf32>
    %c7_i32 = arith.constant 7 : i32
    %387 = arith.index_cast %c7_i32 : i32 to index
    %c0_86 = arith.constant 0 : index
    %c0_87 = arith.constant 0 : index
    %388 = vector.load %arg0[%387, %c0_86, %c0_87] : memref<8x8x16xf32, #tpu.memory_space<vmem>>, vector<1x8x16xf32>
    %389 = vector.shape_cast %388 : vector<1x8x16xf32> to vector<8x16xf32>
    %cst_88 = arith.constant dense<0.000000e+00> : vector<8x128xf32>
    %390 = tpu.matmul %389, %0, %cst_88 {dimension_numbers = #tpu.dot_dimension_numbers<[1], [0], [0], [1], [0, 0, 1, 1], [], []>} : vector<8x16xf32>, vector<16x128xf32>, vector<8x128xf32> -> vector<8x128xf32>
    %cst_89 = arith.constant dense<0.000000e+00> : vector<8x128xf32>
    %391 = tpu.matmul %355, %1, %cst_89 {dimension_numbers = #tpu.dot_dimension_numbers<[1], [0], [0], [1], [0, 0, 1, 1], [], []>} : vector<8x32xf32>, vector<32x128xf32>, vector<8x128xf32> -> vector<8x128xf32>
    %392 = arith.addf %390, %391 : vector<8x128xf32>
    %393 = arith.addf %392, %4 : vector<8x128xf32>
    %394 = arith.negf %393 : vector<8x128xf32>
    %395 = math.exp %394 : vector<8x128xf32>
    %cst_90 = arith.constant 1.000000e+00 : f32
    %396 = vector.broadcast %cst_90 : f32 to vector<8x128xf32>
    %397 = arith.addf %396, %395 : vector<8x128xf32>
    %398 = arith.divf %396, %397 : vector<8x128xf32>
    %399 = math.tanh %393 : vector<8x128xf32>
    %400 = vector.extract_strided_slice %398 {offsets = [0, 0], sizes = [8, 32], strides = [1, 1]} : vector<8x128xf32> to vector<8x32xf32>
    %401 = vector.extract_strided_slice %398 {offsets = [0, 32], sizes = [8, 32], strides = [1, 1]} : vector<8x128xf32> to vector<8x32xf32>
    %402 = vector.extract_strided_slice %399 {offsets = [0, 64], sizes = [8, 32], strides = [1, 1]} : vector<8x128xf32> to vector<8x32xf32>
    %403 = vector.extract_strided_slice %398 {offsets = [0, 96], sizes = [8, 32], strides = [1, 1]} : vector<8x128xf32> to vector<8x32xf32>
    %404 = arith.mulf %401, %353 : vector<8x32xf32>
    %405 = arith.mulf %400, %402 : vector<8x32xf32>
    %406 = arith.addf %404, %405 : vector<8x32xf32>
    %407 = math.tanh %406 : vector<8x32xf32>
    %408 = arith.mulf %403, %407 : vector<8x32xf32>
    %cst_91 = arith.constant dense<0.000000e+00> : vector<8x128xf32>
    %409 = tpu.matmul %408, %5, %cst_91 {dimension_numbers = #tpu.dot_dimension_numbers<[1], [0], [0], [1], [0, 0, 1, 1], [], []>} : vector<8x32xf32>, vector<32x128xf32>, vector<8x128xf32> -> vector<8x128xf32>
    %cst_92 = arith.constant dense<0.000000e+00> : vector<8x128xf32>
    %410 = tpu.matmul %374, %6, %cst_92 {dimension_numbers = #tpu.dot_dimension_numbers<[1], [0], [0], [1], [0, 0, 1, 1], [], []>} : vector<8x32xf32>, vector<32x128xf32>, vector<8x128xf32> -> vector<8x128xf32>
    %411 = arith.addf %409, %410 : vector<8x128xf32>
    %412 = arith.addf %411, %9 : vector<8x128xf32>
    %413 = arith.negf %412 : vector<8x128xf32>
    %414 = math.exp %413 : vector<8x128xf32>
    %cst_93 = arith.constant 1.000000e+00 : f32
    %415 = vector.broadcast %cst_93 : f32 to vector<8x128xf32>
    %416 = arith.addf %415, %414 : vector<8x128xf32>
    %417 = arith.divf %415, %416 : vector<8x128xf32>
    %418 = math.tanh %412 : vector<8x128xf32>
    %419 = vector.extract_strided_slice %417 {offsets = [0, 0], sizes = [8, 32], strides = [1, 1]} : vector<8x128xf32> to vector<8x32xf32>
    %420 = vector.extract_strided_slice %417 {offsets = [0, 32], sizes = [8, 32], strides = [1, 1]} : vector<8x128xf32> to vector<8x32xf32>
    %421 = vector.extract_strided_slice %418 {offsets = [0, 64], sizes = [8, 32], strides = [1, 1]} : vector<8x128xf32> to vector<8x32xf32>
    %422 = vector.extract_strided_slice %417 {offsets = [0, 96], sizes = [8, 32], strides = [1, 1]} : vector<8x128xf32> to vector<8x32xf32>
    %423 = arith.mulf %420, %372 : vector<8x32xf32>
    %424 = arith.mulf %419, %421 : vector<8x32xf32>
    %425 = arith.addf %423, %424 : vector<8x32xf32>
    %426 = math.tanh %425 : vector<8x32xf32>
    %427 = arith.mulf %422, %426 : vector<8x32xf32>
    %cst_94 = arith.constant dense<0.000000e+00> : vector<8x50xf32>
    %428 = tpu.matmul %427, %10, %cst_94 {dimension_numbers = #tpu.dot_dimension_numbers<[1], [0], [0], [1], [0, 0, 1, 1], [], []>} : vector<8x32xf32>, vector<32x50xf32>, vector<8x50xf32> -> vector<8x50xf32>
    %429 = arith.addf %428, %13 : vector<8x50xf32>
    %430 = vector.extract_strided_slice %429 {offsets = [0, 0], sizes = [4, 50], strides = [1, 1]} : vector<8x50xf32> to vector<4x50xf32>
    %431 = vector.extract_strided_slice %429 {offsets = [4, 0], sizes = [4, 50], strides = [1, 1]} : vector<8x50xf32> to vector<4x50xf32>
    %432 = arith.subf %430, %431 : vector<4x50xf32>
    %433 = math.absf %432 : vector<4x50xf32>
    %434 = vector.shape_cast %433 : vector<4x50xf32> to vector<1x4x50xf32>
    %cst_95 = arith.constant dense<0.000000e+00> : vector<1xf32>
    %435 = vector.multi_reduction <add>, %434, %cst_95 [1, 2] : vector<1x4x50xf32> to vector<1xf32>
    %436 = vector.shape_cast %435 : vector<1xf32> to vector<1x1x1xf32>
    %437 = vector.extract %436[0, 0, 0] : f32 from vector<1x1x1xf32>
    %438 = vector.broadcast %437 : f32 to vector<1x1xf32>
    %439 = arith.addf %386, %438 : vector<1x1xf32>
    %c8_i32 = arith.constant 8 : i32
    %cst_96 = arith.constant 0.000000e+00 : f32
    %440 = vector.broadcast %cst_96 : f32 to vector<1x1xf32>
    %441 = arith.subf %440, %439 : vector<1x1xf32>
    %442 = math.exp %441 : vector<1x1xf32>
    %443 = vector.shape_cast %442 : vector<1x1xf32> to vector<1x1xf32>
    %444 = vector.broadcast %443 : vector<1x1xf32> to vector<8x8xf32>
    %c0_97 = arith.constant 0 : index
    %c0_98 = arith.constant 0 : index
    %445 = vector.load %arg9[%c0_97, %c0_98] : memref<8x8xf32, #tpu.memory_space<vmem>>, vector<8x8xf32>
    %446 = arith.mulf %444, %445 : vector<8x8xf32>
    %cst_99 = arith.constant dense<0.000000e+00> : vector<8xf32>
    %447 = vector.multi_reduction <add>, %446, %cst_99 [0] : vector<8x8xf32> to vector<8xf32>
    %448 = vector.shape_cast %447 : vector<8xf32> to vector<1x8xf32>
    %c0_100 = arith.constant 0 : index
    %c0_101 = arith.constant 0 : index
    %449 = vector.load %arg10[%c0_100, %c0_101] : memref<1x8xf32, #tpu.memory_space<vmem>>, vector<1x8xf32>
    %450 = arith.addf %448, %449 : vector<1x8xf32>
    %451 = arith.negf %450 : vector<1x8xf32>
    %452 = math.exp %451 : vector<1x8xf32>
    %cst_102 = arith.constant 1.000000e+00 : f32
    %453 = vector.broadcast %cst_102 : f32 to vector<1x8xf32>
    %454 = arith.addf %453, %452 : vector<1x8xf32>
    %455 = arith.divf %453, %454 : vector<1x8xf32>
    %c0_103 = arith.constant 0 : index
    %c0_104 = arith.constant 0 : index
    %456 = vector.load %arg11[%c0_103, %c0_104] : memref<1x8xf32, #tpu.memory_space<vmem>>, vector<1x8xf32>
    tpu.vector_store %arg11[%c0_103, %c0_104], %455 {strides = array<i32>} : memref<1x8xf32, #tpu.memory_space<vmem>>, vector<1x8xf32>,
    return
  }
}

</mosaic_0001>

<llo_original>
// kernel: siamese_forward.1
$region0: #{siamese_forward.1}
  #allocation0 [shape = 'u32[]', space=smem, size = 0x4, offset = 0x4, fixed_abs, tag = 'smem constant byte address 0x4 - core index']
  #allocation1 [shape = 'u32[144,128]{1,0:T(1,128)}', space=vmem, size = 0x12000, scoped, tag = 'internal scratch']
  %s0 = inlined_call_operand.vmem [shape: f32[8,8,16], index: 0, kind: input, shape index: {}]
  %s1 = inlined_call_operand.hbm [shape: f32[16,128], index: 1, kind: input, shape index: {}]
  %s2 = inlined_call_operand.vmem [shape: f32[32,128], index: 2, kind: input, shape index: {}]
  %s3 = inlined_call_operand.vmem [shape: f32[1,128], index: 3, kind: input, shape index: {}]
  %s4 = inlined_call_operand.vmem [shape: f32[32,128], index: 4, kind: input, shape index: {}]
  %s5 = inlined_call_operand.vmem [shape: f32[32,128], index: 5, kind: input, shape index: {}]
  %s6 = inlined_call_operand.vmem [shape: f32[1,128], index: 6, kind: input, shape index: {}]
  %s7 = inlined_call_operand.vmem [shape: f32[32,50], index: 7, kind: input, shape index: {}]
  %s8 = inlined_call_operand.hbm [shape: f32[1,50], index: 8, kind: input, shape index: {}]
  %s9 = inlined_call_operand.vmem [shape: f32[8,8], index: 9, kind: input, shape index: {}]
  %s10 = inlined_call_operand.vmem [shape: f32[1,8], index: 10, kind: input, shape index: {}]
  %s11 = inlined_call_operand.hbm [shape: f32[1,8], index: 11, kind: output, shape index: {}]
  %s12 = sld [smem:[#allocation0]]
  $region62: #{siamese_forward.1} parent=0
    _
  %s14 = ssub.s32 1, %s12
  %s15 = scalar_select 0, %s14, %s12
  $region1: #{siamese_forward.1} parent=0
    #allocation2 [shape = 'u8[8192]{0}', space=vmem, size = 0x2000, scoped, tag = 'input window, operand 1, single buffered']
    #allocation3 [shape = 's32[1]{0}', space=sflag, size = 0x4, scoped, tag = 'scoped memory for siamese_forward.1']
    #allocation4 [shape = 's32[1]{0}', space=sflag, size = 0x4, scoped, tag = 'scoped memory for siamese_forward.1']
    #allocation5 [shape = 'u8[512]{0}', space=vmem, size = 0x400, scoped, tag = 'input window, operand 8, single buffered']
    #allocation6 [shape = 's32[1]{0}', space=sflag, size = 0x4, scoped, tag = 'scoped memory for siamese_forward.1']
    #allocation7 [shape = 'u8[512]{0}', space=vmem, size = 0x400, scoped, tag = 'output window, operand 0, single buffered']
    %16 = vsyncpa [#allocation3], 0
    %17 = vsyncpa [#allocation6], 0
    %18 = vsyncpa [#allocation4], 0
    // Predicated region
    $region2: #{siamese_forward.1} parent=1 // pred_check
      _
    $region3: #{siamese_forward.1} parent=1 // pred_check_branch
      %20 = sbr.rel (0) target = $region5
    $region4: #{siamese_forward.1} parent=1 // pred_region
      _
    $region5: #{siamese_forward.1} parent=1 // pred_fallthru
      _
    // Predicated region
    $region6: #{siamese_forward.1} parent=1 // pred_check
      _
    $region7: #{siamese_forward.1} parent=1 // pred_check_branch
      %22 = sbr.rel (0) target = $region9
    $region8: #{siamese_forward.1} parent=1 // pred_region
      %s24 = ssub.s32 256, 256
      %25 = vsyncadd [#allocation3], %s24
      %s26 = sshll.u32 [#allocation2], 4
      %s27 = int_to_ptr.vmem [resolvable:$true] %s26
      %32 = dma.hbm_to_vmem [thread:$0]  %s1, 256, %s27, [#allocation3], 128, 128, 8
    $region9: #{siamese_forward.1} parent=1 // pred_fallthru
      _
    // Predicated region
    $region10: #{siamese_forward.1} parent=1 // pred_check
      _
    $region11: #{siamese_forward.1} parent=1 // pred_check_branch
      %34 = sbr.rel (0) target = $region13
    $region12: #{siamese_forward.1} parent=1 // pred_region
      _
    $region13: #{siamese_forward.1} parent=1 // pred_fallthru
      _
    // Predicated region
    $region14: #{siamese_forward.1} parent=1 // pred_check
      _
    $region15: #{siamese_forward.1} parent=1 // pred_check_branch
      %36 = sbr.rel (0) target = $region17
    $region16: #{siamese_forward.1} parent=1 // pred_region
      _
    $region17: #{siamese_forward.1} parent=1 // pred_fallthru
      _
    // Predicated region
    $region18: #{siamese_forward.1} parent=1 // pred_check
      _
    $region19: #{siamese_forward.1} parent=1 // pred_check_branch
      %38 = sbr.rel (0) target = $region21
    $region20: #{siamese_forward.1} parent=1 // pred_region
      _
    $region21: #{siamese_forward.1} parent=1 // pred_fallthru
      _
    // Predicated region
    $region22: #{siamese_forward.1} parent=1 // pred_check
      _
    $region23: #{siamese_forward.1} parent=1 // pred_check_branch
      %40 = sbr.rel (0) target = $region25
    $region24: #{siamese_forward.1} parent=1 // pred_region
      _
    $region25: #{siamese_forward.1} parent=1 // pred_fallthru
      _
    // Predicated region
    $region26: #{siamese_forward.1} parent=1 // pred_check
      _
    $region27: #{siamese_forward.1} parent=1 // pred_check_branch
      %42 = sbr.rel (0) target = $region29
    $region28: #{siamese_forward.1} parent=1 // pred_region
      _
    $region29: #{siamese_forward.1} parent=1 // pred_fallthru
      _
    // Predicated region
    $region30: #{siamese_forward.1} parent=1 // pred_check
      _
    $region31: #{siamese_forward.1} parent=1 // pred_check_branch
      %44 = sbr.rel (0) target = $region33
    $region32: #{siamese_forward.1} parent=1 // pred_region
      _
    $region33: #{siamese_forward.1} parent=1 // pred_fallthru
      _
    // Predicated region
    $region34: #{siamese_forward.1} parent=1 // pred_check
      _
    $region35: #{siamese_forward.1} parent=1 // pred_check_branch
      %46 = sbr.rel (0) target = $region37
    $region36: #{siamese_forward.1} parent=1 // pred_region
      %s48 = ssub.s32 16, 16
      %49 = vsyncadd [#allocation6], %s48
      %s51 = sshll.u32 [#allocation5], 4
      %s52 = int_to_ptr.vmem [resolvable:$true] %s51
      %54 = dma.hbm_to_vmem [thread:$0]  %s8, 16, %s52, [#allocation6]
    $region37: #{siamese_forward.1} parent=1 // pred_fallthru
      _
    // Predicated region
    $region38: #{siamese_forward.1} parent=1 // pred_check
      _
    $region39: #{siamese_forward.1} parent=1 // pred_check_branch
      %56 = sbr.rel (0) target = $region41
    $region40: #{siamese_forward.1} parent=1 // pred_region
      _
    $region41: #{siamese_forward.1} parent=1 // pred_fallthru
      _
    // Predicated region
    $region42: #{siamese_forward.1} parent=1 // pred_check
      _
    $region43: #{siamese_forward.1} parent=1 // pred_check_branch
      %58 = sbr.rel (0) target = $region45
    $region44: #{siamese_forward.1} parent=1 // pred_region
      _
    $region45: #{siamese_forward.1} parent=1 // pred_fallthru
      _
    // Predicated region
    $region46: #{siamese_forward.1} parent=1 // pred_check
      _
    $region47: #{siamese_forward.1} parent=1 // pred_check_branch
      %60 = sbr.rel (0) target = $region49
    $region48: #{siamese_forward.1} parent=1 // pred_region
      %61 = dma.done [#allocation3], 256
    $region49: #{siamese_forward.1} parent=1 // pred_fallthru
      _
    // Predicated region
    $region50: #{siamese_forward.1} parent=1 // pred_check
      _
    $region51: #{siamese_forward.1} parent=1 // pred_check_branch
      %63 = sbr.rel (0) target = $region53
    $region52: #{siamese_forward.1} parent=1 // pred_region
      %64 = dma.done [#allocation6], 16
    $region53: #{siamese_forward.1} parent=1 // pred_fallthru
      _
    %v65 = vld [vmem:[#allocation2] sm:$0xff]
    %v66 = vld [vmem:[#allocation2 + $0x8] sm:$0xff]
    %v67 = vld [vmem:[%s2] sm:$0xff]
    %v68 = vld [vmem:[%s2 + $0x8] sm:$0xff]
    %v69 = vld [vmem:[%s2 + $0x10] sm:$0xff]
    %v70 = vld [vmem:[%s2 + $0x18] sm:$0xff]
    %v71 = vld [vmem:[%s3] sm:$0x1]
    %v73 = vlaneseq
    %v74 = vshrl.u32 %v73, 7
    %v75 = vsub.s32 0, %v74
    %v76 = vrot.slane %v71, %v75
    %v78 = vld [vmem:[%s4] sm:$0xff]
    %v79 = vld [vmem:[%s4 + $0x8] sm:$0xff]
    %v80 = vld [vmem:[%s4 + $0x10] sm:$0xff]
    %v81 = vld [vmem:[%s4 + $0x18] sm:$0xff]
    %v82 = vld [vmem:[%s5] sm:$0xff]
    %v83 = vld [vmem:[%s5 + $0x8] sm:$0xff]
    %v84 = vld [vmem:[%s5 + $0x10] sm:$0xff]
    %v85 = vld [vmem:[%s5 + $0x18] sm:$0xff]
    %v86 = vld [vmem:[%s6] sm:$0x1]
    %v88 = vlaneseq
    %v89 = vshrl.u32 %v88, 7
    %v90 = vsub.s32 0, %v89
    %v91 = vrot.slane %v86, %v90
    %v93 = vld [vmem:[%s7] sm:$0xff]
    %v94 = vld [vmem:[%s7 + $0x8] sm:$0xff]
    %v95 = vld [vmem:[%s7 + $0x10] sm:$0xff]
    %v96 = vld [vmem:[%s7 + $0x18] sm:$0xff]
    %v97 = vld [vmem:[#allocation5] sm:$0x1]
    %v99 = vlaneseq
    %v100 = vshrl.u32 %v99, 7
    %v101 = vsub.s32 0, %v100
    %v102 = vrot.slane %v97, %v101
    %v104 = vld [vmem:[%s0] sm:$0xff]
    %vm105 = vcmask 261120
    %v107 = vsel %vm105, 0.0, 0
    %109 = vmatprep.subr.mxu0 0.0
    %110 = vmatpush1.msra.mxu0 0.0
    %111 = vmatprep.subr.mxu0 0.0
    %112 = vmatpush1.msra.mxu0 0.0
    %113 = vmatprep.subr.mxu0 0.0
    %114 = vmatpush1.msra.mxu0 0.0
    %115 = vmatprep.subr.mxu0 0.0
    %116 = vmatpush1.msra.mxu0 0.0
    %117 = vmatprep.subr.mxu0 0.0
    %118 = vmatpush1.msra.mxu0 0.0
    %119 = vmatprep.subr.mxu0 0.0
    %120 = vmatpush1.msra.mxu0 0.0
    %121 = vmatprep.subr.mxu0 0.0
    %122 = vmatpush1.msra.mxu0 0.0
    %123 = vmatprep.subr.mxu0 0.0
    %124 = vmatpush1.msra.mxu0 0.0
    %125 = vmatprep.subr.mxu0 0.0
    %126 = vmatpush1.msra.mxu0 0.0
    %127 = vmatprep.subr.mxu0 0.0
    %128 = vmatpush1.msra.mxu0 0.0
    %129 = vmatprep.subr.mxu0 0.0
    %130 = vmatpush1.msra.mxu0 0.0
    %131 = vmatprep.subr.mxu0 0.0
    %132 = vmatpush1.msra.mxu0 0.0
    %133 = vmatprep.subr.mxu0 0.0
    %134 = vmatpush1.msra.mxu0 %v70
    %135 = vmatprep.subr.mxu0 0.0
    %136 = vmatpush1.msra.mxu0 %v69
    %137 = vmatprep.subr.mxu0 0.0
    %138 = vmatpush1.msra.mxu0 %v68
    %139 = vmatprep.subr.mxu0 0.0
    %140 = vmatpush1.msra.mxu0 %v67
    %141 = vmatprep.subr.mxu0 0.0
    %142 = vmatpush2.msra.mxu0 0.0
    %143 = vmatprep.subr.mxu0 0.0
    %144 = vmatpush2.msra.mxu0 0.0
    %145 = vmatprep.subr.mxu0 0.0
    %146 = vmatpush2.msra.mxu0 0.0
    %147 = vmatprep.subr.mxu0 0.0
    %148 = vmatpush2.msra.mxu0 0.0
    %149 = vmatprep.subr.mxu0 0.0
    %150 = vmatpush2.msra.mxu0 0.0
    %151 = vmatprep.subr.mxu0 0.0
    %152 = vmatpush2.msra.mxu0 0.0
    %153 = vmatprep.subr.mxu0 0.0
    %154 = vmatpush2.msra.mxu0 0.0
    %155 = vmatprep.subr.mxu0 0.0
    %156 = vmatpush2.msra.mxu0 0.0
    %157 = vmatprep.subr.mxu0 0.0
    %158 = vmatpush2.msra.mxu0 0.0
    %159 = vmatprep.subr.mxu0 0.0
    %160 = vmatpush2.msra.mxu0 0.0
    %161 = vmatprep.subr.mxu0 0.0
    %162 = vmatpush2.msra.mxu0 0.0
    %163 = vmatprep.subr.mxu0 0.0
    %164 = vmatpush2.msra.mxu0 0.0
    %165 = vmatprep.subr.mxu0 0.0
    %166 = vmatpush2.msra.mxu0 0.0
    %167 = vmatprep.subr.mxu0 0.0
    %168 = vmatpush2.msra.mxu0 0.0
    %169 = vmatprep.subr.mxu0 0.0
    %170 = vmatpush2.msra.mxu0 0.0
    %171 = vmatprep.subr.mxu0 0.0
    %172 = vmatpush2.msra.mxu0 0.0
    %173 = vmatprep.mubr.f32.mxu0 0.0
    %174 = vmatmul.mubr.f32.gmra.mxu0 %v107
    %v175 = vpop.f32.mrf.mxu0
    %v176 = vadd.f32 0.0, %v175
    %v177 = vpop.f32.mrf.mxu0
    %178 = vdwg.mxu0
    %vm179 = vcmask 130048
    %v181 = vsel %vm179, %v104, 0
    %183 = vmatprep.subr.mxu0 0.0
    %184 = vmatpush1.msra.mxu0 0.0
    %185 = vmatprep.subr.mxu0 0.0
    %186 = vmatpush1.msra.mxu0 0.0
    %187 = vmatprep.subr.mxu0 0.0
    %188 = vmatpush1.msra.mxu0 0.0
    %189 = vmatprep.subr.mxu0 0.0
    %190 = vmatpush1.msra.mxu0 0.0
    %191 = vmatprep.subr.mxu0 0.0
    %192 = vmatpush1.msra.mxu0 0.0
    %193 = vmatprep.subr.mxu0 0.0
    %194 = vmatpush1.msra.mxu0 0.0
    %195 = vmatprep.subr.mxu0 0.0
    %196 = vmatpush1.msra.mxu0 0.0
    %197 = vmatprep.subr.mxu0 0.0
    %198 = vmatpush1.msra.mxu0 0.0
    %199 = vmatprep.subr.mxu0 0.0
    %200 = vmatpush1.msra.mxu0 0.0
    %201 = vmatprep.subr.mxu0 0.0
    %202 = vmatpush1.msra.mxu0 0.0
    %203 = vmatprep.subr.mxu0 0.0
    %204 = vmatpush1.msra.mxu0 0.0
    %205 = vmatprep.subr.mxu0 0.0
    %206 = vmatpush1.msra.mxu0 0.0
    %207 = vmatprep.subr.mxu0 0.0
    %208 = vmatpush1.msra.mxu0 0.0
    %209 = vmatprep.subr.mxu0 0.0
    %210 = vmatpush1.msra.mxu0 0.0
    %211 = vmatprep.subr.mxu0 0.0
    %212 = vmatpush1.msra.mxu0 %v66
    %213 = vmatprep.subr.mxu0 0.0
    %214 = vmatpush1.msra.mxu0 %v65
    %215 = vmatprep.subr.mxu0 0.0
    %216 = vmatpush2.msra.mxu0 0.0
    %217 = vmatprep.subr.mxu0 0.0
    %218 = vmatpush2.msra.mxu0 0.0
    %219 = vmatprep.subr.mxu0 0.0
    %220 = vmatpush2.msra.mxu0 0.0
    %221 = vmatprep.subr.mxu0 0.0
    %222 = vmatpush2.msra.mxu0 0.0
    %223 = vmatprep.subr.mxu0 0.0
    %224 = vmatpush2.msra.mxu0 0.0
    %225 = vmatprep.subr.mxu0 0.0
    %226 = vmatpush2.msra.mxu0 0.0
    %227 = vmatprep.subr.mxu0 0.0
    %228 = vmatpush2.msra.mxu0 0.0
    %229 = vmatprep.subr.mxu0 0.0
    %230 = vmatpush2.msra.mxu0 0.0
    %231 = vmatprep.subr.mxu0 0.0
    %232 = vmatpush2.msra.mxu0 0.0
    %233 = vmatprep.subr.mxu0 0.0
    %234 = vmatpush2.msra.mxu0 0.0
    %235 = vmatprep.subr.mxu0 0.0
    %236 = vmatpush2.msra.mxu0 0.0
    %237 = vmatprep.subr.mxu0 0.0
    %238 = vmatpush2.msra.mxu0 0.0
    %239 = vmatprep.subr.mxu0 0.0
    %240 = vmatpush2.msra.mxu0 0.0
    %241 = vmatprep.subr.mxu0 0.0
    %242 = vmatpush2.msra.mxu0 0.0
    %243 = vmatprep.subr.mxu0 0.0
    %244 = vmatpush2.msra.mxu0 0.0
    %245 = vmatprep.subr.mxu0 0.0
    %246 = vmatpush2.msra.mxu0 0.0
    %247 = vmatprep.mubr.f32.mxu0 0.0
    %248 = vmatmul.mubr.f32.gmra.mxu0 %v181
    %v249 = vpop.f32.mrf.mxu0
    %v250 = vadd.f32 %v176, %v249
    %v251 = vpop.f32.mrf.mxu0
    %252 = vdwg.mxu0
    %v253 = vadd.f32 %v250, %v76
    %v254 = vxor.u32 %v253, 2147483648
    %v255 = vmul.f32 %v254, 1.442695
    %v256 = vpow.pop %v255
    %v257 = vadd.f32 %v256, 1.0
    %v258 = vrcp.pop %v257
    %v259 = vmul.f32 1.0, %v258
    %v260 = vtanh.pop %v253
    %v261 = vmul.f32 %v259, 0.0
    %263 = vrot.lane.b32.xlu0 %v260, 64
    %v264 = vpop.permute.xlu0 %263
    %v266 = vmul.f32 %v259, %v264
    %268 = vrot.lane.b32.xlu0 %v266, 32
    %v269 = vpop.permute.xlu0 %268
    %v271 = vadd.f32 %v261, %v269
    %v272 = vtanh.pop %v271
    %274 = vrot.lane.b32.xlu0 %v272, 64
    %v275 = vpop.permute.xlu0 %274
    %v277 = vmul.f32 %v259, %v275
    %278 = vmatprep.subr.mxu0 0.0
    %279 = vmatpush1.msra.mxu0 0.0
    %280 = vmatprep.subr.mxu0 0.0
    %281 = vmatpush1.msra.mxu0 0.0
    %282 = vmatprep.subr.mxu0 0.0
    %283 = vmatpush1.msra.mxu0 0.0
    %284 = vmatprep.subr.mxu0 0.0
    %285 = vmatpush1.msra.mxu0 0.0
    %286 = vmatprep.subr.mxu0 0.0
    %287 = vmatpush1.msra.mxu0 0.0
    %288 = vmatprep.subr.mxu0 0.0
    %289 = vmatpush1.msra.mxu0 0.0
    %290 = vmatprep.subr.mxu0 0.0
    %291 = vmatpush1.msra.mxu0 0.0
    %292 = vmatprep.subr.mxu0 0.0
    %293 = vmatpush1.msra.mxu0 0.0
    %294 = vmatprep.subr.mxu0 0.0
    %295 = vmatpush1.msra.mxu0 0.0
    %296 = vmatprep.subr.mxu0 0.0
    %297 = vmatpush1.msra.mxu0 0.0
    %298 = vmatprep.subr.mxu0 0.0
    %299 = vmatpush1.msra.mxu0 0.0
    %300 = vmatprep.subr.mxu0 0.0
    %301 = vmatpush1.msra.mxu0 0.0
    %302 = vmatprep.subr.mxu0 0.0
    %303 = vmatpush1.msra.mxu0 %v85
    %304 = vmatprep.subr.mxu0 0.0
    %305 = vmatpush1.msra.mxu0 %v84
    %306 = vmatprep.subr.mxu0 0.0
    %307 = vmatpush1.msra.mxu0 %v83
    %308 = vmatprep.subr.mxu0 0.0
    %309 = vmatpush1.msra.mxu0 %v82
    %310 = vmatprep.subr.mxu0 0.0
    %311 = vmatpush2.msra.mxu0 0.0
    %312 = vmatprep.subr.mxu0 0.0
    %313 = vmatpush2.msra.mxu0 0.0
    %314 = vmatprep.subr.mxu0 0.0
    %315 = vmatpush2.msra.mxu0 0.0
    %316 = vmatprep.subr.mxu0 0.0
    %317 = vmatpush2.msra.mxu0 0.0
    %318 = vmatprep.subr.mxu0 0.0
    %319 = vmatpush2.msra.mxu0 0.0
    %320 = vmatprep.subr.mxu0 0.0
    %321 = vmatpush2.msra.mxu0 0.0
    %322 = vmatprep.subr.mxu0 0.0
    %323 = vmatpush2.msra.mxu0 0.0
    %324 = vmatprep.subr.mxu0 0.0
    %325 = vmatpush2.msra.mxu0 0.0
    %326 = vmatprep.subr.mxu0 0.0
    %327 = vmatpush2.msra.mxu0 0.0
    %328 = vmatprep.subr.mxu0 0.0
    %329 = vmatpush2.msra.mxu0 0.0
    %330 = vmatprep.subr.mxu0 0.0
    %331 = vmatpush2.msra.mxu0 0.0
    %332 = vmatprep.subr.mxu0 0.0
    %333 = vmatpush2.msra.mxu0 0.0
    %334 = vmatprep.subr.mxu0 0.0
    %335 = vmatpush2.msra.mxu0 0.0
    %336 = vmatprep.subr.mxu0 0.0
    %337 = vmatpush2.msra.mxu0 0.0
    %338 = vmatprep.subr.mxu0 0.0
    %339 = vmatpush2.msra.mxu0 0.0
    %340 = vmatprep.subr.mxu0 0.0
    %341 = vmatpush2.msra.mxu0 0.0
    %342 = vmatprep.mubr.f32.mxu0 0.0
    %343 = vmatmul.mubr.f32.gmra.mxu0 %v107
    %v344 = vpop.f32.mrf.mxu0
    %v345 = vadd.f32 0.0, %v344
    %v346 = vpop.f32.mrf.mxu0
    %347 = vdwg.mxu0
    %349 = vrot.lane.b32.xlu0 %v277, 32
    %v350 = vpop.permute.xlu0 %349
    %v351 = vsel %vm105, %v350, 0
    %353 = vmatprep.subr.mxu0 0.0
    %354 = vmatpush1.msra.mxu0 0.0
    %355 = vmatprep.subr.mxu0 0.0
    %356 = vmatpush1.msra.mxu0 0.0
    %357 = vmatprep.subr.mxu0 0.0
    %358 = vmatpush1.msra.mxu0 0.0
    %359 = vmatprep.subr.mxu0 0.0
    %360 = vmatpush1.msra.mxu0 0.0
    %361 = vmatprep.subr.mxu0 0.0
    %362 = vmatpush1.msra.mxu0 0.0
    %363 = vmatprep.subr.mxu0 0.0
    %364 = vmatpush1.msra.mxu0 0.0
    %365 = vmatprep.subr.mxu0 0.0
    %366 = vmatpush1.msra.mxu0 0.0
    %367 = vmatprep.subr.mxu0 0.0
    %368 = vmatpush1.msra.mxu0 0.0
    %369 = vmatprep.subr.mxu0 0.0
    %370 = vmatpush1.msra.mxu0 0.0
    %371 = vmatprep.subr.mxu0 0.0
    %372 = vmatpush1.msra.mxu0 0.0
    %373 = vmatprep.subr.mxu0 0.0
    %374 = vmatpush1.msra.mxu0 0.0
    %375 = vmatprep.subr.mxu0 0.0
    %376 = vmatpush1.msra.mxu0 0.0
    %377 = vmatprep.subr.mxu0 0.0
    %378 = vmatpush1.msra.mxu0 %v81
    %379 = vmatprep.subr.mxu0 0.0
    %380 = vmatpush1.msra.mxu0 %v80
    %381 = vmatprep.subr.mxu0 0.0
    %382 = vmatpush1.msra.mxu0 %v79
    %383 = vmatprep.subr.mxu0 0.0
    %384 = vmatpush1.msra.mxu0 %v78
    %385 = vmatprep.subr.mxu0 0.0
    %386 = vmatpush2.msra.mxu0 0.0
    %387 = vmatprep.subr.mxu0 0.0
    %388 = vmatpush2.msra.mxu0 0.0
    %389 = vmatprep.subr.mxu0 0.0
    %390 = vmatpush2.msra.mxu0 0.0
    %391 = vmatprep.subr.mxu0 0.0
    %392 = vmatpush2.msra.mxu0 0.0
    %393 = vmatprep.subr.mxu0 0.0
    %394 = vmatpush2.msra.mxu0 0.0
    %395 = vmatprep.subr.mxu0 0.0
    %396 = vmatpush2.msra.mxu0 0.0
    %397 = vmatprep.subr.mxu0 0.0
    %398 = vmatpush2.msra.mxu0 0.0
    %399 = vmatprep.subr.mxu0 0.0
    %400 = vmatpush2.msra.mxu0 0.0
    %401 = vmatprep.subr.mxu0 0.0
    %402 = vmatpush2.msra.mxu0 0.0
    %403 = vmatprep.subr.mxu0 0.0
    %404 = vmatpush2.msra.mxu0 0.0
    %405 = vmatprep.subr.mxu0 0.0
    %406 = vmatpush2.msra.mxu0 0.0
    %407 = vmatprep.subr.mxu0 0.0
    %408 = vmatpush2.msra.mxu0 0.0
    %409 = vmatprep.subr.mxu0 0.0
    %410 = vmatpush2.msra.mxu0 0.0
    %411 = vmatprep.subr.mxu0 0.0
    %412 = vmatpush2.msra.mxu0 0.0
    %413 = vmatprep.subr.mxu0 0.0
    %414 = vmatpush2.msra.mxu0 0.0
    %415 = vmatprep.subr.mxu0 0.0
    %416 = vmatpush2.msra.mxu0 0.0
    %417 = vmatprep.mubr.f32.mxu0 0.0
    %418 = vmatmul.mubr.f32.gmra.mxu0 %v351
    %v419 = vpop.f32.mrf.mxu0
    %v420 = vadd.f32 %v345, %v419
    %v421 = vpop.f32.mrf.mxu0
    %422 = vdwg.mxu0
    %v423 = vadd.f32 %v420, %v91
    %v424 = vxor.u32 %v423, 2147483648
    %v425 = vmul.f32 %v424, 1.442695
    %v426 = vpow.pop %v425
    %v427 = vadd.f32 %v426, 1.0
    %v428 = vrcp.pop %v427
    %v429 = vmul.f32 1.0, %v428
    %v430 = vtanh.pop %v423
    %v431 = vmul.f32 %v429, 0.0
    %433 = vrot.lane.b32.xlu0 %v430, 64
    %v434 = vpop.permute.xlu0 %433
    %v436 = vmul.f32 %v429, %v434
    %438 = vrot.lane.b32.xlu0 %v436, 32
    %v439 = vpop.permute.xlu0 %438
    %v441 = vadd.f32 %v431, %v439
    %v442 = vtanh.pop %v441
    %444 = vrot.lane.b32.xlu0 %v442, 64
    %v445 = vpop.permute.xlu0 %444
    %v447 = vmul.f32 %v429, %v445
    %449 = vrot.lane.b32.xlu0 %v447, 32
    %v450 = vpop.permute.xlu0 %449
    %v451 = vsel %vm105, %v450, 0
    %453 = vmatprep.subr.mxu0 0.0
    %454 = vmatpush1.msra.mxu0 0.0
    %455 = vmatprep.subr.mxu0 0.0
    %456 = vmatpush1.msra.mxu0 0.0
    %457 = vmatprep.subr.mxu0 0.0
    %458 = vmatpush1.msra.mxu0 0.0
    %459 = vmatprep.subr.mxu0 0.0
    %460 = vmatpush1.msra.mxu0 0.0
    %461 = vmatprep.subr.mxu0 0.0
    %462 = vmatpush1.msra.mxu0 0.0
    %463 = vmatprep.subr.mxu0 0.0
    %464 = vmatpush1.msra.mxu0 0.0
    %465 = vmatprep.subr.mxu0 0.0
    %466 = vmatpush1.msra.mxu0 0.0
    %467 = vmatprep.subr.mxu0 0.0
    %468 = vmatpush1.msra.mxu0 0.0
    %469 = vmatprep.subr.mxu0 0.0
    %470 = vmatpush1.msra.mxu0 0.0
    %471 = vmatprep.subr.mxu0 0.0
    %472 = vmatpush1.msra.mxu0 0.0
    %473 = vmatprep.subr.mxu0 0.0
    %474 = vmatpush1.msra.mxu0 0.0
    %475 = vmatprep.subr.mxu0 0.0
    %476 = vmatpush1.msra.mxu0 0.0
    %477 = vmatprep.subr.mxu0 0.0
    %478 = vmatpush1.msra.mxu0 %v96
    %479 = vmatprep.subr.mxu0 0.0
    %480 = vmatpush1.msra.mxu0 %v95
    %481 = vmatprep.subr.mxu0 0.0
    %482 = vmatpush1.msra.mxu0 %v94
    %483 = vmatprep.subr.mxu0 0.0
    %484 = vmatpush1.msra.mxu0 %v93
    %485 = vmatprep.subr.mxu0 0.0
    %486 = vmatpush2.msra.mxu0 0.0
    %487 = vmatprep.subr.mxu0 0.0
    %488 = vmatpush2.msra.mxu0 0.0
    %489 = vmatprep.subr.mxu0 0.0
    %490 = vmatpush2.msra.mxu0 0.0
    %491 = vmatprep.subr.mxu0 0.0
    %492 = vmatpush2.msra.mxu0 0.0
    %493 = vmatprep.subr.mxu0 0.0
    %494 = vmatpush2.msra.mxu0 0.0
    %495 = vmatprep.subr.mxu0 0.0
    %496 = vmatpush2.msra.mxu0 0.0
    %497 = vmatprep.subr.mxu0 0.0
    %498 = vmatpush2.msra.mxu0 0.0
    %499 = vmatprep.subr.mxu0 0.0
    %500 = vmatpush2.msra.mxu0 0.0
    %501 = vmatprep.subr.mxu0 0.0
    %502 = vmatpush2.msra.mxu0 0.0
    %503 = vmatprep.subr.mxu0 0.0
    %504 = vmatpush2.msra.mxu0 0.0
    %505 = vmatprep.subr.mxu0 0.0
    %506 = vmatpush2.msra.mxu0 0.0
    %507 = vmatprep.subr.mxu0 0.0
    %508 = vmatpush2.msra.mxu0 0.0
    %509 = vmatprep.subr.mxu0 0.0
    %510 = vmatpush2.msra.mxu0 0.0
    %511 = vmatprep.subr.mxu0 0.0
    %512 = vmatpush2.msra.mxu0 0.0
    %513 = vmatprep.subr.mxu0 0.0
    %514 = vmatpush2.msra.mxu0 0.0
    %515 = vmatprep.subr.mxu0 0.0
    %516 = vmatpush2.msra.mxu0 0.0
    %517 = vmatprep.mubr.f32.mxu0 0.0
    %518 = vmatmul.mubr.f32.gmra.mxu0 %v451
    %v519 = vpop.f32.mrf.mxu0
    %v520 = vadd.f32 %v102, %v519
    %v521 = vpop.f32.mrf.mxu0
    %522 = vdwg.mxu0
    %v524 = vrot.slane %v520, 4
    %v526 = vsub.f32 %v520, %v524
    %v527 = vand.u32 2147483647, %v526
    %vm528 = vcmask 404480
    %v529 = vsel %vm528, %v527, 0.0
    %530 = vadd.xlane.f32.xlu0 %v529
    %v531 = vpop.xlane.xlu0 %530
    %v532 = vrot.slane %v531, 4
    %v533 = vadd.f32 %v531, %v532
    %v534 = vrot.slane %v533, 2
    %v535 = vadd.f32 %v533, %v534
    %v536 = vrot.slane %v535, 1
    %v537 = vadd.f32 %v535, %v536
    %s538 = vtos %v537
    %v539 = vstv %s538
    %v540 = vadd.f32 %v539, 0.0
    %s541 = scalar_lea.vmem %s0, 8
    %v542 = vld [vmem:[%s541] sm:$0xff]
    %543 = vmatprep.subr.mxu0 0.0
    %544 = vmatpush1.msra.mxu0 0.0
    %545 = vmatprep.subr.mxu0 0.0
    %546 = vmatpush1.msra.mxu0 0.0
    %547 = vmatprep.subr.mxu0 0.0
    %548 = vmatpush1.msra.mxu0 0.0
    %549 = vmatprep.subr.mxu0 0.0
    %550 = vmatpush1.msra.mxu0 0.0
    %551 = vmatprep.subr.mxu0 0.0
    %552 = vmatpush1.msra.mxu0 0.0
    %553 = vmatprep.subr.mxu0 0.0
    %554 = vmatpush1.msra.mxu0 0.0
    %555 = vmatprep.subr.mxu0 0.0
    %556 = vmatpush1.msra.mxu0 0.0
    %557 = vmatprep.subr.mxu0 0.0
    %558 = vmatpush1.msra.mxu0 0.0
    %559 = vmatprep.subr.mxu0 0.0
    %560 = vmatpush1.msra.mxu0 0.0
    %561 = vmatprep.subr.mxu0 0.0
    %562 = vmatpush1.msra.mxu0 0.0
    %563 = vmatprep.subr.mxu0 0.0
    %564 = vmatpush1.msra.mxu0 0.0
    %565 = vmatprep.subr.mxu0 0.0
    %566 = vmatpush1.msra.mxu0 0.0
    %567 = vmatprep.subr.mxu0 0.0
    %568 = vmatpush1.msra.mxu0 %v70
    %569 = vmatprep.subr.mxu0 0.0
    %570 = vmatpush1.msra.mxu0 %v69
    %571 = vmatprep.subr.mxu0 0.0
    %572 = vmatpush1.msra.mxu0 %v68
    %573 = vmatprep.subr.mxu0 0.0
    %574 = vmatpush1.msra.mxu0 %v67
    %575 = vmatprep.subr.mxu0 0.0
    %576 = vmatpush2.msra.mxu0 0.0
    %577 = vmatprep.subr.mxu0 0.0
    %578 = vmatpush2.msra.mxu0 0.0
    %579 = vmatprep.subr.mxu0 0.0
    %580 = vmatpush2.msra.mxu0 0.0
    %581 = vmatprep.subr.mxu0 0.0
    %582 = vmatpush2.msra.mxu0 0.0
    %583 = vmatprep.subr.mxu0 0.0
    %584 = vmatpush2.msra.mxu0 0.0
    %585 = vmatprep.subr.mxu0 0.0
    %586 = vmatpush2.msra.mxu0 0.0
    %587 = vmatprep.subr.mxu0 0.0
    %588 = vmatpush2.msra.mxu0 0.0
    %589 = vmatprep.subr.mxu0 0.0
    %590 = vmatpush2.msra.mxu0 0.0
    %591 = vmatprep.subr.mxu0 0.0
    %592 = vmatpush2.msra.mxu0 0.0
    %593 = vmatprep.subr.mxu0 0.0
    %594 = vmatpush2.msra.mxu0 0.0
    %595 = vmatprep.subr.mxu0 0.0
    %596 = vmatpush2.msra.mxu0 0.0
    %597 = vmatprep.subr.mxu0 0.0
    %598 = vmatpush2.msra.mxu0 0.0
    %599 = vmatprep.subr.mxu0 0.0
    %600 = vmatpush2.msra.mxu0 0.0
    %601 = vmatprep.subr.mxu0 0.0
    %602 = vmatpush2.msra.mxu0 0.0
    %603 = vmatprep.subr.mxu0 0.0
    %604 = vmatpush2.msra.mxu0 0.0
    %605 = vmatprep.subr.mxu0 0.0
    %606 = vmatpush2.msra.mxu0 0.0
    %607 = vmatprep.mubr.f32.mxu0 0.0
    %608 = vmatmul.mubr.f32.gmra.mxu0 %v351
    %v609 = vpop.f32.mrf.mxu0
    %v610 = vadd.f32 0.0, %v609
    %v611 = vpop.f32.mrf.mxu0
    %612 = vdwg.mxu0
    %v614 = vsel %vm179, %v542, 0
    %616 = vmatprep.subr.mxu0 0.0
    %617 = vmatpush1.msra.mxu0 0.0
    %618 = vmatprep.subr.mxu0 0.0
    %619 = vmatpush1.msra.mxu0 0.0
    %620 = vmatprep.subr.mxu0 0.0
    %621 = vmatpush1.msra.mxu0 0.0
    %622 = vmatprep.subr.mxu0 0.0
    %623 = vmatpush1.msra.mxu0 0.0
    %624 = vmatprep.subr.mxu0 0.0
    %625 = vmatpush1.msra.mxu0 0.0
    %626 = vmatprep.subr.mxu0 0.0
    %627 = vmatpush1.msra.mxu0 0.0
    %628 = vmatprep.subr.mxu0 0.0
    %629 = vmatpush1.msra.mxu0 0.0
    %630 = vmatprep.subr.mxu0 0.0
    %631 = vmatpush1.msra.mxu0 0.0
    %632 = vmatprep.subr.mxu0 0.0
    %633 = vmatpush1.msra.mxu0 0.0
    %634 = vmatprep.subr.mxu0 0.0
    %635 = vmatpush1.msra.mxu0 0.0
    %636 = vmatprep.subr.mxu0 0.0
    %637 = vmatpush1.msra.mxu0 0.0
    %638 = vmatprep.subr.mxu0 0.0
    %639 = vmatpush1.msra.mxu0 0.0
    %640 = vmatprep.subr.mxu0 0.0
    %641 = vmatpush1.msra.mxu0 0.0
    %642 = vmatprep.subr.mxu0 0.0
    %643 = vmatpush1.msra.mxu0 0.0
    %644 = vmatprep.subr.mxu0 0.0
    %645 = vmatpush1.msra.mxu0 %v66
    %646 = vmatprep.subr.mxu0 0.0
    %647 = vmatpush1.msra.mxu0 %v65
    %648 = vmatprep.subr.mxu0 0.0
    %649 = vmatpush2.msra.mxu0 0.0
    %650 = vmatprep.subr.mxu0 0.0
    %651 = vmatpush2.msra.mxu0 0.0
    %652 = vmatprep.subr.mxu0 0.0
    %653 = vmatpush2.msra.mxu0 0.0
    %654 = vmatprep.subr.mxu0 0.0
    %655 = vmatpush2.msra.mxu0 0.0
    %656 = vmatprep.subr.mxu0 0.0
    %657 = vmatpush2.msra.mxu0 0.0
    %658 = vmatprep.subr.mxu0 0.0
    %659 = vmatpush2.msra.mxu0 0.0
    %660 = vmatprep.subr.mxu0 0.0
    %661 = vmatpush2.msra.mxu0 0.0
    %662 = vmatprep.subr.mxu0 0.0
    %663 = vmatpush2.msra.mxu0 0.0
    %664 = vmatprep.subr.mxu0 0.0
    %665 = vmatpush2.msra.mxu0 0.0
    %666 = vmatprep.subr.mxu0 0.0
    %667 = vmatpush2.msra.mxu0 0.0
    %668 = vmatprep.subr.mxu0 0.0
    %669 = vmatpush2.msra.mxu0 0.0
    %670 = vmatprep.subr.mxu0 0.0
    %671 = vmatpush2.msra.mxu0 0.0
    %672 = vmatprep.subr.mxu0 0.0
    %673 = vmatpush2.msra.mxu0 0.0
    %674 = vmatprep.subr.mxu0 0.0
    %675 = vmatpush2.msra.mxu0 0.0
    %676 = vmatprep.subr.mxu0 0.0
    %677 = vmatpush2.msra.mxu0 0.0
    %678 = vmatprep.subr.mxu0 0.0
    %679 = vmatpush2.msra.mxu0 0.0
    %680 = vmatprep.mubr.f32.mxu0 0.0
    %681 = vmatmul.mubr.f32.gmra.mxu0 %v614
    %v682 = vpop.f32.mrf.mxu0
    %v683 = vadd.f32 %v610, %v682
    %v684 = vpop.f32.mrf.mxu0
    %685 = vdwg.mxu0
    %v686 = vadd.f32 %v683, %v76
    %v687 = vxor.u32 %v686, 2147483648
    %v688 = vmul.f32 %v687, 1.442695
    %v689 = vpow.pop %v688
    %v690 = vadd.f32 %v689, 1.0
    %v691 = vrcp.pop %v690
    %v692 = vmul.f32 1.0, %v691
    %v693 = vtanh.pop %v686
    %v694 = vmul.f32 %v692, %v271
    %696 = vrot.lane.b32.xlu0 %v693, 64
    %v697 = vpop.permute.xlu0 %696
    %v699 = vmul.f32 %v692, %v697
    %701 = vrot.lane.b32.xlu0 %v699, 32
    %v702 = vpop.permute.xlu0 %701
    %v704 = vadd.f32 %v694, %v702
    %v705 = vtanh.pop %v704
    %707 = vrot.lane.b32.xlu0 %v705, 64
    %v708 = vpop.permute.xlu0 %707
    %v710 = vmul.f32 %v692, %v708
    %711 = vmatprep.subr.mxu0 0.0
    %712 = vmatpush1.msra.mxu0 0.0
    %713 = vmatprep.subr.mxu0 0.0
    %714 = vmatpush1.msra.mxu0 0.0
    %715 = vmatprep.subr.mxu0 0.0
    %716 = vmatpush1.msra.mxu0 0.0
    %717 = vmatprep.subr.mxu0 0.0
    %718 = vmatpush1.msra.mxu0 0.0
    %719 = vmatprep.subr.mxu0 0.0
    %720 = vmatpush1.msra.mxu0 0.0
    %721 = vmatprep.subr.mxu0 0.0
    %722 = vmatpush1.msra.mxu0 0.0
    %723 = vmatprep.subr.mxu0 0.0
    %724 = vmatpush1.msra.mxu0 0.0
    %725 = vmatprep.subr.mxu0 0.0
    %726 = vmatpush1.msra.mxu0 0.0
    %727 = vmatprep.subr.mxu0 0.0
    %728 = vmatpush1.msra.mxu0 0.0
    %729 = vmatprep.subr.mxu0 0.0
    %730 = vmatpush1.msra.mxu0 0.0
    %731 = vmatprep.subr.mxu0 0.0
    %732 = vmatpush1.msra.mxu0 0.0
    %733 = vmatprep.subr.mxu0 0.0
    %734 = vmatpush1.msra.mxu0 0.0
    %735 = vmatprep.subr.mxu0 0.0
    %736 = vmatpush1.msra.mxu0 %v85
    %737 = vmatprep.subr.mxu0 0.0
    %738 = vmatpush1.msra.mxu0 %v84
    %739 = vmatprep.subr.mxu0 0.0
    %740 = vmatpush1.msra.mxu0 %v83
    %741 = vmatprep.subr.mxu0 0.0
    %742 = vmatpush1.msra.mxu0 %v82
    %743 = vmatprep.subr.mxu0 0.0
    %744 = vmatpush2.msra.mxu0 0.0
    %745 = vmatprep.subr.mxu0 0.0
    %746 = vmatpush2.msra.mxu0 0.0
    %747 = vmatprep.subr.mxu0 0.0
    %748 = vmatpush2.msra.mxu0 0.0
    %749 = vmatprep.subr.mxu0 0.0
    %750 = vmatpush2.msra.mxu0 0.0
    %751 = vmatprep.subr.mxu0 0.0
    %752 = vmatpush2.msra.mxu0 0.0
    %753 = vmatprep.subr.mxu0 0.0
    %754 = vmatpush2.msra.mxu0 0.0
    %755 = vmatprep.subr.mxu0 0.0
    %756 = vmatpush2.msra.mxu0 0.0
    %757 = vmatprep.subr.mxu0 0.0
    %758 = vmatpush2.msra.mxu0 0.0
    %759 = vmatprep.subr.mxu0 0.0
    %760 = vmatpush2.msra.mxu0 0.0
    %761 = vmatprep.subr.mxu0 0.0
    %762 = vmatpush2.msra.mxu0 0.0
    %763 = vmatprep.subr.mxu0 0.0
    %764 = vmatpush2.msra.mxu0 0.0
    %765 = vmatprep.subr.mxu0 0.0
    %766 = vmatpush2.msra.mxu0 0.0
    %767 = vmatprep.subr.mxu0 0.0
    %768 = vmatpush2.msra.mxu0 0.0
    %769 = vmatprep.subr.mxu0 0.0
    %770 = vmatpush2.msra.mxu0 0.0
    %771 = vmatprep.subr.mxu0 0.0
    %772 = vmatpush2.msra.mxu0 0.0
    %773 = vmatprep.subr.mxu0 0.0
    %774 = vmatpush2.msra.mxu0 0.0
    %775 = vmatprep.mubr.f32.mxu0 0.0
    %776 = vmatmul.mubr.f32.gmra.mxu0 %v451
    %v777 = vpop.f32.mrf.mxu0
    %v778 = vadd.f32 0.0, %v777
    %v779 = vpop.f32.mrf.mxu0
    %780 = vdwg.mxu0
    %782 = vrot.lane.b32.xlu0 %v710, 32
    %v783 = vpop.permute.xlu0 %782
    %v784 = vsel %vm105, %v783, 0
    %786 = vmatprep.subr.mxu0 0.0
    %787 = vmatpush1.msra.mxu0 0.0
    %788 = vmatprep.subr.mxu0 0.0
    %789 = vmatpush1.msra.mxu0 0.0
    %790 = vmatprep.subr.mxu0 0.0
    %791 = vmatpush1.msra.mxu0 0.0
    %792 = vmatprep.subr.mxu0 0.0
    %793 = vmatpush1.msra.mxu0 0.0
    %794 = vmatprep.subr.mxu0 0.0
    %795 = vmatpush1.msra.mxu0 0.0
    %796 = vmatprep.subr.mxu0 0.0
    %797 = vmatpush1.msra.mxu0 0.0
    %798 = vmatprep.subr.mxu0 0.0
    %799 = vmatpush1.msra.mxu0 0.0
    %800 = vmatprep.subr.mxu0 0.0
    %801 = vmatpush1.msra.mxu0 0.0
    %802 = vmatprep.subr.mxu0 0.0
    %803 = vmatpush1.msra.mxu0 0.0
    %804 = vmatprep.subr.mxu0 0.0
    %805 = vmatpush1.msra.mxu0 0.0
    %806 = vmatprep.subr.mxu0 0.0
    %807 = vmatpush1.msra.mxu0 0.0
    %808 = vmatprep.subr.mxu0 0.0
    %809 = vmatpush1.msra.mxu0 0.0
    %810 = vmatprep.subr.mxu0 0.0
    %811 = vmatpush1.msra.mxu0 %v81
    %812 = vmatprep.subr.mxu0 0.0
    %813 = vmatpush1.msra.mxu0 %v80
    %814 = vmatprep.subr.mxu0 0.0
    %815 = vmatpush1.msra.mxu0 %v79
    %816 = vmatprep.subr.mxu0 0.0
    %817 = vmatpush1.msra.mxu0 %v78
    %818 = vmatprep.subr.mxu0 0.0
    %819 = vmatpush2.msra.mxu0 0.0
    %820 = vmatprep.subr.mxu0 0.0
    %821 = vmatpush2.msra.mxu0 0.0
    %822 = vmatprep.subr.mxu0 0.0
    %823 = vmatpush2.msra.mxu0 0.0
    %824 = vmatprep.subr.mxu0 0.0
    %825 = vmatpush2.msra.mxu0 0.0
    %826 = vmatprep.subr.mxu0 0.0
    %827 = vmatpush2.msra.mxu0 0.0
    %828 = vmatprep.subr.mxu0 0.0
    %829 = vmatpush2.msra.mxu0 0.0
    %830 = vmatprep.subr.mxu0 0.0
    %831 = vmatpush2.msra.mxu0 0.0
    %832 = vmatprep.subr.mxu0 0.0
    %833 = vmatpush2.msra.mxu0 0.0
    %834 = vmatprep.subr.mxu0 0.0
    %835 = vmatpush2.msra.mxu0 0.0
    %836 = vmatprep.subr.mxu0 0.0
    %837 = vmatpush2.msra.mxu0 0.0
    %838 = vmatprep.subr.mxu0 0.0
    %839 = vmatpush2.msra.mxu0 0.0
    %840 = vmatprep.subr.mxu0 0.0
    %841 = vmatpush2.msra.mxu0 0.0
    %842 = vmatprep.subr.mxu0 0.0
    %843 = vmatpush2.msra.mxu0 0.0
    %844 = vmatprep.subr.mxu0 0.0
    %845 = vmatpush2.msra.mxu0 0.0
    %846 = vmatprep.subr.mxu0 0.0
    %847 = vmatpush2.msra.mxu0 0.0
    %848 = vmatprep.subr.mxu0 0.0
    %849 = vmatpush2.msra.mxu0 0.0
    %850 = vmatprep.mubr.f32.mxu0 0.0
    %851 = vmatmul.mubr.f32.gmra.mxu0 %v784
    %v852 = vpop.f32.mrf.mxu0
    %v853 = vadd.f32 %v778, %v852
    %v854 = vpop.f32.mrf.mxu0
    %855 = vdwg.mxu0
    %v856 = vadd.f32 %v853, %v91
    %v857 = vxor.u32 %v856, 2147483648
    %v858 = vmul.f32 %v857, 1.442695
    %v859 = vpow.pop %v858
    %v860 = vadd.f32 %v859, 1.0
    %v861 = vrcp.pop %v860
    %v862 = vmul.f32 1.0, %v861
    %v863 = vtanh.pop %v856
    %v864 = vmul.f32 %v862, %v441
    %866 = vrot.lane.b32.xlu0 %v863, 64
    %v867 = vpop.permute.xlu0 %866
    %v869 = vmul.f32 %v862, %v867
    %871 = vrot.lane.b32.xlu0 %v869, 32
    %v872 = vpop.permute.xlu0 %871
    %v874 = vadd.f32 %v864, %v872
    %v875 = vtanh.pop %v874
    %877 = vrot.lane.b32.xlu0 %v875, 64
    %v878 = vpop.permute.xlu0 %877
    %v880 = vmul.f32 %v862, %v878
    %882 = vrot.lane.b32.xlu0 %v880, 32
    %v883 = vpop.permute.xlu0 %882
    %v884 = vsel %vm105, %v883, 0
    %886 = vmatprep.subr.mxu0 0.0
    %887 = vmatpush1.msra.mxu0 0.0
    %888 = vmatprep.subr.mxu0 0.0
    %889 = vmatpush1.msra.mxu0 0.0
    %890 = vmatprep.subr.mxu0 0.0
    %891 = vmatpush1.msra.mxu0 0.0
    %892 = vmatprep.subr.mxu0 0.0
    %893 = vmatpush1.msra.mxu0 0.0
    %894 = vmatprep.subr.mxu0 0.0
    %895 = vmatpush1.msra.mxu0 0.0
    %896 = vmatprep.subr.mxu0 0.0
    %897 = vmatpush1.msra.mxu0 0.0
    %898 = vmatprep.subr.mxu0 0.0
    %899 = vmatpush1.msra.mxu0 0.0
    %900 = vmatprep.subr.mxu0 0.0
    %901 = vmatpush1.msra.mxu0 0.0
    %902 = vmatprep.subr.mxu0 0.0
    %903 = vmatpush1.msra.mxu0 0.0
    %904 = vmatprep.subr.mxu0 0.0
    %905 = vmatpush1.msra.mxu0 0.0
    %906 = vmatprep.subr.mxu0 0.0
    %907 = vmatpush1.msra.mxu0 0.0
    %908 = vmatprep.subr.mxu0 0.0
    %909 = vmatpush1.msra.mxu0 0.0
    %910 = vmatprep.subr.mxu0 0.0
    %911 = vmatpush1.msra.mxu0 %v96
    %912 = vmatprep.subr.mxu0 0.0
    %913 = vmatpush1.msra.mxu0 %v95
    %914 = vmatprep.subr.mxu0 0.0
    %915 = vmatpush1.msra.mxu0 %v94
    %916 = vmatprep.subr.mxu0 0.0
    %917 = vmatpush1.msra.mxu0 %v93
    %918 = vmatprep.subr.mxu0 0.0
    %919 = vmatpush2.msra.mxu0 0.0
    %920 = vmatprep.subr.mxu0 0.0
    %921 = vmatpush2.msra.mxu0 0.0
    %922 = vmatprep.subr.mxu0 0.0
    %923 = vmatpush2.msra.mxu0 0.0
    %924 = vmatprep.subr.mxu0 0.0
    %925 = vmatpush2.msra.mxu0 0.0
    %926 = vmatprep.subr.mxu0 0.0
    %927 = vmatpush2.msra.mxu0 0.0
    %928 = vmatprep.subr.mxu0 0.0
    %929 = vmatpush2.msra.mxu0 0.0
    %930 = vmatprep.subr.mxu0 0.0
    %931 = vmatpush2.msra.mxu0 0.0
    %932 = vmatprep.subr.mxu0 0.0
    %933 = vmatpush2.msra.mxu0 0.0
    %934 = vmatprep.subr.mxu0 0.0
    %935 = vmatpush2.msra.mxu0 0.0
    %936 = vmatprep.subr.mxu0 0.0
    %937 = vmatpush2.msra.mxu0 0.0
    %938 = vmatprep.subr.mxu0 0.0
    %939 = vmatpush2.msra.mxu0 0.0
    %940 = vmatprep.subr.mxu0 0.0
    %941 = vmatpush2.msra.mxu0 0.0
    %942 = vmatprep.subr.mxu0 0.0
    %943 = vmatpush2.msra.mxu0 0.0
    %944 = vmatprep.subr.mxu0 0.0
    %945 = vmatpush2.msra.mxu0 0.0
    %946 = vmatprep.subr.mxu0 0.0
    %947 = vmatpush2.msra.mxu0 0.0
    %948 = vmatprep.subr.mxu0 0.0
    %949 = vmatpush2.msra.mxu0 0.0
    %950 = vmatprep.mubr.f32.mxu0 0.0
    %951 = vmatmul.mubr.f32.gmra.mxu0 %v884
    %v952 = vpop.f32.mrf.mxu0
    %v953 = vadd.f32 %v102, %v952
    %v954 = vpop.f32.mrf.mxu0
    %955 = vdwg.mxu0
    %v957 = vrot.slane %v953, 4
    %v959 = vsub.f32 %v953, %v957
    %v960 = vand.u32 2147483647, %v959
    %v961 = vsel %vm528, %v960, 0.0
    %962 = vadd.xlane.f32.xlu0 %v961
    %v963 = vpop.xlane.xlu0 %962
    %v964 = vrot.slane %v963, 4
    %v965 = vadd.f32 %v963, %v964
    %v966 = vrot.slane %v965, 2
    %v967 = vadd.f32 %v965, %v966
    %v968 = vrot.slane %v967, 1
    %v969 = vadd.f32 %v967, %v968
    %s970 = vtos %v969
    %v971 = vstv %s970
    %v972 = vadd.f32 %v540, %v971
    %s973 = scalar_lea.vmem %s0, 16
    %v974 = vld [vmem:[%s973] sm:$0xff]
    %975 = vmatprep.subr.mxu0 0.0
    %976 = vmatpush1.msra.mxu0 0.0
    %977 = vmatprep.subr.mxu0 0.0
    %978 = vmatpush1.msra.mxu0 0.0
    %979 = vmatprep.subr.mxu0 0.0
    %980 = vmatpush1.msra.mxu0 0.0
    %981 = vmatprep.subr.mxu0 0.0
    %982 = vmatpush1.msra.mxu0 0.0
    %983 = vmatprep.subr.mxu0 0.0
    %984 = vmatpush1.msra.mxu0 0.0
    %985 = vmatprep.subr.mxu0 0.0
    %986 = vmatpush1.msra.mxu0 0.0
    %987 = vmatprep.subr.mxu0 0.0
    %988 = vmatpush1.msra.mxu0 0.0
    %989 = vmatprep.subr.mxu0 0.0
    %990 = vmatpush1.msra.mxu0 0.0
    %991 = vmatprep.subr.mxu0 0.0
    %992 = vmatpush1.msra.mxu0 0.0
    %993 = vmatprep.subr.mxu0 0.0
    %994 = vmatpush1.msra.mxu0 0.0
    %995 = vmatprep.subr.mxu0 0.0
    %996 = vmatpush1.msra.mxu0 0.0
    %997 = vmatprep.subr.mxu0 0.0
    %998 = vmatpush1.msra.mxu0 0.0
    %999 = vmatprep.subr.mxu0 0.0
    %1000 = vmatpush1.msra.mxu0 %v70
    %1001 = vmatprep.subr.mxu0 0.0
    %1002 = vmatpush1.msra.mxu0 %v69
    %1003 = vmatprep.subr.mxu0 0.0
    %1004 = vmatpush1.msra.mxu0 %v68
    %1005 = vmatprep.subr.mxu0 0.0
    %1006 = vmatpush1.msra.mxu0 %v67
    %1007 = vmatprep.subr.mxu0 0.0
    %1008 = vmatpush2.msra.mxu0 0.0
    %1009 = vmatprep.subr.mxu0 0.0
    %1010 = vmatpush2.msra.mxu0 0.0
    %1011 = vmatprep.subr.mxu0 0.0
    %1012 = vmatpush2.msra.mxu0 0.0
    %1013 = vmatprep.subr.mxu0 0.0
    %1014 = vmatpush2.msra.mxu0 0.0
    %1015 = vmatprep.subr.mxu0 0.0
    %1016 = vmatpush2.msra.mxu0 0.0
    %1017 = vmatprep.subr.mxu0 0.0
    %1018 = vmatpush2.msra.mxu0 0.0
    %1019 = vmatprep.subr.mxu0 0.0
    %1020 = vmatpush2.msra.mxu0 0.0
    %1021 = vmatprep.subr.mxu0 0.0
    %1022 = vmatpush2.msra.mxu0 0.0
    %1023 = vmatprep.subr.mxu0 0.0
    %1024 = vmatpush2.msra.mxu0 0.0
    %1025 = vmatprep.subr.mxu0 0.0
    %1026 = vmatpush2.msra.mxu0 0.0
    %1027 = vmatprep.subr.mxu0 0.0
    %1028 = vmatpush2.msra.mxu0 0.0
    %1029 = vmatprep.subr.mxu0 0.0
    %1030 = vmatpush2.msra.mxu0 0.0
    %1031 = vmatprep.subr.mxu0 0.0
    %1032 = vmatpush2.msra.mxu0 0.0
    %1033 = vmatprep.subr.mxu0 0.0
    %1034 = vmatpush2.msra.mxu0 0.0
    %1035 = vmatprep.subr.mxu0 0.0
    %1036 = vmatpush2.msra.mxu0 0.0
    %1037 = vmatprep.subr.mxu0 0.0
    %1038 = vmatpush2.msra.mxu0 0.0
    %1039 = vmatprep.mubr.f32.mxu0 0.0
    %1040 = vmatmul.mubr.f32.gmra.mxu0 %v784
    %v1041 = vpop.f32.mrf.mxu0
    %v1042 = vadd.f32 0.0, %v1041
    %v1043 = vpop.f32.mrf.mxu0
    %1044 = vdwg.mxu0
    %v1046 = vsel %vm179, %v974, 0
    %1048 = vmatprep.subr.mxu0 0.0
    %1049 = vmatpush1.msra.mxu0 0.0
    %1050 = vmatprep.subr.mxu0 0.0
    %1051 = vmatpush1.msra.mxu0 0.0
    %1052 = vmatprep.subr.mxu0 0.0
    %1053 = vmatpush1.msra.mxu0 0.0
    %1054 = vmatprep.subr.mxu0 0.0
    %1055 = vmatpush1.msra.mxu0 0.0
    %1056 = vmatprep.subr.mxu0 0.0
    %1057 = vmatpush1.msra.mxu0 0.0
    %1058 = vmatprep.subr.mxu0 0.0
    %1059 = vmatpush1.msra.mxu0 0.0
    %1060 = vmatprep.subr.mxu0 0.0
    %1061 = vmatpush1.msra.mxu0 0.0
    %1062 = vmatprep.subr.mxu0 0.0
    %1063 = vmatpush1.msra.mxu0 0.0
    %1064 = vmatprep.subr.mxu0 0.0
    %1065 = vmatpush1.msra.mxu0 0.0
    %1066 = vmatprep.subr.mxu0 0.0
    %1067 = vmatpush1.msra.mxu0 0.0
    %1068 = vmatprep.subr.mxu0 0.0
    %1069 = vmatpush1.msra.mxu0 0.0
    %1070 = vmatprep.subr.mxu0 0.0
    %1071 = vmatpush1.msra.mxu0 0.0
    %1072 = vmatprep.subr.mxu0 0.0
    %1073 = vmatpush1.msra.mxu0 0.0
    %1074 = vmatprep.subr.mxu0 0.0
    %1075 = vmatpush1.msra.mxu0 0.0
    %1076 = vmatprep.subr.mxu0 0.0
    %1077 = vmatpush1.msra.mxu0 %v66
    %1078 = vmatprep.subr.mxu0 0.0
    %1079 = vmatpush1.msra.mxu0 %v65
    %1080 = vmatprep.subr.mxu0 0.0
    %1081 = vmatpush2.msra.mxu0 0.0
    %1082 = vmatprep.subr.mxu0 0.0
    %1083 = vmatpush2.msra.mxu0 0.0
    %1084 = vmatprep.subr.mxu0 0.0
    %1085 = vmatpush2.msra.mxu0 0.0
    %1086 = vmatprep.subr.mxu0 0.0
    %1087 = vmatpush2.msra.mxu0 0.0
    %1088 = vmatprep.subr.mxu0 0.0
    %1089 = vmatpush2.msra.mxu0 0.0
    %1090 = vmatprep.subr.mxu0 0.0
    %1091 = vmatpush2.msra.mxu0 0.0
    %1092 = vmatprep.subr.mxu0 0.0
    %1093 = vmatpush2.msra.mxu0 0.0
    %1094 = vmatprep.subr.mxu0 0.0
    %1095 = vmatpush2.msra.mxu0 0.0
    %1096 = vmatprep.subr.mxu0 0.0
    %1097 = vmatpush2.msra.mxu0 0.0
    %1098 = vmatprep.subr.mxu0 0.0
    %1099 = vmatpush2.msra.mxu0 0.0
    %1100 = vmatprep.subr.mxu0 0.0
    %1101 = vmatpush2.msra.mxu0 0.0
    %1102 = vmatprep.subr.mxu0 0.0
    %1103 = vmatpush2.msra.mxu0 0.0
    %1104 = vmatprep.subr.mxu0 0.0
    %1105 = vmatpush2.msra.mxu0 0.0
    %1106 = vmatprep.subr.mxu0 0.0
    %1107 = vmatpush2.msra.mxu0 0.0
    %1108 = vmatprep.subr.mxu0 0.0
    %1109 = vmatpush2.msra.mxu0 0.0
    %1110 = vmatprep.subr.mxu0 0.0
    %1111 = vmatpush2.msra.mxu0 0.0
    %1112 = vmatprep.mubr.f32.mxu0 0.0
    %1113 = vmatmul.mubr.f32.gmra.mxu0 %v1046
    %v1114 = vpop.f32.mrf.mxu0
    %v1115 = vadd.f32 %v1042, %v1114
    %v1116 = vpop.f32.mrf.mxu0
    %1117 = vdwg.mxu0
    %v1118 = vadd.f32 %v1115, %v76
    %v1119 = vxor.u32 %v1118, 2147483648
    %v1120 = vmul.f32 %v1119, 1.442695
    %v1121 = vpow.pop %v1120
    %v1122 = vadd.f32 %v1121, 1.0
    %v1123 = vrcp.pop %v1122
    %v1124 = vmul.f32 1.0, %v1123
    %v1125 = vtanh.pop %v1118
    %v1126 = vmul.f32 %v1124, %v704
    %1128 = vrot.lane.b32.xlu0 %v1125, 64
    %v1129 = vpop.permute.xlu0 %1128
    %v1131 = vmul.f32 %v1124, %v1129
    %1133 = vrot.lane.b32.xlu0 %v1131, 32
    %v1134 = vpop.permute.xlu0 %1133
    %v1136 = vadd.f32 %v1126, %v1134
    %v1137 = vtanh.pop %v1136
    %1139 = vrot.lane.b32.xlu0 %v1137, 64
    %v1140 = vpop.permute.xlu0 %1139
    %v1142 = vmul.f32 %v1124, %v1140
    %1143 = vmatprep.subr.mxu0 0.0
    %1144 = vmatpush1.msra.mxu0 0.0
    %1145 = vmatprep.subr.mxu0 0.0
    %1146 = vmatpush1.msra.mxu0 0.0
    %1147 = vmatprep.subr.mxu0 0.0
    %1148 = vmatpush1.msra.mxu0 0.0
    %1149 = vmatprep.subr.mxu0 0.0
    %1150 = vmatpush1.msra.mxu0 0.0
    %1151 = vmatprep.subr.mxu0 0.0
    %1152 = vmatpush1.msra.mxu0 0.0
    %1153 = vmatprep.subr.mxu0 0.0
    %1154 = vmatpush1.msra.mxu0 0.0
    %1155 = vmatprep.subr.mxu0 0.0
    %1156 = vmatpush1.msra.mxu0 0.0
    %1157 = vmatprep.subr.mxu0 0.0
    %1158 = vmatpush1.msra.mxu0 0.0
    %1159 = vmatprep.subr.mxu0 0.0
    %1160 = vmatpush1.msra.mxu0 0.0
    %1161 = vmatprep.subr.mxu0 0.0
    %1162 = vmatpush1.msra.mxu0 0.0
    %1163 = vmatprep.subr.mxu0 0.0
    %1164 = vmatpush1.msra.mxu0 0.0
    %1165 = vmatprep.subr.mxu0 0.0
    %1166 = vmatpush1.msra.mxu0 0.0
    %1167 = vmatprep.subr.mxu0 0.0
    %1168 = vmatpush1.msra.mxu0 %v85
    %1169 = vmatprep.subr.mxu0 0.0
    %1170 = vmatpush1.msra.mxu0 %v84
    %1171 = vmatprep.subr.mxu0 0.0
    %1172 = vmatpush1.msra.mxu0 %v83
    %1173 = vmatprep.subr.mxu0 0.0
    %1174 = vmatpush1.msra.mxu0 %v82
    %1175 = vmatprep.subr.mxu0 0.0
    %1176 = vmatpush2.msra.mxu0 0.0
    %1177 = vmatprep.subr.mxu0 0.0
    %1178 = vmatpush2.msra.mxu0 0.0
    %1179 = vmatprep.subr.mxu0 0.0
    %1180 = vmatpush2.msra.mxu0 0.0
    %1181 = vmatprep.subr.mxu0 0.0
    %1182 = vmatpush2.msra.mxu0 0.0
    %1183 = vmatprep.subr.mxu0 0.0
    %1184 = vmatpush2.msra.mxu0 0.0
    %1185 = vmatprep.subr.mxu0 0.0
    %1186 = vmatpush2.msra.mxu0 0.0
    %1187 = vmatprep.subr.mxu0 0.0
    %1188 = vmatpush2.msra.mxu0 0.0
    %1189 = vmatprep.subr.mxu0 0.0
    %1190 = vmatpush2.msra.mxu0 0.0
    %1191 = vmatprep.subr.mxu0 0.0
    %1192 = vmatpush2.msra.mxu0 0.0
    %1193 = vmatprep.subr.mxu0 0.0
    %1194 = vmatpush2.msra.mxu0 0.0
    %1195 = vmatprep.subr.mxu0 0.0
    %1196 = vmatpush2.msra.mxu0 0.0
    %1197 = vmatprep.subr.mxu0 0.0
    %1198 = vmatpush2.msra.mxu0 0.0
    %1199 = vmatprep.subr.mxu0 0.0
    %1200 = vmatpush2.msra.mxu0 0.0
    %1201 = vmatprep.subr.mxu0 0.0
    %1202 = vmatpush2.msra.mxu0 0.0
    %1203 = vmatprep.subr.mxu0 0.0
    %1204 = vmatpush2.msra.mxu0 0.0
    %1205 = vmatprep.subr.mxu0 0.0
    %1206 = vmatpush2.msra.mxu0 0.0
    %1207 = vmatprep.mubr.f32.mxu0 0.0
    %1208 = vmatmul.mubr.f32.gmra.mxu0 %v884
    %v1209 = vpop.f32.mrf.mxu0
    %v1210 = vadd.f32 0.0, %v1209
    %v1211 = vpop.f32.mrf.mxu0
    %1212 = vdwg.mxu0
    %1214 = vrot.lane.b32.xlu0 %v1142, 32
    %v1215 = vpop.permute.xlu0 %1214
    %v1216 = vsel %vm105, %v1215, 0
    %1218 = vmatprep.subr.mxu0 0.0
    %1219 = vmatpush1.msra.mxu0 0.0
    %1220 = vmatprep.subr.mxu0 0.0
    %1221 = vmatpush1.msra.mxu0 0.0
    %1222 = vmatprep.subr.mxu0 0.0
    %1223 = vmatpush1.msra.mxu0 0.0
    %1224 = vmatprep.subr.mxu0 0.0
    %1225 = vmatpush1.msra.mxu0 0.0
    %1226 = vmatprep.subr.mxu0 0.0
    %1227 = vmatpush1.msra.mxu0 0.0
    %1228 = vmatprep.subr.mxu0 0.0
    %1229 = vmatpush1.msra.mxu0 0.0
    %1230 = vmatprep.subr.mxu0 0.0
    %1231 = vmatpush1.msra.mxu0 0.0
    %1232 = vmatprep.subr.mxu0 0.0
    %1233 = vmatpush1.msra.mxu0 0.0
    %1234 = vmatprep.subr.mxu0 0.0
    %1235 = vmatpush1.msra.mxu0 0.0
    %1236 = vmatprep.subr.mxu0 0.0
    %1237 = vmatpush1.msra.mxu0 0.0
    %1238 = vmatprep.subr.mxu0 0.0
    %1239 = vmatpush1.msra.mxu0 0.0
    %1240 = vmatprep.subr.mxu0 0.0
    %1241 = vmatpush1.msra.mxu0 0.0
    %1242 = vmatprep.subr.mxu0 0.0
    %1243 = vmatpush1.msra.mxu0 %v81
    %1244 = vmatprep.subr.mxu0 0.0
    %1245 = vmatpush1.msra.mxu0 %v80
    %1246 = vmatprep.subr.mxu0 0.0
    %1247 = vmatpush1.msra.mxu0 %v79
    %1248 = vmatprep.subr.mxu0 0.0
    %1249 = vmatpush1.msra.mxu0 %v78
    %1250 = vmatprep.subr.mxu0 0.0
    %1251 = vmatpush2.msra.mxu0 0.0
    %1252 = vmatprep.subr.mxu0 0.0
    %1253 = vmatpush2.msra.mxu0 0.0
    %1254 = vmatprep.subr.mxu0 0.0
    %1255 = vmatpush2.msra.mxu0 0.0
    %1256 = vmatprep.subr.mxu0 0.0
    %1257 = vmatpush2.msra.mxu0 0.0
    %1258 = vmatprep.subr.mxu0 0.0
    %1259 = vmatpush2.msra.mxu0 0.0
    %1260 = vmatprep.subr.mxu0 0.0
    %1261 = vmatpush2.msra.mxu0 0.0
    %1262 = vmatprep.subr.mxu0 0.0
    %1263 = vmatpush2.msra.mxu0 0.0
    %1264 = vmatprep.subr.mxu0 0.0
    %1265 = vmatpush2.msra.mxu0 0.0
    %1266 = vmatprep.subr.mxu0 0.0
    %1267 = vmatpush2.msra.mxu0 0.0
    %1268 = vmatprep.subr.mxu0 0.0
    %1269 = vmatpush2.msra.mxu0 0.0
    %1270 = vmatprep.subr.mxu0 0.0
    %1271 = vmatpush2.msra.mxu0 0.0
    %1272 = vmatprep.subr.mxu0 0.0
    %1273 = vmatpush2.msra.mxu0 0.0
    %1274 = vmatprep.subr.mxu0 0.0
    %1275 = vmatpush2.msra.mxu0 0.0
    %1276 = vmatprep.subr.mxu0 0.0
    %1277 = vmatpush2.msra.mxu0 0.0
    %1278 = vmatprep.subr.mxu0 0.0
    %1279 = vmatpush2.msra.mxu0 0.0
    %1280 = vmatprep.subr.mxu0 0.0
    %1281 = vmatpush2.msra.mxu0 0.0
    %1282 = vmatprep.mubr.f32.mxu0 0.0
    %1283 = vmatmul.mubr.f32.gmra.mxu0 %v1216
    %v1284 = vpop.f32.mrf.mxu0
    %v1285 = vadd.f32 %v1210, %v1284
    %v1286 = vpop.f32.mrf.mxu0
    %1287 = vdwg.mxu0
    %v1288 = vadd.f32 %v1285, %v91
    %v1289 = vxor.u32 %v1288, 2147483648
    %v1290 = vmul.f32 %v1289, 1.442695
    %v1291 = vpow.pop %v1290
    %v1292 = vadd.f32 %v1291, 1.0
    %v1293 = vrcp.pop %v1292
    %v1294 = vmul.f32 1.0, %v1293
    %v1295 = vtanh.pop %v1288
    %v1296 = vmul.f32 %v1294, %v874
    %1298 = vrot.lane.b32.xlu0 %v1295, 64
    %v1299 = vpop.permute.xlu0 %1298
    %v1301 = vmul.f32 %v1294, %v1299
    %1303 = vrot.lane.b32.xlu0 %v1301, 32
    %v1304 = vpop.permute.xlu0 %1303
    %v1306 = vadd.f32 %v1296, %v1304
    %v1307 = vtanh.pop %v1306
    %1309 = vrot.lane.b32.xlu0 %v1307, 64
    %v1310 = vpop.permute.xlu0 %1309
    %v1312 = vmul.f32 %v1294, %v1310
    %1314 = vrot.lane.b32.xlu0 %v1312, 32
    %v1315 = vpop.permute.xlu0 %1314
    %v1316 = vsel %vm105, %v1315, 0
    %1318 = vmatprep.subr.mxu0 0.0
    %1319 = vmatpush1.msra.mxu0 0.0
    %1320 = vmatprep.subr.mxu0 0.0
    %1321 = vmatpush1.msra.mxu0 0.0
    %1322 = vmatprep.subr.mxu0 0.0
    %1323 = vmatpush1.msra.mxu0 0.0
    %1324 = vmatprep.subr.mxu0 0.0
    %1325 = vmatpush1.msra.mxu0 0.0
    %1326 = vmatprep.subr.mxu0 0.0
    %1327 = vmatpush1.msra.mxu0 0.0
    %1328 = vmatprep.subr.mxu0 0.0
    %1329 = vmatpush1.msra.mxu0 0.0
    %1330 = vmatprep.subr.mxu0 0.0
    %1331 = vmatpush1.msra.mxu0 0.0
    %1332 = vmatprep.subr.mxu0 0.0
    %1333 = vmatpush1.msra.mxu0 0.0
    %1334 = vmatprep.subr.mxu0 0.0
    %1335 = vmatpush1.msra.mxu0 0.0
    %1336 = vmatprep.subr.mxu0 0.0
    %1337 = vmatpush1.msra.mxu0 0.0
    %1338 = vmatprep.subr.mxu0 0.0
    %1339 = vmatpush1.msra.mxu0 0.0
    %1340 = vmatprep.subr.mxu0 0.0
    %1341 = vmatpush1.msra.mxu0 0.0
    %1342 = vmatprep.subr.mxu0 0.0
    %1343 = vmatpush1.msra.mxu0 %v96
    %1344 = vmatprep.subr.mxu0 0.0
    %1345 = vmatpush1.msra.mxu0 %v95
    %1346 = vmatprep.subr.mxu0 0.0
    %1347 = vmatpush1.msra.mxu0 %v94
    %1348 = vmatprep.subr.mxu0 0.0
    %1349 = vmatpush1.msra.mxu0 %v93
    %1350 = vmatprep.subr.mxu0 0.0
    %1351 = vmatpush2.msra.mxu0 0.0
    %1352 = vmatprep.subr.mxu0 0.0
    %1353 = vmatpush2.msra.mxu0 0.0
    %1354 = vmatprep.subr.mxu0 0.0
    %1355 = vmatpush2.msra.mxu0 0.0
    %1356 = vmatprep.subr.mxu0 0.0
    %1357 = vmatpush2.msra.mxu0 0.0
    %1358 = vmatprep.subr.mxu0 0.0
    %1359 = vmatpush2.msra.mxu0 0.0
    %1360 = vmatprep.subr.mxu0 0.0
    %1361 = vmatpush2.msra.mxu0 0.0
    %1362 = vmatprep.subr.mxu0 0.0
    %1363 = vmatpush2.msra.mxu0 0.0
    %1364 = vmatprep.subr.mxu0 0.0
    %1365 = vmatpush2.msra.mxu0 0.0
    %1366 = vmatprep.subr.mxu0 0.0
    %1367 = vmatpush2.msra.mxu0 0.0
    %1368 = vmatprep.subr.mxu0 0.0
    %1369 = vmatpush2.msra.mxu0 0.0
    %1370 = vmatprep.subr.mxu0 0.0
    %1371 = vmatpush2.msra.mxu0 0.0
    %1372 = vmatprep.subr.mxu0 0.0
    %1373 = vmatpush2.msra.mxu0 0.0
    %1374 = vmatprep.subr.mxu0 0.0
    %1375 = vmatpush2.msra.mxu0 0.0
    %1376 = vmatprep.subr.mxu0 0.0
    %1377 = vmatpush2.msra.mxu0 0.0
    %1378 = vmatprep.subr.mxu0 0.0
    %1379 = vmatpush2.msra.mxu0 0.0
    %1380 = vmatprep.subr.mxu0 0.0
    %1381 = vmatpush2.msra.mxu0 0.0
    %1382 = vmatprep.mubr.f32.mxu0 0.0
    %1383 = vmatmul.mubr.f32.gmra.mxu0 %v1316
    %v1384 = vpop.f32.mrf.mxu0
    %v1385 = vadd.f32 %v102, %v1384
    %v1386 = vpop.f32.mrf.mxu0
    %1387 = vdwg.mxu0
    %v1389 = vrot.slane %v1385, 4
    %v1391 = vsub.f32 %v1385, %v1389
    %v1392 = vand.u32 2147483647, %v1391
    %v1393 = vsel %vm528, %v1392, 0.0
    %1394 = vadd.xlane.f32.xlu0 %v1393
    %v1395 = vpop.xlane.xlu0 %1394
    %v1396 = vrot.slane %v1395, 4
    %v1397 = vadd.f32 %v1395, %v1396
    %v1398 = vrot.slane %v1397, 2
    %v1399 = vadd.f32 %v1397, %v1398
    %v1400 = vrot.slane %v1399, 1
    %v1401 = vadd.f32 %v1399, %v1400
    %s1402 = vtos %v1401
    %v1403 = vstv %s1402
    %v1404 = vadd.f32 %v972, %v1403
    %s1405 = scalar_lea.vmem %s0, 24
    %v1406 = vld [vmem:[%s1405] sm:$0xff]
    %1407 = vmatprep.subr.mxu0 0.0
    %1408 = vmatpush1.msra.mxu0 0.0
    %1409 = vmatprep.subr.mxu0 0.0
    %1410 = vmatpush1.msra.mxu0 0.0
    %1411 = vmatprep.subr.mxu0 0.0
    %1412 = vmatpush1.msra.mxu0 0.0
    %1413 = vmatprep.subr.mxu0 0.0
    %1414 = vmatpush1.msra.mxu0 0.0
    %1415 = vmatprep.subr.mxu0 0.0
    %1416 = vmatpush1.msra.mxu0 0.0
    %1417 = vmatprep.subr.mxu0 0.0
    %1418 = vmatpush1.msra.mxu0 0.0
    %1419 = vmatprep.subr.mxu0 0.0
    %1420 = vmatpush1.msra.mxu0 0.0
    %1421 = vmatprep.subr.mxu0 0.0
    %1422 = vmatpush1.msra.mxu0 0.0
    %1423 = vmatprep.subr.mxu0 0.0
    %1424 = vmatpush1.msra.mxu0 0.0
    %1425 = vmatprep.subr.mxu0 0.0
    %1426 = vmatpush1.msra.mxu0 0.0
    %1427 = vmatprep.subr.mxu0 0.0
    %1428 = vmatpush1.msra.mxu0 0.0
    %1429 = vmatprep.subr.mxu0 0.0
    %1430 = vmatpush1.msra.mxu0 0.0
    %1431 = vmatprep.subr.mxu0 0.0
    %1432 = vmatpush1.msra.mxu0 %v70
    %1433 = vmatprep.subr.mxu0 0.0
    %1434 = vmatpush1.msra.mxu0 %v69
    %1435 = vmatprep.subr.mxu0 0.0
    %1436 = vmatpush1.msra.mxu0 %v68
    %1437 = vmatprep.subr.mxu0 0.0
    %1438 = vmatpush1.msra.mxu0 %v67
    %1439 = vmatprep.subr.mxu0 0.0
    %1440 = vmatpush2.msra.mxu0 0.0
    %1441 = vmatprep.subr.mxu0 0.0
    %1442 = vmatpush2.msra.mxu0 0.0
    %1443 = vmatprep.subr.mxu0 0.0
    %1444 = vmatpush2.msra.mxu0 0.0
    %1445 = vmatprep.subr.mxu0 0.0
    %1446 = vmatpush2.msra.mxu0 0.0
    %1447 = vmatprep.subr.mxu0 0.0
    %1448 = vmatpush2.msra.mxu0 0.0
    %1449 = vmatprep.subr.mxu0 0.0
    %1450 = vmatpush2.msra.mxu0 0.0
    %1451 = vmatprep.subr.mxu0 0.0
    %1452 = vmatpush2.msra.mxu0 0.0
    %1453 = vmatprep.subr.mxu0 0.0
    %1454 = vmatpush2.msra.mxu0 0.0
    %1455 = vmatprep.subr.mxu0 0.0
    %1456 = vmatpush2.msra.mxu0 0.0
    %1457 = vmatprep.subr.mxu0 0.0
    %1458 = vmatpush2.msra.mxu0 0.0
    %1459 = vmatprep.subr.mxu0 0.0
    %1460 = vmatpush2.msra.mxu0 0.0
    %1461 = vmatprep.subr.mxu0 0.0
    %1462 = vmatpush2.msra.mxu0 0.0
    %1463 = vmatprep.subr.mxu0 0.0
    %1464 = vmatpush2.msra.mxu0 0.0
    %1465 = vmatprep.subr.mxu0 0.0
    %1466 = vmatpush2.msra.mxu0 0.0
    %1467 = vmatprep.subr.mxu0 0.0
    %1468 = vmatpush2.msra.mxu0 0.0
    %1469 = vmatprep.subr.mxu0 0.0
    %1470 = vmatpush2.msra.mxu0 0.0
    %1471 = vmatprep.mubr.f32.mxu0 0.0
    %1472 = vmatmul.mubr.f32.gmra.mxu0 %v1216
    %v1473 = vpop.f32.mrf.mxu0
    %v1474 = vadd.f32 0.0, %v1473
    %v1475 = vpop.f32.mrf.mxu0
    %1476 = vdwg.mxu0
    %v1478 = vsel %vm179, %v1406, 0
    %1480 = vmatprep.subr.mxu0 0.0
    %1481 = vmatpush1.msra.mxu0 0.0
    %1482 = vmatprep.subr.mxu0 0.0
    %1483 = vmatpush1.msra.mxu0 0.0
    %1484 = vmatprep.subr.mxu0 0.0
    %1485 = vmatpush1.msra.mxu0 0.0
    %1486 = vmatprep.subr.mxu0 0.0
    %1487 = vmatpush1.msra.mxu0 0.0
    %1488 = vmatprep.subr.mxu0 0.0
    %1489 = vmatpush1.msra.mxu0 0.0
    %1490 = vmatprep.subr.mxu0 0.0
    %1491 = vmatpush1.msra.mxu0 0.0
    %1492 = vmatprep.subr.mxu0 0.0
    %1493 = vmatpush1.msra.mxu0 0.0
    %1494 = vmatprep.subr.mxu0 0.0
    %1495 = vmatpush1.msra.mxu0 0.0
    %1496 = vmatprep.subr.mxu0 0.0
    %1497 = vmatpush1.msra.mxu0 0.0
    %1498 = vmatprep.subr.mxu0 0.0
    %1499 = vmatpush1.msra.mxu0 0.0
    %1500 = vmatprep.subr.mxu0 0.0
    %1501 = vmatpush1.msra.mxu0 0.0
    %1502 = vmatprep.subr.mxu0 0.0
    %1503 = vmatpush1.msra.mxu0 0.0
    %1504 = vmatprep.subr.mxu0 0.0
    %1505 = vmatpush1.msra.mxu0 0.0
    %1506 = vmatprep.subr.mxu0 0.0
    %1507 = vmatpush1.msra.mxu0 0.0
    %1508 = vmatprep.subr.mxu0 0.0
    %1509 = vmatpush1.msra.mxu0 %v66
    %1510 = vmatprep.subr.mxu0 0.0
    %1511 = vmatpush1.msra.mxu0 %v65
    %1512 = vmatprep.subr.mxu0 0.0
    %1513 = vmatpush2.msra.mxu0 0.0
    %1514 = vmatprep.subr.mxu0 0.0
    %1515 = vmatpush2.msra.mxu0 0.0
    %1516 = vmatprep.subr.mxu0 0.0
    %1517 = vmatpush2.msra.mxu0 0.0
    %1518 = vmatprep.subr.mxu0 0.0
    %1519 = vmatpush2.msra.mxu0 0.0
    %1520 = vmatprep.subr.mxu0 0.0
    %1521 = vmatpush2.msra.mxu0 0.0
    %1522 = vmatprep.subr.mxu0 0.0
    %1523 = vmatpush2.msra.mxu0 0.0
    %1524 = vmatprep.subr.mxu0 0.0
    %1525 = vmatpush2.msra.mxu0 0.0
    %1526 = vmatprep.subr.mxu0 0.0
    %1527 = vmatpush2.msra.mxu0 0.0
    %1528 = vmatprep.subr.mxu0 0.0
    %1529 = vmatpush2.msra.mxu0 0.0
    %1530 = vmatprep.subr.mxu0 0.0
    %1531 = vmatpush2.msra.mxu0 0.0
    %1532 = vmatprep.subr.mxu0 0.0
    %1533 = vmatpush2.msra.mxu0 0.0
    %1534 = vmatprep.subr.mxu0 0.0
    %1535 = vmatpush2.msra.mxu0 0.0
    %1536 = vmatprep.subr.mxu0 0.0
    %1537 = vmatpush2.msra.mxu0 0.0
    %1538 = vmatprep.subr.mxu0 0.0
    %1539 = vmatpush2.msra.mxu0 0.0
    %1540 = vmatprep.subr.mxu0 0.0
    %1541 = vmatpush2.msra.mxu0 0.0
    %1542 = vmatprep.subr.mxu0 0.0
    %1543 = vmatpush2.msra.mxu0 0.0
    %1544 = vmatprep.mubr.f32.mxu0 0.0
    %1545 = vmatmul.mubr.f32.gmra.mxu0 %v1478
    %v1546 = vpop.f32.mrf.mxu0
    %v1547 = vadd.f32 %v1474, %v1546
    %v1548 = vpop.f32.mrf.mxu0
    %1549 = vdwg.mxu0
    %v1550 = vadd.f32 %v1547, %v76
    %v1551 = vxor.u32 %v1550, 2147483648
    %v1552 = vmul.f32 %v1551, 1.442695
    %v1553 = vpow.pop %v1552
    %v1554 = vadd.f32 %v1553, 1.0
    %v1555 = vrcp.pop %v1554
    %v1556 = vmul.f32 1.0, %v1555
    %v1557 = vtanh.pop %v1550
    %v1558 = vmul.f32 %v1556, %v1136
    %1560 = vrot.lane.b32.xlu0 %v1557, 64
    %v1561 = vpop.permute.xlu0 %1560
    %v1563 = vmul.f32 %v1556, %v1561
    %1565 = vrot.lane.b32.xlu0 %v1563, 32
    %v1566 = vpop.permute.xlu0 %1565
    %v1568 = vadd.f32 %v1558, %v1566
    %v1569 = vtanh.pop %v1568
    %1571 = vrot.lane.b32.xlu0 %v1569, 64
    %v1572 = vpop.permute.xlu0 %1571
    %v1574 = vmul.f32 %v1556, %v1572
    %1575 = vmatprep.subr.mxu0 0.0
    %1576 = vmatpush1.msra.mxu0 0.0
    %1577 = vmatprep.subr.mxu0 0.0
    %1578 = vmatpush1.msra.mxu0 0.0
    %1579 = vmatprep.subr.mxu0 0.0
    %1580 = vmatpush1.msra.mxu0 0.0
    %1581 = vmatprep.subr.mxu0 0.0
    %1582 = vmatpush1.msra.mxu0 0.0
    %1583 = vmatprep.subr.mxu0 0.0
    %1584 = vmatpush1.msra.mxu0 0.0
    %1585 = vmatprep.subr.mxu0 0.0
    %1586 = vmatpush1.msra.mxu0 0.0
    %1587 = vmatprep.subr.mxu0 0.0
    %1588 = vmatpush1.msra.mxu0 0.0
    %1589 = vmatprep.subr.mxu0 0.0
    %1590 = vmatpush1.msra.mxu0 0.0
    %1591 = vmatprep.subr.mxu0 0.0
    %1592 = vmatpush1.msra.mxu0 0.0
    %1593 = vmatprep.subr.mxu0 0.0
    %1594 = vmatpush1.msra.mxu0 0.0
    %1595 = vmatprep.subr.mxu0 0.0
    %1596 = vmatpush1.msra.mxu0 0.0
    %1597 = vmatprep.subr.mxu0 0.0
    %1598 = vmatpush1.msra.mxu0 0.0
    %1599 = vmatprep.subr.mxu0 0.0
    %1600 = vmatpush1.msra.mxu0 %v85
    %1601 = vmatprep.subr.mxu0 0.0
    %1602 = vmatpush1.msra.mxu0 %v84
    %1603 = vmatprep.subr.mxu0 0.0
    %1604 = vmatpush1.msra.mxu0 %v83
    %1605 = vmatprep.subr.mxu0 0.0
    %1606 = vmatpush1.msra.mxu0 %v82
    %1607 = vmatprep.subr.mxu0 0.0
    %1608 = vmatpush2.msra.mxu0 0.0
    %1609 = vmatprep.subr.mxu0 0.0
    %1610 = vmatpush2.msra.mxu0 0.0
    %1611 = vmatprep.subr.mxu0 0.0
    %1612 = vmatpush2.msra.mxu0 0.0
    %1613 = vmatprep.subr.mxu0 0.0
    %1614 = vmatpush2.msra.mxu0 0.0
    %1615 = vmatprep.subr.mxu0 0.0
    %1616 = vmatpush2.msra.mxu0 0.0
    %1617 = vmatprep.subr.mxu0 0.0
    %1618 = vmatpush2.msra.mxu0 0.0
    %1619 = vmatprep.subr.mxu0 0.0
    %1620 = vmatpush2.msra.mxu0 0.0
    %1621 = vmatprep.subr.mxu0 0.0
    %1622 = vmatpush2.msra.mxu0 0.0
    %1623 = vmatprep.subr.mxu0 0.0
    %1624 = vmatpush2.msra.mxu0 0.0
    %1625 = vmatprep.subr.mxu0 0.0
    %1626 = vmatpush2.msra.mxu0 0.0
    %1627 = vmatprep.subr.mxu0 0.0
    %1628 = vmatpush2.msra.mxu0 0.0
    %1629 = vmatprep.subr.mxu0 0.0
    %1630 = vmatpush2.msra.mxu0 0.0
    %1631 = vmatprep.subr.mxu0 0.0
    %1632 = vmatpush2.msra.mxu0 0.0
    %1633 = vmatprep.subr.mxu0 0.0
    %1634 = vmatpush2.msra.mxu0 0.0
    %1635 = vmatprep.subr.mxu0 0.0
    %1636 = vmatpush2.msra.mxu0 0.0
    %1637 = vmatprep.subr.mxu0 0.0
    %1638 = vmatpush2.msra.mxu0 0.0
    %1639 = vmatprep.mubr.f32.mxu0 0.0
    %1640 = vmatmul.mubr.f32.gmra.mxu0 %v1316
    %v1641 = vpop.f32.mrf.mxu0
    %v1642 = vadd.f32 0.0, %v1641
    %v1643 = vpop.f32.mrf.mxu0
    %1644 = vdwg.mxu0
    %1646 = vrot.lane.b32.xlu0 %v1574, 32
    %v1647 = vpop.permute.xlu0 %1646
    %v1648 = vsel %vm105, %v1647, 0
    %1650 = vmatprep.subr.mxu0 0.0
    %1651 = vmatpush1.msra.mxu0 0.0
    %1652 = vmatprep.subr.mxu0 0.0
    %1653 = vmatpush1.msra.mxu0 0.0
    %1654 = vmatprep.subr.mxu0 0.0
    %1655 = vmatpush1.msra.mxu0 0.0
    %1656 = vmatprep.subr.mxu0 0.0
    %1657 = vmatpush1.msra.mxu0 0.0
    %1658 = vmatprep.subr.mxu0 0.0
    %1659 = vmatpush1.msra.mxu0 0.0
    %1660 = vmatprep.subr.mxu0 0.0
    %1661 = vmatpush1.msra.mxu0 0.0
    %1662 = vmatprep.subr.mxu0 0.0
    %1663 = vmatpush1.msra.mxu0 0.0
    %1664 = vmatprep.subr.mxu0 0.0
    %1665 = vmatpush1.msra.mxu0 0.0
    %1666 = vmatprep.subr.mxu0 0.0
    %1667 = vmatpush1.msra.mxu0 0.0
    %1668 = vmatprep.subr.mxu0 0.0
    %1669 = vmatpush1.msra.mxu0 0.0
    %1670 = vmatprep.subr.mxu0 0.0
    %1671 = vmatpush1.msra.mxu0 0.0
    %1672 = vmatprep.subr.mxu0 0.0
    %1673 = vmatpush1.msra.mxu0 0.0
    %1674 = vmatprep.subr.mxu0 0.0
    %1675 = vmatpush1.msra.mxu0 %v81
    %1676 = vmatprep.subr.mxu0 0.0
    %1677 = vmatpush1.msra.mxu0 %v80
    %1678 = vmatprep.subr.mxu0 0.0
    %1679 = vmatpush1.msra.mxu0 %v79
    %1680 = vmatprep.subr.mxu0 0.0
    %1681 = vmatpush1.msra.mxu0 %v78
    %1682 = vmatprep.subr.mxu0 0.0
    %1683 = vmatpush2.msra.mxu0 0.0
    %1684 = vmatprep.subr.mxu0 0.0
    %1685 = vmatpush2.msra.mxu0 0.0
    %1686 = vmatprep.subr.mxu0 0.0
    %1687 = vmatpush2.msra.mxu0 0.0
    %1688 = vmatprep.subr.mxu0 0.0
    %1689 = vmatpush2.msra.mxu0 0.0
    %1690 = vmatprep.subr.mxu0 0.0
    %1691 = vmatpush2.msra.mxu0 0.0
    %1692 = vmatprep.subr.mxu0 0.0
    %1693 = vmatpush2.msra.mxu0 0.0
    %1694 = vmatprep.subr.mxu0 0.0
    %1695 = vmatpush2.msra.mxu0 0.0
    %1696 = vmatprep.subr.mxu0 0.0
    %1697 = vmatpush2.msra.mxu0 0.0
    %1698 = vmatprep.subr.mxu0 0.0
    %1699 = vmatpush2.msra.mxu0 0.0
    %1700 = vmatprep.subr.mxu0 0.0
    %1701 = vmatpush2.msra.mxu0 0.0
    %1702 = vmatprep.subr.mxu0 0.0
    %1703 = vmatpush2.msra.mxu0 0.0
    %1704 = vmatprep.subr.mxu0 0.0
    %1705 = vmatpush2.msra.mxu0 0.0
    %1706 = vmatprep.subr.mxu0 0.0
    %1707 = vmatpush2.msra.mxu0 0.0
    %1708 = vmatprep.subr.mxu0 0.0
    %1709 = vmatpush2.msra.mxu0 0.0
    %1710 = vmatprep.subr.mxu0 0.0
    %1711 = vmatpush2.msra.mxu0 0.0
    %1712 = vmatprep.subr.mxu0 0.0
    %1713 = vmatpush2.msra.mxu0 0.0
    %1714 = vmatprep.mubr.f32.mxu0 0.0
    %1715 = vmatmul.mubr.f32.gmra.mxu0 %v1648
    %v1716 = vpop.f32.mrf.mxu0
    %v1717 = vadd.f32 %v1642, %v1716
    %v1718 = vpop.f32.mrf.mxu0
    %1719 = vdwg.mxu0
    %v1720 = vadd.f32 %v1717, %v91
    %v1721 = vxor.u32 %v1720, 2147483648
    %v1722 = vmul.f32 %v1721, 1.442695
    %v1723 = vpow.pop %v1722
    %v1724 = vadd.f32 %v1723, 1.0
    %v1725 = vrcp.pop %v1724
    %v1726 = vmul.f32 1.0, %v1725
    %v1727 = vtanh.pop %v1720
    %v1728 = vmul.f32 %v1726, %v1306
    %1730 = vrot.lane.b32.xlu0 %v1727, 64
    %v1731 = vpop.permute.xlu0 %1730
    %v1733 = vmul.f32 %v1726, %v1731
    %1735 = vrot.lane.b32.xlu0 %v1733, 32
    %v1736 = vpop.permute.xlu0 %1735
    %v1738 = vadd.f32 %v1728, %v1736
    %v1739 = vtanh.pop %v1738
    %1741 = vrot.lane.b32.xlu0 %v1739, 64
    %v1742 = vpop.permute.xlu0 %1741
    %v1744 = vmul.f32 %v1726, %v1742
    %1746 = vrot.lane.b32.xlu0 %v1744, 32
    %v1747 = vpop.permute.xlu0 %1746
    %v1748 = vsel %vm105, %v1747, 0
    %1750 = vmatprep.subr.mxu0 0.0
    %1751 = vmatpush1.msra.mxu0 0.0
    %1752 = vmatprep.subr.mxu0 0.0
    %1753 = vmatpush1.msra.mxu0 0.0
    %1754 = vmatprep.subr.mxu0 0.0
    %1755 = vmatpush1.msra.mxu0 0.0
    %1756 = vmatprep.subr.mxu0 0.0
    %1757 = vmatpush1.msra.mxu0 0.0
    %1758 = vmatprep.subr.mxu0 0.0
    %1759 = vmatpush1.msra.mxu0 0.0
    %1760 = vmatprep.subr.mxu0 0.0
    %1761 = vmatpush1.msra.mxu0 0.0
    %1762 = vmatprep.subr.mxu0 0.0
    %1763 = vmatpush1.msra.mxu0 0.0
    %1764 = vmatprep.subr.mxu0 0.0
    %1765 = vmatpush1.msra.mxu0 0.0
    %1766 = vmatprep.subr.mxu0 0.0
    %1767 = vmatpush1.msra.mxu0 0.0
    %1768 = vmatprep.subr.mxu0 0.0
    %1769 = vmatpush1.msra.mxu0 0.0
    %1770 = vmatprep.subr.mxu0 0.0
    %1771 = vmatpush1.msra.mxu0 0.0
    %1772 = vmatprep.subr.mxu0 0.0
    %1773 = vmatpush1.msra.mxu0 0.0
    %1774 = vmatprep.subr.mxu0 0.0
    %1775 = vmatpush1.msra.mxu0 %v96
    %1776 = vmatprep.subr.mxu0 0.0
    %1777 = vmatpush1.msra.mxu0 %v95
    %1778 = vmatprep.subr.mxu0 0.0
    %1779 = vmatpush1.msra.mxu0 %v94
    %1780 = vmatprep.subr.mxu0 0.0
    %1781 = vmatpush1.msra.mxu0 %v93
    %1782 = vmatprep.subr.mxu0 0.0
    %1783 = vmatpush2.msra.mxu0 0.0
    %1784 = vmatprep.subr.mxu0 0.0
    %1785 = vmatpush2.msra.mxu0 0.0
    %1786 = vmatprep.subr.mxu0 0.0
    %1787 = vmatpush2.msra.mxu0 0.0
    %1788 = vmatprep.subr.mxu0 0.0
    %1789 = vmatpush2.msra.mxu0 0.0
    %1790 = vmatprep.subr.mxu0 0.0
    %1791 = vmatpush2.msra.mxu0 0.0
    %1792 = vmatprep.subr.mxu0 0.0
    %1793 = vmatpush2.msra.mxu0 0.0
    %1794 = vmatprep.subr.mxu0 0.0
    %1795 = vmatpush2.msra.mxu0 0.0
    %1796 = vmatprep.subr.mxu0 0.0
    %1797 = vmatpush2.msra.mxu0 0.0
    %1798 = vmatprep.subr.mxu0 0.0
    %1799 = vmatpush2.msra.mxu0 0.0
    %1800 = vmatprep.subr.mxu0 0.0
    %1801 = vmatpush2.msra.mxu0 0.0
    %1802 = vmatprep.subr.mxu0 0.0
    %1803 = vmatpush2.msra.mxu0 0.0
    %1804 = vmatprep.subr.mxu0 0.0
    %1805 = vmatpush2.msra.mxu0 0.0
    %1806 = vmatprep.subr.mxu0 0.0
    %1807 = vmatpush2.msra.mxu0 0.0
    %1808 = vmatprep.subr.mxu0 0.0
    %1809 = vmatpush2.msra.mxu0 0.0
    %1810 = vmatprep.subr.mxu0 0.0
    %1811 = vmatpush2.msra.mxu0 0.0
    %1812 = vmatprep.subr.mxu0 0.0
    %1813 = vmatpush2.msra.mxu0 0.0
    %1814 = vmatprep.mubr.f32.mxu0 0.0
    %1815 = vmatmul.mubr.f32.gmra.mxu0 %v1748
    %v1816 = vpop.f32.mrf.mxu0
    %v1817 = vadd.f32 %v102, %v1816
    %v1818 = vpop.f32.mrf.mxu0
    %1819 = vdwg.mxu0
    %v1821 = vrot.slane %v1817, 4
    %v1823 = vsub.f32 %v1817, %v1821
    %v1824 = vand.u32 2147483647, %v1823
    %v1825 = vsel %vm528, %v1824, 0.0
    %1826 = vadd.xlane.f32.xlu0 %v1825
    %v1827 = vpop.xlane.xlu0 %1826
    %v1828 = vrot.slane %v1827, 4
    %v1829 = vadd.f32 %v1827, %v1828
    %v1830 = vrot.slane %v1829, 2
    %v1831 = vadd.f32 %v1829, %v1830
    %v1832 = vrot.slane %v1831, 1
    %v1833 = vadd.f32 %v1831, %v1832
    %s1834 = vtos %v1833
    %v1835 = vstv %s1834
    %v1836 = vadd.f32 %v1404, %v1835
    %s1837 = scalar_lea.vmem %s0, 32
    %v1838 = vld [vmem:[%s1837] sm:$0xff]
    %1839 = vmatprep.subr.mxu0 0.0
    %1840 = vmatpush1.msra.mxu0 0.0
    %1841 = vmatprep.subr.mxu0 0.0
    %1842 = vmatpush1.msra.mxu0 0.0
    %1843 = vmatprep.subr.mxu0 0.0
    %1844 = vmatpush1.msra.mxu0 0.0
    %1845 = vmatprep.subr.mxu0 0.0
    %1846 = vmatpush1.msra.mxu0 0.0
    %1847 = vmatprep.subr.mxu0 0.0
    %1848 = vmatpush1.msra.mxu0 0.0
    %1849 = vmatprep.subr.mxu0 0.0
    %1850 = vmatpush1.msra.mxu0 0.0
    %1851 = vmatprep.subr.mxu0 0.0
    %1852 = vmatpush1.msra.mxu0 0.0
    %1853 = vmatprep.subr.mxu0 0.0
    %1854 = vmatpush1.msra.mxu0 0.0
    %1855 = vmatprep.subr.mxu0 0.0
    %1856 = vmatpush1.msra.mxu0 0.0
    %1857 = vmatprep.subr.mxu0 0.0
    %1858 = vmatpush1.msra.mxu0 0.0
    %1859 = vmatprep.subr.mxu0 0.0
    %1860 = vmatpush1.msra.mxu0 0.0
    %1861 = vmatprep.subr.mxu0 0.0
    %1862 = vmatpush1.msra.mxu0 0.0
    %1863 = vmatprep.subr.mxu0 0.0
    %1864 = vmatpush1.msra.mxu0 %v70
    %1865 = vmatprep.subr.mxu0 0.0
    %1866 = vmatpush1.msra.mxu0 %v69
    %1867 = vmatprep.subr.mxu0 0.0
    %1868 = vmatpush1.msra.mxu0 %v68
    %1869 = vmatprep.subr.mxu0 0.0
    %1870 = vmatpush1.msra.mxu0 %v67
    %1871 = vmatprep.subr.mxu0 0.0
    %1872 = vmatpush2.msra.mxu0 0.0
    %1873 = vmatprep.subr.mxu0 0.0
    %1874 = vmatpush2.msra.mxu0 0.0
    %1875 = vmatprep.subr.mxu0 0.0
    %1876 = vmatpush2.msra.mxu0 0.0
    %1877 = vmatprep.subr.mxu0 0.0
    %1878 = vmatpush2.msra.mxu0 0.0
    %1879 = vmatprep.subr.mxu0 0.0
    %1880 = vmatpush2.msra.mxu0 0.0
    %1881 = vmatprep.subr.mxu0 0.0
    %1882 = vmatpush2.msra.mxu0 0.0
    %1883 = vmatprep.subr.mxu0 0.0
    %1884 = vmatpush2.msra.mxu0 0.0
    %1885 = vmatprep.subr.mxu0 0.0
    %1886 = vmatpush2.msra.mxu0 0.0
    %1887 = vmatprep.subr.mxu0 0.0
    %1888 = vmatpush2.msra.mxu0 0.0
    %1889 = vmatprep.subr.mxu0 0.0
    %1890 = vmatpush2.msra.mxu0 0.0
    %1891 = vmatprep.subr.mxu0 0.0
    %1892 = vmatpush2.msra.mxu0 0.0
    %1893 = vmatprep.subr.mxu0 0.0
    %1894 = vmatpush2.msra.mxu0 0.0
    %1895 = vmatprep.subr.mxu0 0.0
    %1896 = vmatpush2.msra.mxu0 0.0
    %1897 = vmatprep.subr.mxu0 0.0
    %1898 = vmatpush2.msra.mxu0 0.0
    %1899 = vmatprep.subr.mxu0 0.0
    %1900 = vmatpush2.msra.mxu0 0.0
    %1901 = vmatprep.subr.mxu0 0.0
    %1902 = vmatpush2.msra.mxu0 0.0
    %1903 = vmatprep.mubr.f32.mxu0 0.0
    %1904 = vmatmul.mubr.f32.gmra.mxu0 %v1648
    %v1905 = vpop.f32.mrf.mxu0
    %v1906 = vadd.f32 0.0, %v1905
    %v1907 = vpop.f32.mrf.mxu0
    %1908 = vdwg.mxu0
    %v1910 = vsel %vm179, %v1838, 0
    %1912 = vmatprep.subr.mxu0 0.0
    %1913 = vmatpush1.msra.mxu0 0.0
    %1914 = vmatprep.subr.mxu0 0.0
    %1915 = vmatpush1.msra.mxu0 0.0
    %1916 = vmatprep.subr.mxu0 0.0
    %1917 = vmatpush1.msra.mxu0 0.0
    %1918 = vmatprep.subr.mxu0 0.0
    %1919 = vmatpush1.msra.mxu0 0.0
    %1920 = vmatprep.subr.mxu0 0.0
    %1921 = vmatpush1.msra.mxu0 0.0
    %1922 = vmatprep.subr.mxu0 0.0
    %1923 = vmatpush1.msra.mxu0 0.0
    %1924 = vmatprep.subr.mxu0 0.0
    %1925 = vmatpush1.msra.mxu0 0.0
    %1926 = vmatprep.subr.mxu0 0.0
    %1927 = vmatpush1.msra.mxu0 0.0
    %1928 = vmatprep.subr.mxu0 0.0
    %1929 = vmatpush1.msra.mxu0 0.0
    %1930 = vmatprep.subr.mxu0 0.0
    %1931 = vmatpush1.msra.mxu0 0.0
    %1932 = vmatprep.subr.mxu0 0.0
    %1933 = vmatpush1.msra.mxu0 0.0
    %1934 = vmatprep.subr.mxu0 0.0
    %1935 = vmatpush1.msra.mxu0 0.0
    %1936 = vmatprep.subr.mxu0 0.0
    %1937 = vmatpush1.msra.mxu0 0.0
    %1938 = vmatprep.subr.mxu0 0.0
    %1939 = vmatpush1.msra.mxu0 0.0
    %1940 = vmatprep.subr.mxu0 0.0
    %1941 = vmatpush1.msra.mxu0 %v66
    %1942 = vmatprep.subr.mxu0 0.0
    %1943 = vmatpush1.msra.mxu0 %v65
    %1944 = vmatprep.subr.mxu0 0.0
    %1945 = vmatpush2.msra.mxu0 0.0
    %1946 = vmatprep.subr.mxu0 0.0
    %1947 = vmatpush2.msra.mxu0 0.0
    %1948 = vmatprep.subr.mxu0 0.0
    %1949 = vmatpush2.msra.mxu0 0.0
    %1950 = vmatprep.subr.mxu0 0.0
    %1951 = vmatpush2.msra.mxu0 0.0
    %1952 = vmatprep.subr.mxu0 0.0
    %1953 = vmatpush2.msra.mxu0 0.0
    %1954 = vmatprep.subr.mxu0 0.0
    %1955 = vmatpush2.msra.mxu0 0.0
    %1956 = vmatprep.subr.mxu0 0.0
    %1957 = vmatpush2.msra.mxu0 0.0
    %1958 = vmatprep.subr.mxu0 0.0
    %1959 = vmatpush2.msra.mxu0 0.0
    %1960 = vmatprep.subr.mxu0 0.0
    %1961 = vmatpush2.msra.mxu0 0.0
    %1962 = vmatprep.subr.mxu0 0.0
    %1963 = vmatpush2.msra.mxu0 0.0
    %1964 = vmatprep.subr.mxu0 0.0
    %1965 = vmatpush2.msra.mxu0 0.0
    %1966 = vmatprep.subr.mxu0 0.0
    %1967 = vmatpush2.msra.mxu0 0.0
    %1968 = vmatprep.subr.mxu0 0.0
    %1969 = vmatpush2.msra.mxu0 0.0
    %1970 = vmatprep.subr.mxu0 0.0
    %1971 = vmatpush2.msra.mxu0 0.0
    %1972 = vmatprep.subr.mxu0 0.0
    %1973 = vmatpush2.msra.mxu0 0.0
    %1974 = vmatprep.subr.mxu0 0.0
    %1975 = vmatpush2.msra.mxu0 0.0
    %1976 = vmatprep.mubr.f32.mxu0 0.0
    %1977 = vmatmul.mubr.f32.gmra.mxu0 %v1910
    %v1978 = vpop.f32.mrf.mxu0
    %v1979 = vadd.f32 %v1906, %v1978
    %v1980 = vpop.f32.mrf.mxu0
    %1981 = vdwg.mxu0
    %v1982 = vadd.f32 %v1979, %v76
    %v1983 = vxor.u32 %v1982, 2147483648
    %v1984 = vmul.f32 %v1983, 1.442695
    %v1985 = vpow.pop %v1984
    %v1986 = vadd.f32 %v1985, 1.0
    %v1987 = vrcp.pop %v1986
    %v1988 = vmul.f32 1.0, %v1987
    %v1989 = vtanh.pop %v1982
    %v1990 = vmul.f32 %v1988, %v1568
    %1992 = vrot.lane.b32.xlu0 %v1989, 64
    %v1993 = vpop.permute.xlu0 %1992
    %v1995 = vmul.f32 %v1988, %v1993
    %1997 = vrot.lane.b32.xlu0 %v1995, 32
    %v1998 = vpop.permute.xlu0 %1997
    %v2000 = vadd.f32 %v1990, %v1998
    %v2001 = vtanh.pop %v2000
    %2003 = vrot.lane.b32.xlu0 %v2001, 64
    %v2004 = vpop.permute.xlu0 %2003
    %v2006 = vmul.f32 %v1988, %v2004
    %2007 = vmatprep.subr.mxu0 0.0
    %2008 = vmatpush1.msra.mxu0 0.0
    %2009 = vmatprep.subr.mxu0 0.0
    %2010 = vmatpush1.msra.mxu0 0.0
    %2011 = vmatprep.subr.mxu0 0.0
    %2012 = vmatpush1.msra.mxu0 0.0
    %2013 = vmatprep.subr.mxu0 0.0
    %2014 = vmatpush1.msra.mxu0 0.0
    %2015 = vmatprep.subr.mxu0 0.0
    %2016 = vmatpush1.msra.mxu0 0.0
    %2017 = vmatprep.subr.mxu0 0.0
    %2018 = vmatpush1.msra.mxu0 0.0
    %2019 = vmatprep.subr.mxu0 0.0
    %2020 = vmatpush1.msra.mxu0 0.0
    %2021 = vmatprep.subr.mxu0 0.0
    %2022 = vmatpush1.msra.mxu0 0.0
    %2023 = vmatprep.subr.mxu0 0.0
    %2024 = vmatpush1.msra.mxu0 0.0
    %2025 = vmatprep.subr.mxu0 0.0
    %2026 = vmatpush1.msra.mxu0 0.0
    %2027 = vmatprep.subr.mxu0 0.0
    %2028 = vmatpush1.msra.mxu0 0.0
    %2029 = vmatprep.subr.mxu0 0.0
    %2030 = vmatpush1.msra.mxu0 0.0
    %2031 = vmatprep.subr.mxu0 0.0
    %2032 = vmatpush1.msra.mxu0 %v85
    %2033 = vmatprep.subr.mxu0 0.0
    %2034 = vmatpush1.msra.mxu0 %v84
    %2035 = vmatprep.subr.mxu0 0.0
    %2036 = vmatpush1.msra.mxu0 %v83
    %2037 = vmatprep.subr.mxu0 0.0
    %2038 = vmatpush1.msra.mxu0 %v82
    %2039 = vmatprep.subr.mxu0 0.0
    %2040 = vmatpush2.msra.mxu0 0.0
    %2041 = vmatprep.subr.mxu0 0.0
    %2042 = vmatpush2.msra.mxu0 0.0
    %2043 = vmatprep.subr.mxu0 0.0
    %2044 = vmatpush2.msra.mxu0 0.0
    %2045 = vmatprep.subr.mxu0 0.0
    %2046 = vmatpush2.msra.mxu0 0.0
    %2047 = vmatprep.subr.mxu0 0.0
    %2048 = vmatpush2.msra.mxu0 0.0
    %2049 = vmatprep.subr.mxu0 0.0
    %2050 = vmatpush2.msra.mxu0 0.0
    %2051 = vmatprep.subr.mxu0 0.0
    %2052 = vmatpush2.msra.mxu0 0.0
    %2053 = vmatprep.subr.mxu0 0.0
    %2054 = vmatpush2.msra.mxu0 0.0
    %2055 = vmatprep.subr.mxu0 0.0
    %2056 = vmatpush2.msra.mxu0 0.0
    %2057 = vmatprep.subr.mxu0 0.0
    %2058 = vmatpush2.msra.mxu0 0.0
    %2059 = vmatprep.subr.mxu0 0.0
    %2060 = vmatpush2.msra.mxu0 0.0
    %2061 = vmatprep.subr.mxu0 0.0
    %2062 = vmatpush2.msra.mxu0 0.0
    %2063 = vmatprep.subr.mxu0 0.0
    %2064 = vmatpush2.msra.mxu0 0.0
    %2065 = vmatprep.subr.mxu0 0.0
    %2066 = vmatpush2.msra.mxu0 0.0
    %2067 = vmatprep.subr.mxu0 0.0
    %2068 = vmatpush2.msra.mxu0 0.0
    %2069 = vmatprep.subr.mxu0 0.0
    %2070 = vmatpush2.msra.mxu0 0.0
    %2071 = vmatprep.mubr.f32.mxu0 0.0
    %2072 = vmatmul.mubr.f32.gmra.mxu0 %v1748
    %v2073 = vpop.f32.mrf.mxu0
    %v2074 = vadd.f32 0.0, %v2073
    %v2075 = vpop.f32.mrf.mxu0
    %2076 = vdwg.mxu0
    %2078 = vrot.lane.b32.xlu0 %v2006, 32
    %v2079 = vpop.permute.xlu0 %2078
    %v2080 = vsel %vm105, %v2079, 0
    %2082 = vmatprep.subr.mxu0 0.0
    %2083 = vmatpush1.msra.mxu0 0.0
    %2084 = vmatprep.subr.mxu0 0.0
    %2085 = vmatpush1.msra.mxu0 0.0
    %2086 = vmatprep.subr.mxu0 0.0
    %2087 = vmatpush1.msra.mxu0 0.0
    %2088 = vmatprep.subr.mxu0 0.0
    %2089 = vmatpush1.msra.mxu0 0.0
    %2090 = vmatprep.subr.mxu0 0.0
    %2091 = vmatpush1.msra.mxu0 0.0
    %2092 = vmatprep.subr.mxu0 0.0
    %2093 = vmatpush1.msra.mxu0 0.0
    %2094 = vmatprep.subr.mxu0 0.0
    %2095 = vmatpush1.msra.mxu0 0.0
    %2096 = vmatprep.subr.mxu0 0.0
    %2097 = vmatpush1.msra.mxu0 0.0
    %2098 = vmatprep.subr.mxu0 0.0
    %2099 = vmatpush1.msra.mxu0 0.0
    %2100 = vmatprep.subr.mxu0 0.0
    %2101 = vmatpush1.msra.mxu0 0.0
    %2102 = vmatprep.subr.mxu0 0.0
    %2103 = vmatpush1.msra.mxu0 0.0
    %2104 = vmatprep.subr.mxu0 0.0
    %2105 = vmatpush1.msra.mxu0 0.0
    %2106 = vmatprep.subr.mxu0 0.0
    %2107 = vmatpush1.msra.mxu0 %v81
    %2108 = vmatprep.subr.mxu0 0.0
    %2109 = vmatpush1.msra.mxu0 %v80
    %2110 = vmatprep.subr.mxu0 0.0
    %2111 = vmatpush1.msra.mxu0 %v79
    %2112 = vmatprep.subr.mxu0 0.0
    %2113 = vmatpush1.msra.mxu0 %v78
    %2114 = vmatprep.subr.mxu0 0.0
    %2115 = vmatpush2.msra.mxu0 0.0
    %2116 = vmatprep.subr.mxu0 0.0
    %2117 = vmatpush2.msra.mxu0 0.0
    %2118 = vmatprep.subr.mxu0 0.0
    %2119 = vmatpush2.msra.mxu0 0.0
    %2120 = vmatprep.subr.mxu0 0.0
    %2121 = vmatpush2.msra.mxu0 0.0
    %2122 = vmatprep.subr.mxu0 0.0
    %2123 = vmatpush2.msra.mxu0 0.0
    %2124 = vmatprep.subr.mxu0 0.0
    %2125 = vmatpush2.msra.mxu0 0.0
    %2126 = vmatprep.subr.mxu0 0.0
    %2127 = vmatpush2.msra.mxu0 0.0
    %2128 = vmatprep.subr.mxu0 0.0
    %2129 = vmatpush2.msra.mxu0 0.0
    %2130 = vmatprep.subr.mxu0 0.0
    %2131 = vmatpush2.msra.mxu0 0.0
    %2132 = vmatprep.subr.mxu0 0.0
    %2133 = vmatpush2.msra.mxu0 0.0
    %2134 = vmatprep.subr.mxu0 0.0
    %2135 = vmatpush2.msra.mxu0 0.0
    %2136 = vmatprep.subr.mxu0 0.0
    %2137 = vmatpush2.msra.mxu0 0.0
    %2138 = vmatprep.subr.mxu0 0.0
    %2139 = vmatpush2.msra.mxu0 0.0
    %2140 = vmatprep.subr.mxu0 0.0
    %2141 = vmatpush2.msra.mxu0 0.0
    %2142 = vmatprep.subr.mxu0 0.0
    %2143 = vmatpush2.msra.mxu0 0.0
    %2144 = vmatprep.subr.mxu0 0.0
    %2145 = vmatpush2.msra.mxu0 0.0
    %2146 = vmatprep.mubr.f32.mxu0 0.0
    %2147 = vmatmul.mubr.f32.gmra.mxu0 %v2080
    %v2148 = vpop.f32.mrf.mxu0
    %v2149 = vadd.f32 %v2074, %v2148
    %v2150 = vpop.f32.mrf.mxu0
    %2151 = vdwg.mxu0
    %v2152 = vadd.f32 %v2149, %v91
    %v2153 = vxor.u32 %v2152, 2147483648
    %v2154 = vmul.f32 %v2153, 1.442695
    %v2155 = vpow.pop %v2154
    %v2156 = vadd.f32 %v2155, 1.0
    %v2157 = vrcp.pop %v2156
    %v2158 = vmul.f32 1.0, %v2157
    %v2159 = vtanh.pop %v2152
    %v2160 = vmul.f32 %v2158, %v1738
    %2162 = vrot.lane.b32.xlu0 %v2159, 64
    %v2163 = vpop.permute.xlu0 %2162
    %v2165 = vmul.f32 %v2158, %v2163
    %2167 = vrot.lane.b32.xlu0 %v2165, 32
    %v2168 = vpop.permute.xlu0 %2167
    %v2170 = vadd.f32 %v2160, %v2168
    %v2171 = vtanh.pop %v2170
    %2173 = vrot.lane.b32.xlu0 %v2171, 64
    %v2174 = vpop.permute.xlu0 %2173
    %v2176 = vmul.f32 %v2158, %v2174
    %2178 = vrot.lane.b32.xlu0 %v2176, 32
    %v2179 = vpop.permute.xlu0 %2178
    %v2180 = vsel %vm105, %v2179, 0
    %2182 = vmatprep.subr.mxu0 0.0
    %2183 = vmatpush1.msra.mxu0 0.0
    %2184 = vmatprep.subr.mxu0 0.0
    %2185 = vmatpush1.msra.mxu0 0.0
    %2186 = vmatprep.subr.mxu0 0.0
    %2187 = vmatpush1.msra.mxu0 0.0
    %2188 = vmatprep.subr.mxu0 0.0
    %2189 = vmatpush1.msra.mxu0 0.0
    %2190 = vmatprep.subr.mxu0 0.0
    %2191 = vmatpush1.msra.mxu0 0.0
    %2192 = vmatprep.subr.mxu0 0.0
    %2193 = vmatpush1.msra.mxu0 0.0
    %2194 = vmatprep.subr.mxu0 0.0
    %2195 = vmatpush1.msra.mxu0 0.0
    %2196 = vmatprep.subr.mxu0 0.0
    %2197 = vmatpush1.msra.mxu0 0.0
    %2198 = vmatprep.subr.mxu0 0.0
    %2199 = vmatpush1.msra.mxu0 0.0
    %2200 = vmatprep.subr.mxu0 0.0
    %2201 = vmatpush1.msra.mxu0 0.0
    %2202 = vmatprep.subr.mxu0 0.0
    %2203 = vmatpush1.msra.mxu0 0.0
    %2204 = vmatprep.subr.mxu0 0.0
    %2205 = vmatpush1.msra.mxu0 0.0
    %2206 = vmatprep.subr.mxu0 0.0
    %2207 = vmatpush1.msra.mxu0 %v96
    %2208 = vmatprep.subr.mxu0 0.0
    %2209 = vmatpush1.msra.mxu0 %v95
    %2210 = vmatprep.subr.mxu0 0.0
    %2211 = vmatpush1.msra.mxu0 %v94
    %2212 = vmatprep.subr.mxu0 0.0
    %2213 = vmatpush1.msra.mxu0 %v93
    %2214 = vmatprep.subr.mxu0 0.0
    %2215 = vmatpush2.msra.mxu0 0.0
    %2216 = vmatprep.subr.mxu0 0.0
    %2217 = vmatpush2.msra.mxu0 0.0
    %2218 = vmatprep.subr.mxu0 0.0
    %2219 = vmatpush2.msra.mxu0 0.0
    %2220 = vmatprep.subr.mxu0 0.0
    %2221 = vmatpush2.msra.mxu0 0.0
    %2222 = vmatprep.subr.mxu0 0.0
    %2223 = vmatpush2.msra.mxu0 0.0
    %2224 = vmatprep.subr.mxu0 0.0
    %2225 = vmatpush2.msra.mxu0 0.0
    %2226 = vmatprep.subr.mxu0 0.0
    %2227 = vmatpush2.msra.mxu0 0.0
    %2228 = vmatprep.subr.mxu0 0.0
    %2229 = vmatpush2.msra.mxu0 0.0
    %2230 = vmatprep.subr.mxu0 0.0
    %2231 = vmatpush2.msra.mxu0 0.0
    %2232 = vmatprep.subr.mxu0 0.0
    %2233 = vmatpush2.msra.mxu0 0.0
    %2234 = vmatprep.subr.mxu0 0.0
    %2235 = vmatpush2.msra.mxu0 0.0
    %2236 = vmatprep.subr.mxu0 0.0
    %2237 = vmatpush2.msra.mxu0 0.0
    %2238 = vmatprep.subr.mxu0 0.0
    %2239 = vmatpush2.msra.mxu0 0.0
    %2240 = vmatprep.subr.mxu0 0.0
    %2241 = vmatpush2.msra.mxu0 0.0
    %2242 = vmatprep.subr.mxu0 0.0
    %2243 = vmatpush2.msra.mxu0 0.0
    %2244 = vmatprep.subr.mxu0 0.0
    %2245 = vmatpush2.msra.mxu0 0.0
    %2246 = vmatprep.mubr.f32.mxu0 0.0
    %2247 = vmatmul.mubr.f32.gmra.mxu0 %v2180
    %v2248 = vpop.f32.mrf.mxu0
    %v2249 = vadd.f32 %v102, %v2248
    %v2250 = vpop.f32.mrf.mxu0
    %2251 = vdwg.mxu0
    %v2253 = vrot.slane %v2249, 4
    %v2255 = vsub.f32 %v2249, %v2253
    %v2256 = vand.u32 2147483647, %v2255
    %v2257 = vsel %vm528, %v2256, 0.0
    %2258 = vadd.xlane.f32.xlu0 %v2257
    %v2259 = vpop.xlane.xlu0 %2258
    %v2260 = vrot.slane %v2259, 4
    %v2261 = vadd.f32 %v2259, %v2260
    %v2262 = vrot.slane %v2261, 2
    %v2263 = vadd.f32 %v2261, %v2262
    %v2264 = vrot.slane %v2263, 1
    %v2265 = vadd.f32 %v2263, %v2264
    %s2266 = vtos %v2265
    %v2267 = vstv %s2266
    %v2268 = vadd.f32 %v1836, %v2267
    %s2269 = scalar_lea.vmem %s0, 40
    %v2270 = vld [vmem:[%s2269] sm:$0xff]
    %2271 = vmatprep.subr.mxu0 0.0
    %2272 = vmatpush1.msra.mxu0 0.0
    %2273 = vmatprep.subr.mxu0 0.0
    %2274 = vmatpush1.msra.mxu0 0.0
    %2275 = vmatprep.subr.mxu0 0.0
    %2276 = vmatpush1.msra.mxu0 0.0
    %2277 = vmatprep.subr.mxu0 0.0
    %2278 = vmatpush1.msra.mxu0 0.0
    %2279 = vmatprep.subr.mxu0 0.0
    %2280 = vmatpush1.msra.mxu0 0.0
    %2281 = vmatprep.subr.mxu0 0.0
    %2282 = vmatpush1.msra.mxu0 0.0
    %2283 = vmatprep.subr.mxu0 0.0
    %2284 = vmatpush1.msra.mxu0 0.0
    %2285 = vmatprep.subr.mxu0 0.0
    %2286 = vmatpush1.msra.mxu0 0.0
    %2287 = vmatprep.subr.mxu0 0.0
    %2288 = vmatpush1.msra.mxu0 0.0
    %2289 = vmatprep.subr.mxu0 0.0
    %2290 = vmatpush1.msra.mxu0 0.0
    %2291 = vmatprep.subr.mxu0 0.0
    %2292 = vmatpush1.msra.mxu0 0.0
    %2293 = vmatprep.subr.mxu0 0.0
    %2294 = vmatpush1.msra.mxu0 0.0
    %2295 = vmatprep.subr.mxu0 0.0
    %2296 = vmatpush1.msra.mxu0 %v70
    %2297 = vmatprep.subr.mxu0 0.0
    %2298 = vmatpush1.msra.mxu0 %v69
    %2299 = vmatprep.subr.mxu0 0.0
    %2300 = vmatpush1.msra.mxu0 %v68
    %2301 = vmatprep.subr.mxu0 0.0
    %2302 = vmatpush1.msra.mxu0 %v67
    %2303 = vmatprep.subr.mxu0 0.0
    %2304 = vmatpush2.msra.mxu0 0.0
    %2305 = vmatprep.subr.mxu0 0.0
    %2306 = vmatpush2.msra.mxu0 0.0
    %2307 = vmatprep.subr.mxu0 0.0
    %2308 = vmatpush2.msra.mxu0 0.0
    %2309 = vmatprep.subr.mxu0 0.0
    %2310 = vmatpush2.msra.mxu0 0.0
    %2311 = vmatprep.subr.mxu0 0.0
    %2312 = vmatpush2.msra.mxu0 0.0
    %2313 = vmatprep.subr.mxu0 0.0
    %2314 = vmatpush2.msra.mxu0 0.0
    %2315 = vmatprep.subr.mxu0 0.0
    %2316 = vmatpush2.msra.mxu0 0.0
    %2317 = vmatprep.subr.mxu0 0.0
    %2318 = vmatpush2.msra.mxu0 0.0
    %2319 = vmatprep.subr.mxu0 0.0
    %2320 = vmatpush2.msra.mxu0 0.0
    %2321 = vmatprep.subr.mxu0 0.0
    %2322 = vmatpush2.msra.mxu0 0.0
    %2323 = vmatprep.subr.mxu0 0.0
    %2324 = vmatpush2.msra.mxu0 0.0
    %2325 = vmatprep.subr.mxu0 0.0
    %2326 = vmatpush2.msra.mxu0 0.0
    %2327 = vmatprep.subr.mxu0 0.0
    %2328 = vmatpush2.msra.mxu0 0.0
    %2329 = vmatprep.subr.mxu0 0.0
    %2330 = vmatpush2.msra.mxu0 0.0
    %2331 = vmatprep.subr.mxu0 0.0
    %2332 = vmatpush2.msra.mxu0 0.0
    %2333 = vmatprep.subr.mxu0 0.0
    %2334 = vmatpush2.msra.mxu0 0.0
    %2335 = vmatprep.mubr.f32.mxu0 0.0
    %2336 = vmatmul.mubr.f32.gmra.mxu0 %v2080
    %v2337 = vpop.f32.mrf.mxu0
    %v2338 = vadd.f32 0.0, %v2337
    %v2339 = vpop.f32.mrf.mxu0
    %2340 = vdwg.mxu0
    %v2342 = vsel %vm179, %v2270, 0
    %2344 = vmatprep.subr.mxu0 0.0
    %2345 = vmatpush1.msra.mxu0 0.0
    %2346 = vmatprep.subr.mxu0 0.0
    %2347 = vmatpush1.msra.mxu0 0.0
    %2348 = vmatprep.subr.mxu0 0.0
    %2349 = vmatpush1.msra.mxu0 0.0
    %2350 = vmatprep.subr.mxu0 0.0
    %2351 = vmatpush1.msra.mxu0 0.0
    %2352 = vmatprep.subr.mxu0 0.0
    %2353 = vmatpush1.msra.mxu0 0.0
    %2354 = vmatprep.subr.mxu0 0.0
    %2355 = vmatpush1.msra.mxu0 0.0
    %2356 = vmatprep.subr.mxu0 0.0
    %2357 = vmatpush1.msra.mxu0 0.0
    %2358 = vmatprep.subr.mxu0 0.0
    %2359 = vmatpush1.msra.mxu0 0.0
    %2360 = vmatprep.subr.mxu0 0.0
    %2361 = vmatpush1.msra.mxu0 0.0
    %2362 = vmatprep.subr.mxu0 0.0
    %2363 = vmatpush1.msra.mxu0 0.0
    %2364 = vmatprep.subr.mxu0 0.0
    %2365 = vmatpush1.msra.mxu0 0.0
    %2366 = vmatprep.subr.mxu0 0.0
    %2367 = vmatpush1.msra.mxu0 0.0
    %2368 = vmatprep.subr.mxu0 0.0
    %2369 = vmatpush1.msra.mxu0 0.0
    %2370 = vmatprep.subr.mxu0 0.0
    %2371 = vmatpush1.msra.mxu0 0.0
    %2372 = vmatprep.subr.mxu0 0.0
    %2373 = vmatpush1.msra.mxu0 %v66
    %2374 = vmatprep.subr.mxu0 0.0
    %2375 = vmatpush1.msra.mxu0 %v65
    %2376 = vmatprep.subr.mxu0 0.0
    %2377 = vmatpush2.msra.mxu0 0.0
    %2378 = vmatprep.subr.mxu0 0.0
    %2379 = vmatpush2.msra.mxu0 0.0
    %2380 = vmatprep.subr.mxu0 0.0
    %2381 = vmatpush2.msra.mxu0 0.0
    %2382 = vmatprep.subr.mxu0 0.0
    %2383 = vmatpush2.msra.mxu0 0.0
    %2384 = vmatprep.subr.mxu0 0.0
    %2385 = vmatpush2.msra.mxu0 0.0
    %2386 = vmatprep.subr.mxu0 0.0
    %2387 = vmatpush2.msra.mxu0 0.0
    %2388 = vmatprep.subr.mxu0 0.0
    %2389 = vmatpush2.msra.mxu0 0.0
    %2390 = vmatprep.subr.mxu0 0.0
    %2391 = vmatpush2.msra.mxu0 0.0
    %2392 = vmatprep.subr.mxu0 0.0
    %2393 = vmatpush2.msra.mxu0 0.0
    %2394 = vmatprep.subr.mxu0 0.0
    %2395 = vmatpush2.msra.mxu0 0.0
    %2396 = vmatprep.subr.mxu0 0.0
    %2397 = vmatpush2.msra.mxu0 0.0
    %2398 = vmatprep.subr.mxu0 0.0
    %2399 = vmatpush2.msra.mxu0 0.0
    %2400 = vmatprep.subr.mxu0 0.0
    %2401 = vmatpush2.msra.mxu0 0.0
    %2402 = vmatprep.subr.mxu0 0.0
    %2403 = vmatpush2.msra.mxu0 0.0
    %2404 = vmatprep.subr.mxu0 0.0
    %2405 = vmatpush2.msra.mxu0 0.0
    %2406 = vmatprep.subr.mxu0 0.0
    %2407 = vmatpush2.msra.mxu0 0.0
    %2408 = vmatprep.mubr.f32.mxu0 0.0
    %2409 = vmatmul.mubr.f32.gmra.mxu0 %v2342
    %v2410 = vpop.f32.mrf.mxu0
    %v2411 = vadd.f32 %v2338, %v2410
    %v2412 = vpop.f32.mrf.mxu0
    %2413 = vdwg.mxu0
    %v2414 = vadd.f32 %v2411, %v76
    %v2415 = vxor.u32 %v2414, 2147483648
    %v2416 = vmul.f32 %v2415, 1.442695
    %v2417 = vpow.pop %v2416
    %v2418 = vadd.f32 %v2417, 1.0
    %v2419 = vrcp.pop %v2418
    %v2420 = vmul.f32 1.0, %v2419
    %v2421 = vtanh.pop %v2414
    %v2422 = vmul.f32 %v2420, %v2000
    %2424 = vrot.lane.b32.xlu0 %v2421, 64
    %v2425 = vpop.permute.xlu0 %2424
    %v2427 = vmul.f32 %v2420, %v2425
    %2429 = vrot.lane.b32.xlu0 %v2427, 32
    %v2430 = vpop.permute.xlu0 %2429
    %v2432 = vadd.f32 %v2422, %v2430
    %v2433 = vtanh.pop %v2432
    %2435 = vrot.lane.b32.xlu0 %v2433, 64
    %v2436 = vpop.permute.xlu0 %2435
    %v2438 = vmul.f32 %v2420, %v2436
    %2439 = vmatprep.subr.mxu0 0.0
    %2440 = vmatpush1.msra.mxu0 0.0
    %2441 = vmatprep.subr.mxu0 0.0
    %2442 = vmatpush1.msra.mxu0 0.0
    %2443 = vmatprep.subr.mxu0 0.0
    %2444 = vmatpush1.msra.mxu0 0.0
    %2445 = vmatprep.subr.mxu0 0.0
    %2446 = vmatpush1.msra.mxu0 0.0
    %2447 = vmatprep.subr.mxu0 0.0
    %2448 = vmatpush1.msra.mxu0 0.0
    %2449 = vmatprep.subr.mxu0 0.0
    %2450 = vmatpush1.msra.mxu0 0.0
    %2451 = vmatprep.subr.mxu0 0.0
    %2452 = vmatpush1.msra.mxu0 0.0
    %2453 = vmatprep.subr.mxu0 0.0
    %2454 = vmatpush1.msra.mxu0 0.0
    %2455 = vmatprep.subr.mxu0 0.0
    %2456 = vmatpush1.msra.mxu0 0.0
    %2457 = vmatprep.subr.mxu0 0.0
    %2458 = vmatpush1.msra.mxu0 0.0
    %2459 = vmatprep.subr.mxu0 0.0
    %2460 = vmatpush1.msra.mxu0 0.0
    %2461 = vmatprep.subr.mxu0 0.0
    %2462 = vmatpush1.msra.mxu0 0.0
    %2463 = vmatprep.subr.mxu0 0.0
    %2464 = vmatpush1.msra.mxu0 %v85
    %2465 = vmatprep.subr.mxu0 0.0
    %2466 = vmatpush1.msra.mxu0 %v84
    %2467 = vmatprep.subr.mxu0 0.0
    %2468 = vmatpush1.msra.mxu0 %v83
    %2469 = vmatprep.subr.mxu0 0.0
    %2470 = vmatpush1.msra.mxu0 %v82
    %2471 = vmatprep.subr.mxu0 0.0
    %2472 = vmatpush2.msra.mxu0 0.0
    %2473 = vmatprep.subr.mxu0 0.0
    %2474 = vmatpush2.msra.mxu0 0.0
    %2475 = vmatprep.subr.mxu0 0.0
    %2476 = vmatpush2.msra.mxu0 0.0
    %2477 = vmatprep.subr.mxu0 0.0
    %2478 = vmatpush2.msra.mxu0 0.0
    %2479 = vmatprep.subr.mxu0 0.0
    %2480 = vmatpush2.msra.mxu0 0.0
    %2481 = vmatprep.subr.mxu0 0.0
    %2482 = vmatpush2.msra.mxu0 0.0
    %2483 = vmatprep.subr.mxu0 0.0
    %2484 = vmatpush2.msra.mxu0 0.0
    %2485 = vmatprep.subr.mxu0 0.0
    %2486 = vmatpush2.msra.mxu0 0.0
    %2487 = vmatprep.subr.mxu0 0.0
    %2488 = vmatpush2.msra.mxu0 0.0
    %2489 = vmatprep.subr.mxu0 0.0
    %2490 = vmatpush2.msra.mxu0 0.0
    %2491 = vmatprep.subr.mxu0 0.0
    %2492 = vmatpush2.msra.mxu0 0.0
    %2493 = vmatprep.subr.mxu0 0.0
    %2494 = vmatpush2.msra.mxu0 0.0
    %2495 = vmatprep.subr.mxu0 0.0
    %2496 = vmatpush2.msra.mxu0 0.0
    %2497 = vmatprep.subr.mxu0 0.0
    %2498 = vmatpush2.msra.mxu0 0.0
    %2499 = vmatprep.subr.mxu0 0.0
    %2500 = vmatpush2.msra.mxu0 0.0
    %2501 = vmatprep.subr.mxu0 0.0
    %2502 = vmatpush2.msra.mxu0 0.0
    %2503 = vmatprep.mubr.f32.mxu0 0.0
    %2504 = vmatmul.mubr.f32.gmra.mxu0 %v2180
    %v2505 = vpop.f32.mrf.mxu0
    %v2506 = vadd.f32 0.0, %v2505
    %v2507 = vpop.f32.mrf.mxu0
    %2508 = vdwg.mxu0
    %2510 = vrot.lane.b32.xlu0 %v2438, 32
    %v2511 = vpop.permute.xlu0 %2510
    %v2512 = vsel %vm105, %v2511, 0
    %2514 = vmatprep.subr.mxu0 0.0
    %2515 = vmatpush1.msra.mxu0 0.0
    %2516 = vmatprep.subr.mxu0 0.0
    %2517 = vmatpush1.msra.mxu0 0.0
    %2518 = vmatprep.subr.mxu0 0.0
    %2519 = vmatpush1.msra.mxu0 0.0
    %2520 = vmatprep.subr.mxu0 0.0
    %2521 = vmatpush1.msra.mxu0 0.0
    %2522 = vmatprep.subr.mxu0 0.0
    %2523 = vmatpush1.msra.mxu0 0.0
    %2524 = vmatprep.subr.mxu0 0.0
    %2525 = vmatpush1.msra.mxu0 0.0
    %2526 = vmatprep.subr.mxu0 0.0
    %2527 = vmatpush1.msra.mxu0 0.0
    %2528 = vmatprep.subr.mxu0 0.0
    %2529 = vmatpush1.msra.mxu0 0.0
    %2530 = vmatprep.subr.mxu0 0.0
    %2531 = vmatpush1.msra.mxu0 0.0
    %2532 = vmatprep.subr.mxu0 0.0
    %2533 = vmatpush1.msra.mxu0 0.0
    %2534 = vmatprep.subr.mxu0 0.0
    %2535 = vmatpush1.msra.mxu0 0.0
    %2536 = vmatprep.subr.mxu0 0.0
    %2537 = vmatpush1.msra.mxu0 0.0
    %2538 = vmatprep.subr.mxu0 0.0
    %2539 = vmatpush1.msra.mxu0 %v81
    %2540 = vmatprep.subr.mxu0 0.0
    %2541 = vmatpush1.msra.mxu0 %v80
    %2542 = vmatprep.subr.mxu0 0.0
    %2543 = vmatpush1.msra.mxu0 %v79
    %2544 = vmatprep.subr.mxu0 0.0
    %2545 = vmatpush1.msra.mxu0 %v78
    %2546 = vmatprep.subr.mxu0 0.0
    %2547 = vmatpush2.msra.mxu0 0.0
    %2548 = vmatprep.subr.mxu0 0.0
    %2549 = vmatpush2.msra.mxu0 0.0
    %2550 = vmatprep.subr.mxu0 0.0
    %2551 = vmatpush2.msra.mxu0 0.0
    %2552 = vmatprep.subr.mxu0 0.0
    %2553 = vmatpush2.msra.mxu0 0.0
    %2554 = vmatprep.subr.mxu0 0.0
    %2555 = vmatpush2.msra.mxu0 0.0
    %2556 = vmatprep.subr.mxu0 0.0
    %2557 = vmatpush2.msra.mxu0 0.0
    %2558 = vmatprep.subr.mxu0 0.0
    %2559 = vmatpush2.msra.mxu0 0.0
    %2560 = vmatprep.subr.mxu0 0.0
    %2561 = vmatpush2.msra.mxu0 0.0
    %2562 = vmatprep.subr.mxu0 0.0
    %2563 = vmatpush2.msra.mxu0 0.0
    %2564 = vmatprep.subr.mxu0 0.0
    %2565 = vmatpush2.msra.mxu0 0.0
    %2566 = vmatprep.subr.mxu0 0.0
    %2567 = vmatpush2.msra.mxu0 0.0
    %2568 = vmatprep.subr.mxu0 0.0
    %2569 = vmatpush2.msra.mxu0 0.0
    %2570 = vmatprep.subr.mxu0 0.0
    %2571 = vmatpush2.msra.mxu0 0.0
    %2572 = vmatprep.subr.mxu0 0.0
    %2573 = vmatpush2.msra.mxu0 0.0
    %2574 = vmatprep.subr.mxu0 0.0
    %2575 = vmatpush2.msra.mxu0 0.0
    %2576 = vmatprep.subr.mxu0 0.0
    %2577 = vmatpush2.msra.mxu0 0.0
    %2578 = vmatprep.mubr.f32.mxu0 0.0
    %2579 = vmatmul.mubr.f32.gmra.mxu0 %v2512
    %v2580 = vpop.f32.mrf.mxu0
    %v2581 = vadd.f32 %v2506, %v2580
    %v2582 = vpop.f32.mrf.mxu0
    %2583 = vdwg.mxu0
    %v2584 = vadd.f32 %v2581, %v91
    %v2585 = vxor.u32 %v2584, 2147483648
    %v2586 = vmul.f32 %v2585, 1.442695
    %v2587 = vpow.pop %v2586
    %v2588 = vadd.f32 %v2587, 1.0
    %v2589 = vrcp.pop %v2588
    %v2590 = vmul.f32 1.0, %v2589
    %v2591 = vtanh.pop %v2584
    %v2592 = vmul.f32 %v2590, %v2170
    %2594 = vrot.lane.b32.xlu0 %v2591, 64
    %v2595 = vpop.permute.xlu0 %2594
    %v2597 = vmul.f32 %v2590, %v2595
    %2599 = vrot.lane.b32.xlu0 %v2597, 32
    %v2600 = vpop.permute.xlu0 %2599
    %v2602 = vadd.f32 %v2592, %v2600
    %v2603 = vtanh.pop %v2602
    %2605 = vrot.lane.b32.xlu0 %v2603, 64
    %v2606 = vpop.permute.xlu0 %2605
    %v2608 = vmul.f32 %v2590, %v2606
    %2610 = vrot.lane.b32.xlu0 %v2608, 32
    %v2611 = vpop.permute.xlu0 %2610
    %v2612 = vsel %vm105, %v2611, 0
    %2614 = vmatprep.subr.mxu0 0.0
    %2615 = vmatpush1.msra.mxu0 0.0
    %2616 = vmatprep.subr.mxu0 0.0
    %2617 = vmatpush1.msra.mxu0 0.0
    %2618 = vmatprep.subr.mxu0 0.0
    %2619 = vmatpush1.msra.mxu0 0.0
    %2620 = vmatprep.subr.mxu0 0.0
    %2621 = vmatpush1.msra.mxu0 0.0
    %2622 = vmatprep.subr.mxu0 0.0
    %2623 = vmatpush1.msra.mxu0 0.0
    %2624 = vmatprep.subr.mxu0 0.0
    %2625 = vmatpush1.msra.mxu0 0.0
    %2626 = vmatprep.subr.mxu0 0.0
    %2627 = vmatpush1.msra.mxu0 0.0
    %2628 = vmatprep.subr.mxu0 0.0
    %2629 = vmatpush1.msra.mxu0 0.0
    %2630 = vmatprep.subr.mxu0 0.0
    %2631 = vmatpush1.msra.mxu0 0.0
    %2632 = vmatprep.subr.mxu0 0.0
    %2633 = vmatpush1.msra.mxu0 0.0
    %2634 = vmatprep.subr.mxu0 0.0
    %2635 = vmatpush1.msra.mxu0 0.0
    %2636 = vmatprep.subr.mxu0 0.0
    %2637 = vmatpush1.msra.mxu0 0.0
    %2638 = vmatprep.subr.mxu0 0.0
    %2639 = vmatpush1.msra.mxu0 %v96
    %2640 = vmatprep.subr.mxu0 0.0
    %2641 = vmatpush1.msra.mxu0 %v95
    %2642 = vmatprep.subr.mxu0 0.0
    %2643 = vmatpush1.msra.mxu0 %v94
    %2644 = vmatprep.subr.mxu0 0.0
    %2645 = vmatpush1.msra.mxu0 %v93
    %2646 = vmatprep.subr.mxu0 0.0
    %2647 = vmatpush2.msra.mxu0 0.0
    %2648 = vmatprep.subr.mxu0 0.0
    %2649 = vmatpush2.msra.mxu0 0.0
    %2650 = vmatprep.subr.mxu0 0.0
    %2651 = vmatpush2.msra.mxu0 0.0
    %2652 = vmatprep.subr.mxu0 0.0
    %2653 = vmatpush2.msra.mxu0 0.0
    %2654 = vmatprep.subr.mxu0 0.0
    %2655 = vmatpush2.msra.mxu0 0.0
    %2656 = vmatprep.subr.mxu0 0.0
    %2657 = vmatpush2.msra.mxu0 0.0
    %2658 = vmatprep.subr.mxu0 0.0
    %2659 = vmatpush2.msra.mxu0 0.0
    %2660 = vmatprep.subr.mxu0 0.0
    %2661 = vmatpush2.msra.mxu0 0.0
    %2662 = vmatprep.subr.mxu0 0.0
    %2663 = vmatpush2.msra.mxu0 0.0
    %2664 = vmatprep.subr.mxu0 0.0
    %2665 = vmatpush2.msra.mxu0 0.0
    %2666 = vmatprep.subr.mxu0 0.0
    %2667 = vmatpush2.msra.mxu0 0.0
    %2668 = vmatprep.subr.mxu0 0.0
    %2669 = vmatpush2.msra.mxu0 0.0
    %2670 = vmatprep.subr.mxu0 0.0
    %2671 = vmatpush2.msra.mxu0 0.0
    %2672 = vmatprep.subr.mxu0 0.0
    %2673 = vmatpush2.msra.mxu0 0.0
    %2674 = vmatprep.subr.mxu0 0.0
    %2675 = vmatpush2.msra.mxu0 0.0
    %2676 = vmatprep.subr.mxu0 0.0
    %2677 = vmatpush2.msra.mxu0 0.0
    %2678 = vmatprep.mubr.f32.mxu0 0.0
    %2679 = vmatmul.mubr.f32.gmra.mxu0 %v2612
    %v2680 = vpop.f32.mrf.mxu0
    %v2681 = vadd.f32 %v102, %v2680
    %v2682 = vpop.f32.mrf.mxu0
    %2683 = vdwg.mxu0
    %v2685 = vrot.slane %v2681, 4
    %v2687 = vsub.f32 %v2681, %v2685
    %v2688 = vand.u32 2147483647, %v2687
    %v2689 = vsel %vm528, %v2688, 0.0
    %2690 = vadd.xlane.f32.xlu0 %v2689
    %v2691 = vpop.xlane.xlu0 %2690
    %v2692 = vrot.slane %v2691, 4
    %v2693 = vadd.f32 %v2691, %v2692
    %v2694 = vrot.slane %v2693, 2
    %v2695 = vadd.f32 %v2693, %v2694
    %v2696 = vrot.slane %v2695, 1
    %v2697 = vadd.f32 %v2695, %v2696
    %s2698 = vtos %v2697
    %v2699 = vstv %s2698
    %v2700 = vadd.f32 %v2268, %v2699
    %s2701 = scalar_lea.vmem %s0, 48
    %v2702 = vld [vmem:[%s2701] sm:$0xff]
    %2703 = vmatprep.subr.mxu0 0.0
    %2704 = vmatpush1.msra.mxu0 0.0
    %2705 = vmatprep.subr.mxu0 0.0
    %2706 = vmatpush1.msra.mxu0 0.0
    %2707 = vmatprep.subr.mxu0 0.0
    %2708 = vmatpush1.msra.mxu0 0.0
    %2709 = vmatprep.subr.mxu0 0.0
    %2710 = vmatpush1.msra.mxu0 0.0
    %2711 = vmatprep.subr.mxu0 0.0
    %2712 = vmatpush1.msra.mxu0 0.0
    %2713 = vmatprep.subr.mxu0 0.0
    %2714 = vmatpush1.msra.mxu0 0.0
    %2715 = vmatprep.subr.mxu0 0.0
    %2716 = vmatpush1.msra.mxu0 0.0
    %2717 = vmatprep.subr.mxu0 0.0
    %2718 = vmatpush1.msra.mxu0 0.0
    %2719 = vmatprep.subr.mxu0 0.0
    %2720 = vmatpush1.msra.mxu0 0.0
    %2721 = vmatprep.subr.mxu0 0.0
    %2722 = vmatpush1.msra.mxu0 0.0
    %2723 = vmatprep.subr.mxu0 0.0
    %2724 = vmatpush1.msra.mxu0 0.0
    %2725 = vmatprep.subr.mxu0 0.0
    %2726 = vmatpush1.msra.mxu0 0.0
    %2727 = vmatprep.subr.mxu0 0.0
    %2728 = vmatpush1.msra.mxu0 %v70
    %2729 = vmatprep.subr.mxu0 0.0
    %2730 = vmatpush1.msra.mxu0 %v69
    %2731 = vmatprep.subr.mxu0 0.0
    %2732 = vmatpush1.msra.mxu0 %v68
    %2733 = vmatprep.subr.mxu0 0.0
    %2734 = vmatpush1.msra.mxu0 %v67
    %2735 = vmatprep.subr.mxu0 0.0
    %2736 = vmatpush2.msra.mxu0 0.0
    %2737 = vmatprep.subr.mxu0 0.0
    %2738 = vmatpush2.msra.mxu0 0.0
    %2739 = vmatprep.subr.mxu0 0.0
    %2740 = vmatpush2.msra.mxu0 0.0
    %2741 = vmatprep.subr.mxu0 0.0
    %2742 = vmatpush2.msra.mxu0 0.0
    %2743 = vmatprep.subr.mxu0 0.0
    %2744 = vmatpush2.msra.mxu0 0.0
    %2745 = vmatprep.subr.mxu0 0.0
    %2746 = vmatpush2.msra.mxu0 0.0
    %2747 = vmatprep.subr.mxu0 0.0
    %2748 = vmatpush2.msra.mxu0 0.0
    %2749 = vmatprep.subr.mxu0 0.0
    %2750 = vmatpush2.msra.mxu0 0.0
    %2751 = vmatprep.subr.mxu0 0.0
    %2752 = vmatpush2.msra.mxu0 0.0
    %2753 = vmatprep.subr.mxu0 0.0
    %2754 = vmatpush2.msra.mxu0 0.0
    %2755 = vmatprep.subr.mxu0 0.0
    %2756 = vmatpush2.msra.mxu0 0.0
    %2757 = vmatprep.subr.mxu0 0.0
    %2758 = vmatpush2.msra.mxu0 0.0
    %2759 = vmatprep.subr.mxu0 0.0
    %2760 = vmatpush2.msra.mxu0 0.0
    %2761 = vmatprep.subr.mxu0 0.0
    %2762 = vmatpush2.msra.mxu0 0.0
    %2763 = vmatprep.subr.mxu0 0.0
    %2764 = vmatpush2.msra.mxu0 0.0
    %2765 = vmatprep.subr.mxu0 0.0
    %2766 = vmatpush2.msra.mxu0 0.0
    %2767 = vmatprep.mubr.f32.mxu0 0.0
    %2768 = vmatmul.mubr.f32.gmra.mxu0 %v2512
    %v2769 = vpop.f32.mrf.mxu0
    %v2770 = vadd.f32 0.0, %v2769
    %v2771 = vpop.f32.mrf.mxu0
    %2772 = vdwg.mxu0
    %v2774 = vsel %vm179, %v2702, 0
    %2776 = vmatprep.subr.mxu0 0.0
    %2777 = vmatpush1.msra.mxu0 0.0
    %2778 = vmatprep.subr.mxu0 0.0
    %2779 = vmatpush1.msra.mxu0 0.0
    %2780 = vmatprep.subr.mxu0 0.0
    %2781 = vmatpush1.msra.mxu0 0.0
    %2782 = vmatprep.subr.mxu0 0.0
    %2783 = vmatpush1.msra.mxu0 0.0
    %2784 = vmatprep.subr.mxu0 0.0
    %2785 = vmatpush1.msra.mxu0 0.0
    %2786 = vmatprep.subr.mxu0 0.0
    %2787 = vmatpush1.msra.mxu0 0.0
    %2788 = vmatprep.subr.mxu0 0.0
    %2789 = vmatpush1.msra.mxu0 0.0
    %2790 = vmatprep.subr.mxu0 0.0
    %2791 = vmatpush1.msra.mxu0 0.0
    %2792 = vmatprep.subr.mxu0 0.0
    %2793 = vmatpush1.msra.mxu0 0.0
    %2794 = vmatprep.subr.mxu0 0.0
    %2795 = vmatpush1.msra.mxu0 0.0
    %2796 = vmatprep.subr.mxu0 0.0
    %2797 = vmatpush1.msra.mxu0 0.0
    %2798 = vmatprep.subr.mxu0 0.0
    %2799 = vmatpush1.msra.mxu0 0.0
    %2800 = vmatprep.subr.mxu0 0.0
    %2801 = vmatpush1.msra.mxu0 0.0
    %2802 = vmatprep.subr.mxu0 0.0
    %2803 = vmatpush1.msra.mxu0 0.0
    %2804 = vmatprep.subr.mxu0 0.0
    %2805 = vmatpush1.msra.mxu0 %v66
    %2806 = vmatprep.subr.mxu0 0.0
    %2807 = vmatpush1.msra.mxu0 %v65
    %2808 = vmatprep.subr.mxu0 0.0
    %2809 = vmatpush2.msra.mxu0 0.0
    %2810 = vmatprep.subr.mxu0 0.0
    %2811 = vmatpush2.msra.mxu0 0.0
    %2812 = vmatprep.subr.mxu0 0.0
    %2813 = vmatpush2.msra.mxu0 0.0
    %2814 = vmatprep.subr.mxu0 0.0
    %2815 = vmatpush2.msra.mxu0 0.0
    %2816 = vmatprep.subr.mxu0 0.0
    %2817 = vmatpush2.msra.mxu0 0.0
    %2818 = vmatprep.subr.mxu0 0.0
    %2819 = vmatpush2.msra.mxu0 0.0
    %2820 = vmatprep.subr.mxu0 0.0
    %2821 = vmatpush2.msra.mxu0 0.0
    %2822 = vmatprep.subr.mxu0 0.0
    %2823 = vmatpush2.msra.mxu0 0.0
    %2824 = vmatprep.subr.mxu0 0.0
    %2825 = vmatpush2.msra.mxu0 0.0
    %2826 = vmatprep.subr.mxu0 0.0
    %2827 = vmatpush2.msra.mxu0 0.0
    %2828 = vmatprep.subr.mxu0 0.0
    %2829 = vmatpush2.msra.mxu0 0.0
    %2830 = vmatprep.subr.mxu0 0.0
    %2831 = vmatpush2.msra.mxu0 0.0
    %2832 = vmatprep.subr.mxu0 0.0
    %2833 = vmatpush2.msra.mxu0 0.0
    %2834 = vmatprep.subr.mxu0 0.0
    %2835 = vmatpush2.msra.mxu0 0.0
    %2836 = vmatprep.subr.mxu0 0.0
    %2837 = vmatpush2.msra.mxu0 0.0
    %2838 = vmatprep.subr.mxu0 0.0
    %2839 = vmatpush2.msra.mxu0 0.0
    %2840 = vmatprep.mubr.f32.mxu0 0.0
    %2841 = vmatmul.mubr.f32.gmra.mxu0 %v2774
    %v2842 = vpop.f32.mrf.mxu0
    %v2843 = vadd.f32 %v2770, %v2842
    %v2844 = vpop.f32.mrf.mxu0
    %2845 = vdwg.mxu0
    %v2846 = vadd.f32 %v2843, %v76
    %v2847 = vxor.u32 %v2846, 2147483648
    %v2848 = vmul.f32 %v2847, 1.442695
    %v2849 = vpow.pop %v2848
    %v2850 = vadd.f32 %v2849, 1.0
    %v2851 = vrcp.pop %v2850
    %v2852 = vmul.f32 1.0, %v2851
    %v2853 = vtanh.pop %v2846
    %v2854 = vmul.f32 %v2852, %v2432
    %2856 = vrot.lane.b32.xlu0 %v2853, 64
    %v2857 = vpop.permute.xlu0 %2856
    %v2859 = vmul.f32 %v2852, %v2857
    %2861 = vrot.lane.b32.xlu0 %v2859, 32
    %v2862 = vpop.permute.xlu0 %2861
    %v2864 = vadd.f32 %v2854, %v2862
    %v2865 = vtanh.pop %v2864
    %2867 = vrot.lane.b32.xlu0 %v2865, 64
    %v2868 = vpop.permute.xlu0 %2867
    %v2870 = vmul.f32 %v2852, %v2868
    %2871 = vmatprep.subr.mxu0 0.0
    %2872 = vmatpush1.msra.mxu0 0.0
    %2873 = vmatprep.subr.mxu0 0.0
    %2874 = vmatpush1.msra.mxu0 0.0
    %2875 = vmatprep.subr.mxu0 0.0
    %2876 = vmatpush1.msra.mxu0 0.0
    %2877 = vmatprep.subr.mxu0 0.0
    %2878 = vmatpush1.msra.mxu0 0.0
    %2879 = vmatprep.subr.mxu0 0.0
    %2880 = vmatpush1.msra.mxu0 0.0
    %2881 = vmatprep.subr.mxu0 0.0
    %2882 = vmatpush1.msra.mxu0 0.0
    %2883 = vmatprep.subr.mxu0 0.0
    %2884 = vmatpush1.msra.mxu0 0.0
    %2885 = vmatprep.subr.mxu0 0.0
    %2886 = vmatpush1.msra.mxu0 0.0
    %2887 = vmatprep.subr.mxu0 0.0
    %2888 = vmatpush1.msra.mxu0 0.0
    %2889 = vmatprep.subr.mxu0 0.0
    %2890 = vmatpush1.msra.mxu0 0.0
    %2891 = vmatprep.subr.mxu0 0.0
    %2892 = vmatpush1.msra.mxu0 0.0
    %2893 = vmatprep.subr.mxu0 0.0
    %2894 = vmatpush1.msra.mxu0 0.0
    %2895 = vmatprep.subr.mxu0 0.0
    %2896 = vmatpush1.msra.mxu0 %v85
    %2897 = vmatprep.subr.mxu0 0.0
    %2898 = vmatpush1.msra.mxu0 %v84
    %2899 = vmatprep.subr.mxu0 0.0
    %2900 = vmatpush1.msra.mxu0 %v83
    %2901 = vmatprep.subr.mxu0 0.0
    %2902 = vmatpush1.msra.mxu0 %v82
    %2903 = vmatprep.subr.mxu0 0.0
    %2904 = vmatpush2.msra.mxu0 0.0
    %2905 = vmatprep.subr.mxu0 0.0
    %2906 = vmatpush2.msra.mxu0 0.0
    %2907 = vmatprep.subr.mxu0 0.0
    %2908 = vmatpush2.msra.mxu0 0.0
    %2909 = vmatprep.subr.mxu0 0.0
    %2910 = vmatpush2.msra.mxu0 0.0
    %2911 = vmatprep.subr.mxu0 0.0
    %2912 = vmatpush2.msra.mxu0 0.0
    %2913 = vmatprep.subr.mxu0 0.0
    %2914 = vmatpush2.msra.mxu0 0.0
    %2915 = vmatprep.subr.mxu0 0.0
    %2916 = vmatpush2.msra.mxu0 0.0
    %2917 = vmatprep.subr.mxu0 0.0
    %2918 = vmatpush2.msra.mxu0 0.0
    %2919 = vmatprep.subr.mxu0 0.0
    %2920 = vmatpush2.msra.mxu0 0.0
    %2921 = vmatprep.subr.mxu0 0.0
    %2922 = vmatpush2.msra.mxu0 0.0
    %2923 = vmatprep.subr.mxu0 0.0
    %2924 = vmatpush2.msra.mxu0 0.0
    %2925 = vmatprep.subr.mxu0 0.0
    %2926 = vmatpush2.msra.mxu0 0.0
    %2927 = vmatprep.subr.mxu0 0.0
    %2928 = vmatpush2.msra.mxu0 0.0
    %2929 = vmatprep.subr.mxu0 0.0
    %2930 = vmatpush2.msra.mxu0 0.0
    %2931 = vmatprep.subr.mxu0 0.0
    %2932 = vmatpush2.msra.mxu0 0.0
    %2933 = vmatprep.subr.mxu0 0.0
    %2934 = vmatpush2.msra.mxu0 0.0
    %2935 = vmatprep.mubr.f32.mxu0 0.0
    %2936 = vmatmul.mubr.f32.gmra.mxu0 %v2612
    %v2937 = vpop.f32.mrf.mxu0
    %v2938 = vadd.f32 0.0, %v2937
    %v2939 = vpop.f32.mrf.mxu0
    %2940 = vdwg.mxu0
    %2942 = vrot.lane.b32.xlu0 %v2870, 32
    %v2943 = vpop.permute.xlu0 %2942
    %v2944 = vsel %vm105, %v2943, 0
    %2946 = vmatprep.subr.mxu0 0.0
    %2947 = vmatpush1.msra.mxu0 0.0
    %2948 = vmatprep.subr.mxu0 0.0
    %2949 = vmatpush1.msra.mxu0 0.0
    %2950 = vmatprep.subr.mxu0 0.0
    %2951 = vmatpush1.msra.mxu0 0.0
    %2952 = vmatprep.subr.mxu0 0.0
    %2953 = vmatpush1.msra.mxu0 0.0
    %2954 = vmatprep.subr.mxu0 0.0
    %2955 = vmatpush1.msra.mxu0 0.0
    %2956 = vmatprep.subr.mxu0 0.0
    %2957 = vmatpush1.msra.mxu0 0.0
    %2958 = vmatprep.subr.mxu0 0.0
    %2959 = vmatpush1.msra.mxu0 0.0
    %2960 = vmatprep.subr.mxu0 0.0
    %2961 = vmatpush1.msra.mxu0 0.0
    %2962 = vmatprep.subr.mxu0 0.0
    %2963 = vmatpush1.msra.mxu0 0.0
    %2964 = vmatprep.subr.mxu0 0.0
    %2965 = vmatpush1.msra.mxu0 0.0
    %2966 = vmatprep.subr.mxu0 0.0
    %2967 = vmatpush1.msra.mxu0 0.0
    %2968 = vmatprep.subr.mxu0 0.0
    %2969 = vmatpush1.msra.mxu0 0.0
    %2970 = vmatprep.subr.mxu0 0.0
    %2971 = vmatpush1.msra.mxu0 %v81
    %2972 = vmatprep.subr.mxu0 0.0
    %2973 = vmatpush1.msra.mxu0 %v80
    %2974 = vmatprep.subr.mxu0 0.0
    %2975 = vmatpush1.msra.mxu0 %v79
    %2976 = vmatprep.subr.mxu0 0.0
    %2977 = vmatpush1.msra.mxu0 %v78
    %2978 = vmatprep.subr.mxu0 0.0
    %2979 = vmatpush2.msra.mxu0 0.0
    %2980 = vmatprep.subr.mxu0 0.0
    %2981 = vmatpush2.msra.mxu0 0.0
    %2982 = vmatprep.subr.mxu0 0.0
    %2983 = vmatpush2.msra.mxu0 0.0
    %2984 = vmatprep.subr.mxu0 0.0
    %2985 = vmatpush2.msra.mxu0 0.0
    %2986 = vmatprep.subr.mxu0 0.0
    %2987 = vmatpush2.msra.mxu0 0.0
    %2988 = vmatprep.subr.mxu0 0.0
    %2989 = vmatpush2.msra.mxu0 0.0
    %2990 = vmatprep.subr.mxu0 0.0
    %2991 = vmatpush2.msra.mxu0 0.0
    %2992 = vmatprep.subr.mxu0 0.0
    %2993 = vmatpush2.msra.mxu0 0.0
    %2994 = vmatprep.subr.mxu0 0.0
    %2995 = vmatpush2.msra.mxu0 0.0
    %2996 = vmatprep.subr.mxu0 0.0
    %2997 = vmatpush2.msra.mxu0 0.0
    %2998 = vmatprep.subr.mxu0 0.0
    %2999 = vmatpush2.msra.mxu0 0.0
    %3000 = vmatprep.subr.mxu0 0.0
    %3001 = vmatpush2.msra.mxu0 0.0
    %3002 = vmatprep.subr.mxu0 0.0
    %3003 = vmatpush2.msra.mxu0 0.0
    %3004 = vmatprep.subr.mxu0 0.0
    %3005 = vmatpush2.msra.mxu0 0.0
    %3006 = vmatprep.subr.mxu0 0.0
    %3007 = vmatpush2.msra.mxu0 0.0
    %3008 = vmatprep.subr.mxu0 0.0
    %3009 = vmatpush2.msra.mxu0 0.0
    %3010 = vmatprep.mubr.f32.mxu0 0.0
    %3011 = vmatmul.mubr.f32.gmra.mxu0 %v2944
    %v3012 = vpop.f32.mrf.mxu0
    %v3013 = vadd.f32 %v2938, %v3012
    %v3014 = vpop.f32.mrf.mxu0
    %3015 = vdwg.mxu0
    %v3016 = vadd.f32 %v3013, %v91
    %v3017 = vxor.u32 %v3016, 2147483648
    %v3018 = vmul.f32 %v3017, 1.442695
    %v3019 = vpow.pop %v3018
    %v3020 = vadd.f32 %v3019, 1.0
    %v3021 = vrcp.pop %v3020
    %v3022 = vmul.f32 1.0, %v3021
    %v3023 = vtanh.pop %v3016
    %v3024 = vmul.f32 %v3022, %v2602
    %3026 = vrot.lane.b32.xlu0 %v3023, 64
    %v3027 = vpop.permute.xlu0 %3026
    %v3029 = vmul.f32 %v3022, %v3027
    %3031 = vrot.lane.b32.xlu0 %v3029, 32
    %v3032 = vpop.permute.xlu0 %3031
    %v3034 = vadd.f32 %v3024, %v3032
    %v3035 = vtanh.pop %v3034
    %3037 = vrot.lane.b32.xlu0 %v3035, 64
    %v3038 = vpop.permute.xlu0 %3037
    %v3040 = vmul.f32 %v3022, %v3038
    %3042 = vrot.lane.b32.xlu0 %v3040, 32
    %v3043 = vpop.permute.xlu0 %3042
    %v3044 = vsel %vm105, %v3043, 0
    %3046 = vmatprep.subr.mxu0 0.0
    %3047 = vmatpush1.msra.mxu0 0.0
    %3048 = vmatprep.subr.mxu0 0.0
    %3049 = vmatpush1.msra.mxu0 0.0
    %3050 = vmatprep.subr.mxu0 0.0
    %3051 = vmatpush1.msra.mxu0 0.0
    %3052 = vmatprep.subr.mxu0 0.0
    %3053 = vmatpush1.msra.mxu0 0.0
    %3054 = vmatprep.subr.mxu0 0.0
    %3055 = vmatpush1.msra.mxu0 0.0
    %3056 = vmatprep.subr.mxu0 0.0
    %3057 = vmatpush1.msra.mxu0 0.0
    %3058 = vmatprep.subr.mxu0 0.0
    %3059 = vmatpush1.msra.mxu0 0.0
    %3060 = vmatprep.subr.mxu0 0.0
    %3061 = vmatpush1.msra.mxu0 0.0
    %3062 = vmatprep.subr.mxu0 0.0
    %3063 = vmatpush1.msra.mxu0 0.0
    %3064 = vmatprep.subr.mxu0 0.0
    %3065 = vmatpush1.msra.mxu0 0.0
    %3066 = vmatprep.subr.mxu0 0.0
    %3067 = vmatpush1.msra.mxu0 0.0
    %3068 = vmatprep.subr.mxu0 0.0
    %3069 = vmatpush1.msra.mxu0 0.0
    %3070 = vmatprep.subr.mxu0 0.0
    %3071 = vmatpush1.msra.mxu0 %v96
    %3072 = vmatprep.subr.mxu0 0.0
    %3073 = vmatpush1.msra.mxu0 %v95
    %3074 = vmatprep.subr.mxu0 0.0
    %3075 = vmatpush1.msra.mxu0 %v94
    %3076 = vmatprep.subr.mxu0 0.0
    %3077 = vmatpush1.msra.mxu0 %v93
    %3078 = vmatprep.subr.mxu0 0.0
    %3079 = vmatpush2.msra.mxu0 0.0
    %3080 = vmatprep.subr.mxu0 0.0
    %3081 = vmatpush2.msra.mxu0 0.0
    %3082 = vmatprep.subr.mxu0 0.0
    %3083 = vmatpush2.msra.mxu0 0.0
    %3084 = vmatprep.subr.mxu0 0.0
    %3085 = vmatpush2.msra.mxu0 0.0
    %3086 = vmatprep.subr.mxu0 0.0
    %3087 = vmatpush2.msra.mxu0 0.0
    %3088 = vmatprep.subr.mxu0 0.0
    %3089 = vmatpush2.msra.mxu0 0.0
    %3090 = vmatprep.subr.mxu0 0.0
    %3091 = vmatpush2.msra.mxu0 0.0
    %3092 = vmatprep.subr.mxu0 0.0
    %3093 = vmatpush2.msra.mxu0 0.0
    %3094 = vmatprep.subr.mxu0 0.0
    %3095 = vmatpush2.msra.mxu0 0.0
    %3096 = vmatprep.subr.mxu0 0.0
    %3097 = vmatpush2.msra.mxu0 0.0
    %3098 = vmatprep.subr.mxu0 0.0
    %3099 = vmatpush2.msra.mxu0 0.0
    %3100 = vmatprep.subr.mxu0 0.0
    %3101 = vmatpush2.msra.mxu0 0.0
    %3102 = vmatprep.subr.mxu0 0.0
    %3103 = vmatpush2.msra.mxu0 0.0
    %3104 = vmatprep.subr.mxu0 0.0
    %3105 = vmatpush2.msra.mxu0 0.0
    %3106 = vmatprep.subr.mxu0 0.0
    %3107 = vmatpush2.msra.mxu0 0.0
    %3108 = vmatprep.subr.mxu0 0.0
    %3109 = vmatpush2.msra.mxu0 0.0
    %3110 = vmatprep.mubr.f32.mxu0 0.0
    %3111 = vmatmul.mubr.f32.gmra.mxu0 %v3044
    %v3112 = vpop.f32.mrf.mxu0
    %v3113 = vadd.f32 %v102, %v3112
    %v3114 = vpop.f32.mrf.mxu0
    %3115 = vdwg.mxu0
    %v3117 = vrot.slane %v3113, 4
    %v3119 = vsub.f32 %v3113, %v3117
    %v3120 = vand.u32 2147483647, %v3119
    %v3121 = vsel %vm528, %v3120, 0.0
    %3122 = vadd.xlane.f32.xlu0 %v3121
    %v3123 = vpop.xlane.xlu0 %3122
    %v3124 = vrot.slane %v3123, 4
    %v3125 = vadd.f32 %v3123, %v3124
    %v3126 = vrot.slane %v3125, 2
    %v3127 = vadd.f32 %v3125, %v3126
    %v3128 = vrot.slane %v3127, 1
    %v3129 = vadd.f32 %v3127, %v3128
    %s3130 = vtos %v3129
    %v3131 = vstv %s3130
    %v3132 = vadd.f32 %v2700, %v3131
    %s3133 = scalar_lea.vmem %s0, 56
    %v3134 = vld [vmem:[%s3133] sm:$0xff]
    %3135 = vmatprep.subr.mxu0 0.0
    %3136 = vmatpush1.msra.mxu0 0.0
    %3137 = vmatprep.subr.mxu0 0.0
    %3138 = vmatpush1.msra.mxu0 0.0
    %3139 = vmatprep.subr.mxu0 0.0
    %3140 = vmatpush1.msra.mxu0 0.0
    %3141 = vmatprep.subr.mxu0 0.0
    %3142 = vmatpush1.msra.mxu0 0.0
    %3143 = vmatprep.subr.mxu0 0.0
    %3144 = vmatpush1.msra.mxu0 0.0
    %3145 = vmatprep.subr.mxu0 0.0
    %3146 = vmatpush1.msra.mxu0 0.0
    %3147 = vmatprep.subr.mxu0 0.0
    %3148 = vmatpush1.msra.mxu0 0.0
    %3149 = vmatprep.subr.mxu0 0.0
    %3150 = vmatpush1.msra.mxu0 0.0
    %3151 = vmatprep.subr.mxu0 0.0
    %3152 = vmatpush1.msra.mxu0 0.0
    %3153 = vmatprep.subr.mxu0 0.0
    %3154 = vmatpush1.msra.mxu0 0.0
    %3155 = vmatprep.subr.mxu0 0.0
    %3156 = vmatpush1.msra.mxu0 0.0
    %3157 = vmatprep.subr.mxu0 0.0
    %3158 = vmatpush1.msra.mxu0 0.0
    %3159 = vmatprep.subr.mxu0 0.0
    %3160 = vmatpush1.msra.mxu0 %v70
    %3161 = vmatprep.subr.mxu0 0.0
    %3162 = vmatpush1.msra.mxu0 %v69
    %3163 = vmatprep.subr.mxu0 0.0
    %3164 = vmatpush1.msra.mxu0 %v68
    %3165 = vmatprep.subr.mxu0 0.0
    %3166 = vmatpush1.msra.mxu0 %v67
    %3167 = vmatprep.subr.mxu0 0.0
    %3168 = vmatpush2.msra.mxu0 0.0
    %3169 = vmatprep.subr.mxu0 0.0
    %3170 = vmatpush2.msra.mxu0 0.0
    %3171 = vmatprep.subr.mxu0 0.0
    %3172 = vmatpush2.msra.mxu0 0.0
    %3173 = vmatprep.subr.mxu0 0.0
    %3174 = vmatpush2.msra.mxu0 0.0
    %3175 = vmatprep.subr.mxu0 0.0
    %3176 = vmatpush2.msra.mxu0 0.0
    %3177 = vmatprep.subr.mxu0 0.0
    %3178 = vmatpush2.msra.mxu0 0.0
    %3179 = vmatprep.subr.mxu0 0.0
    %3180 = vmatpush2.msra.mxu0 0.0
    %3181 = vmatprep.subr.mxu0 0.0
    %3182 = vmatpush2.msra.mxu0 0.0
    %3183 = vmatprep.subr.mxu0 0.0
    %3184 = vmatpush2.msra.mxu0 0.0
    %3185 = vmatprep.subr.mxu0 0.0
    %3186 = vmatpush2.msra.mxu0 0.0
    %3187 = vmatprep.subr.mxu0 0.0
    %3188 = vmatpush2.msra.mxu0 0.0
    %3189 = vmatprep.subr.mxu0 0.0
    %3190 = vmatpush2.msra.mxu0 0.0
    %3191 = vmatprep.subr.mxu0 0.0
    %3192 = vmatpush2.msra.mxu0 0.0
    %3193 = vmatprep.subr.mxu0 0.0
    %3194 = vmatpush2.msra.mxu0 0.0
    %3195 = vmatprep.subr.mxu0 0.0
    %3196 = vmatpush2.msra.mxu0 0.0
    %3197 = vmatprep.subr.mxu0 0.0
    %3198 = vmatpush2.msra.mxu0 0.0
    %3199 = vmatprep.mubr.f32.mxu0 0.0
    %3200 = vmatmul.mubr.f32.gmra.mxu0 %v2944
    %v3201 = vpop.f32.mrf.mxu0
    %v3202 = vadd.f32 0.0, %v3201
    %v3203 = vpop.f32.mrf.mxu0
    %3204 = vdwg.mxu0
    %v3206 = vsel %vm179, %v3134, 0
    %3208 = vmatprep.subr.mxu0 0.0
    %3209 = vmatpush1.msra.mxu0 0.0
    %3210 = vmatprep.subr.mxu0 0.0
    %3211 = vmatpush1.msra.mxu0 0.0
    %3212 = vmatprep.subr.mxu0 0.0
    %3213 = vmatpush1.msra.mxu0 0.0
    %3214 = vmatprep.subr.mxu0 0.0
    %3215 = vmatpush1.msra.mxu0 0.0
    %3216 = vmatprep.subr.mxu0 0.0
    %3217 = vmatpush1.msra.mxu0 0.0
    %3218 = vmatprep.subr.mxu0 0.0
    %3219 = vmatpush1.msra.mxu0 0.0
    %3220 = vmatprep.subr.mxu0 0.0
    %3221 = vmatpush1.msra.mxu0 0.0
    %3222 = vmatprep.subr.mxu0 0.0
    %3223 = vmatpush1.msra.mxu0 0.0
    %3224 = vmatprep.subr.mxu0 0.0
    %3225 = vmatpush1.msra.mxu0 0.0
    %3226 = vmatprep.subr.mxu0 0.0
    %3227 = vmatpush1.msra.mxu0 0.0
    %3228 = vmatprep.subr.mxu0 0.0
    %3229 = vmatpush1.msra.mxu0 0.0
    %3230 = vmatprep.subr.mxu0 0.0
    %3231 = vmatpush1.msra.mxu0 0.0
    %3232 = vmatprep.subr.mxu0 0.0
    %3233 = vmatpush1.msra.mxu0 0.0
    %3234 = vmatprep.subr.mxu0 0.0
    %3235 = vmatpush1.msra.mxu0 0.0
    %3236 = vmatprep.subr.mxu0 0.0
    %3237 = vmatpush1.msra.mxu0 %v66
    %3238 = vmatprep.subr.mxu0 0.0
    %3239 = vmatpush1.msra.mxu0 %v65
    %3240 = vmatprep.subr.mxu0 0.0
    %3241 = vmatpush2.msra.mxu0 0.0
    %3242 = vmatprep.subr.mxu0 0.0
    %3243 = vmatpush2.msra.mxu0 0.0
    %3244 = vmatprep.subr.mxu0 0.0
    %3245 = vmatpush2.msra.mxu0 0.0
    %3246 = vmatprep.subr.mxu0 0.0
    %3247 = vmatpush2.msra.mxu0 0.0
    %3248 = vmatprep.subr.mxu0 0.0
    %3249 = vmatpush2.msra.mxu0 0.0
    %3250 = vmatprep.subr.mxu0 0.0
    %3251 = vmatpush2.msra.mxu0 0.0
    %3252 = vmatprep.subr.mxu0 0.0
    %3253 = vmatpush2.msra.mxu0 0.0
    %3254 = vmatprep.subr.mxu0 0.0
    %3255 = vmatpush2.msra.mxu0 0.0
    %3256 = vmatprep.subr.mxu0 0.0
    %3257 = vmatpush2.msra.mxu0 0.0
    %3258 = vmatprep.subr.mxu0 0.0
    %3259 = vmatpush2.msra.mxu0 0.0
    %3260 = vmatprep.subr.mxu0 0.0
    %3261 = vmatpush2.msra.mxu0 0.0
    %3262 = vmatprep.subr.mxu0 0.0
    %3263 = vmatpush2.msra.mxu0 0.0
    %3264 = vmatprep.subr.mxu0 0.0
    %3265 = vmatpush2.msra.mxu0 0.0
    %3266 = vmatprep.subr.mxu0 0.0
    %3267 = vmatpush2.msra.mxu0 0.0
    %3268 = vmatprep.subr.mxu0 0.0
    %3269 = vmatpush2.msra.mxu0 0.0
    %3270 = vmatprep.subr.mxu0 0.0
    %3271 = vmatpush2.msra.mxu0 0.0
    %3272 = vmatprep.mubr.f32.mxu0 0.0
    %3273 = vmatmul.mubr.f32.gmra.mxu0 %v3206
    %v3274 = vpop.f32.mrf.mxu0
    %v3275 = vadd.f32 %v3202, %v3274
    %v3276 = vpop.f32.mrf.mxu0
    %3277 = vdwg.mxu0
    %v3278 = vadd.f32 %v3275, %v76
    %v3279 = vxor.u32 %v3278, 2147483648
    %v3280 = vmul.f32 %v3279, 1.442695
    %v3281 = vpow.pop %v3280
    %v3282 = vadd.f32 %v3281, 1.0
    %v3283 = vrcp.pop %v3282
    %v3284 = vmul.f32 1.0, %v3283
    %v3285 = vtanh.pop %v3278
    %v3286 = vmul.f32 %v3284, %v2864
    %3288 = vrot.lane.b32.xlu0 %v3285, 64
    %v3289 = vpop.permute.xlu0 %3288
    %v3291 = vmul.f32 %v3284, %v3289
    %3293 = vrot.lane.b32.xlu0 %v3291, 32
    %v3294 = vpop.permute.xlu0 %3293
    %v3296 = vadd.f32 %v3286, %v3294
    %v3297 = vtanh.pop %v3296
    %3299 = vrot.lane.b32.xlu0 %v3297, 64
    %v3300 = vpop.permute.xlu0 %3299
    %v3302 = vmul.f32 %v3284, %v3300
    %3303 = vmatprep.subr.mxu0 0.0
    %3304 = vmatpush1.msra.mxu0 0.0
    %3305 = vmatprep.subr.mxu0 0.0
    %3306 = vmatpush1.msra.mxu0 0.0
    %3307 = vmatprep.subr.mxu0 0.0
    %3308 = vmatpush1.msra.mxu0 0.0
    %3309 = vmatprep.subr.mxu0 0.0
    %3310 = vmatpush1.msra.mxu0 0.0
    %3311 = vmatprep.subr.mxu0 0.0
    %3312 = vmatpush1.msra.mxu0 0.0
    %3313 = vmatprep.subr.mxu0 0.0
    %3314 = vmatpush1.msra.mxu0 0.0
    %3315 = vmatprep.subr.mxu0 0.0
    %3316 = vmatpush1.msra.mxu0 0.0
    %3317 = vmatprep.subr.mxu0 0.0
    %3318 = vmatpush1.msra.mxu0 0.0
    %3319 = vmatprep.subr.mxu0 0.0
    %3320 = vmatpush1.msra.mxu0 0.0
    %3321 = vmatprep.subr.mxu0 0.0
    %3322 = vmatpush1.msra.mxu0 0.0
    %3323 = vmatprep.subr.mxu0 0.0
    %3324 = vmatpush1.msra.mxu0 0.0
    %3325 = vmatprep.subr.mxu0 0.0
    %3326 = vmatpush1.msra.mxu0 0.0
    %3327 = vmatprep.subr.mxu0 0.0
    %3328 = vmatpush1.msra.mxu0 %v85
    %3329 = vmatprep.subr.mxu0 0.0
    %3330 = vmatpush1.msra.mxu0 %v84
    %3331 = vmatprep.subr.mxu0 0.0
    %3332 = vmatpush1.msra.mxu0 %v83
    %3333 = vmatprep.subr.mxu0 0.0
    %3334 = vmatpush1.msra.mxu0 %v82
    %3335 = vmatprep.subr.mxu0 0.0
    %3336 = vmatpush2.msra.mxu0 0.0
    %3337 = vmatprep.subr.mxu0 0.0
    %3338 = vmatpush2.msra.mxu0 0.0
    %3339 = vmatprep.subr.mxu0 0.0
    %3340 = vmatpush2.msra.mxu0 0.0
    %3341 = vmatprep.subr.mxu0 0.0
    %3342 = vmatpush2.msra.mxu0 0.0
    %3343 = vmatprep.subr.mxu0 0.0
    %3344 = vmatpush2.msra.mxu0 0.0
    %3345 = vmatprep.subr.mxu0 0.0
    %3346 = vmatpush2.msra.mxu0 0.0
    %3347 = vmatprep.subr.mxu0 0.0
    %3348 = vmatpush2.msra.mxu0 0.0
    %3349 = vmatprep.subr.mxu0 0.0
    %3350 = vmatpush2.msra.mxu0 0.0
    %3351 = vmatprep.subr.mxu0 0.0
    %3352 = vmatpush2.msra.mxu0 0.0
    %3353 = vmatprep.subr.mxu0 0.0
    %3354 = vmatpush2.msra.mxu0 0.0
    %3355 = vmatprep.subr.mxu0 0.0
    %3356 = vmatpush2.msra.mxu0 0.0
    %3357 = vmatprep.subr.mxu0 0.0
    %3358 = vmatpush2.msra.mxu0 0.0
    %3359 = vmatprep.subr.mxu0 0.0
    %3360 = vmatpush2.msra.mxu0 0.0
    %3361 = vmatprep.subr.mxu0 0.0
    %3362 = vmatpush2.msra.mxu0 0.0
    %3363 = vmatprep.subr.mxu0 0.0
    %3364 = vmatpush2.msra.mxu0 0.0
    %3365 = vmatprep.subr.mxu0 0.0
    %3366 = vmatpush2.msra.mxu0 0.0
    %3367 = vmatprep.mubr.f32.mxu0 0.0
    %3368 = vmatmul.mubr.f32.gmra.mxu0 %v3044
    %v3369 = vpop.f32.mrf.mxu0
    %v3370 = vadd.f32 0.0, %v3369
    %v3371 = vpop.f32.mrf.mxu0
    %3372 = vdwg.mxu0
    %3374 = vrot.lane.b32.xlu0 %v3302, 32
    %v3375 = vpop.permute.xlu0 %3374
    %v3376 = vsel %vm105, %v3375, 0
    %3378 = vmatprep.subr.mxu0 0.0
    %3379 = vmatpush1.msra.mxu0 0.0
    %3380 = vmatprep.subr.mxu0 0.0
    %3381 = vmatpush1.msra.mxu0 0.0
    %3382 = vmatprep.subr.mxu0 0.0
    %3383 = vmatpush1.msra.mxu0 0.0
    %3384 = vmatprep.subr.mxu0 0.0
    %3385 = vmatpush1.msra.mxu0 0.0
    %3386 = vmatprep.subr.mxu0 0.0
    %3387 = vmatpush1.msra.mxu0 0.0
    %3388 = vmatprep.subr.mxu0 0.0
    %3389 = vmatpush1.msra.mxu0 0.0
    %3390 = vmatprep.subr.mxu0 0.0
    %3391 = vmatpush1.msra.mxu0 0.0
    %3392 = vmatprep.subr.mxu0 0.0
    %3393 = vmatpush1.msra.mxu0 0.0
    %3394 = vmatprep.subr.mxu0 0.0
    %3395 = vmatpush1.msra.mxu0 0.0
    %3396 = vmatprep.subr.mxu0 0.0
    %3397 = vmatpush1.msra.mxu0 0.0
    %3398 = vmatprep.subr.mxu0 0.0
    %3399 = vmatpush1.msra.mxu0 0.0
    %3400 = vmatprep.subr.mxu0 0.0
    %3401 = vmatpush1.msra.mxu0 0.0
    %3402 = vmatprep.subr.mxu0 0.0
    %3403 = vmatpush1.msra.mxu0 %v81
    %3404 = vmatprep.subr.mxu0 0.0
    %3405 = vmatpush1.msra.mxu0 %v80
    %3406 = vmatprep.subr.mxu0 0.0
    %3407 = vmatpush1.msra.mxu0 %v79
    %3408 = vmatprep.subr.mxu0 0.0
    %3409 = vmatpush1.msra.mxu0 %v78
    %3410 = vmatprep.subr.mxu0 0.0
    %3411 = vmatpush2.msra.mxu0 0.0
    %3412 = vmatprep.subr.mxu0 0.0
    %3413 = vmatpush2.msra.mxu0 0.0
    %3414 = vmatprep.subr.mxu0 0.0
    %3415 = vmatpush2.msra.mxu0 0.0
    %3416 = vmatprep.subr.mxu0 0.0
    %3417 = vmatpush2.msra.mxu0 0.0
    %3418 = vmatprep.subr.mxu0 0.0
    %3419 = vmatpush2.msra.mxu0 0.0
    %3420 = vmatprep.subr.mxu0 0.0
    %3421 = vmatpush2.msra.mxu0 0.0
    %3422 = vmatprep.subr.mxu0 0.0
    %3423 = vmatpush2.msra.mxu0 0.0
    %3424 = vmatprep.subr.mxu0 0.0
    %3425 = vmatpush2.msra.mxu0 0.0
    %3426 = vmatprep.subr.mxu0 0.0
    %3427 = vmatpush2.msra.mxu0 0.0
    %3428 = vmatprep.subr.mxu0 0.0
    %3429 = vmatpush2.msra.mxu0 0.0
    %3430 = vmatprep.subr.mxu0 0.0
    %3431 = vmatpush2.msra.mxu0 0.0
    %3432 = vmatprep.subr.mxu0 0.0
    %3433 = vmatpush2.msra.mxu0 0.0
    %3434 = vmatprep.subr.mxu0 0.0
    %3435 = vmatpush2.msra.mxu0 0.0
    %3436 = vmatprep.subr.mxu0 0.0
    %3437 = vmatpush2.msra.mxu0 0.0
    %3438 = vmatprep.subr.mxu0 0.0
    %3439 = vmatpush2.msra.mxu0 0.0
    %3440 = vmatprep.subr.mxu0 0.0
    %3441 = vmatpush2.msra.mxu0 0.0
    %3442 = vmatprep.mubr.f32.mxu0 0.0
    %3443 = vmatmul.mubr.f32.gmra.mxu0 %v3376
    %v3444 = vpop.f32.mrf.mxu0
    %v3445 = vadd.f32 %v3370, %v3444
    %v3446 = vpop.f32.mrf.mxu0
    %3447 = vdwg.mxu0
    %v3448 = vadd.f32 %v3445, %v91
    %v3449 = vxor.u32 %v3448, 2147483648
    %v3450 = vmul.f32 %v3449, 1.442695
    %v3451 = vpow.pop %v3450
    %v3452 = vadd.f32 %v3451, 1.0
    %v3453 = vrcp.pop %v3452
    %v3454 = vmul.f32 1.0, %v3453
    %v3455 = vtanh.pop %v3448
    %v3456 = vmul.f32 %v3454, %v3034
    %3458 = vrot.lane.b32.xlu0 %v3455, 64
    %v3459 = vpop.permute.xlu0 %3458
    %v3461 = vmul.f32 %v3454, %v3459
    %3463 = vrot.lane.b32.xlu0 %v3461, 32
    %v3464 = vpop.permute.xlu0 %3463
    %v3466 = vadd.f32 %v3456, %v3464
    %v3467 = vtanh.pop %v3466
    %3469 = vrot.lane.b32.xlu0 %v3467, 64
    %v3470 = vpop.permute.xlu0 %3469
    %v3472 = vmul.f32 %v3454, %v3470
    %3474 = vrot.lane.b32.xlu0 %v3472, 32
    %v3475 = vpop.permute.xlu0 %3474
    %v3476 = vsel %vm105, %v3475, 0
    %3478 = vmatprep.subr.mxu0 0.0
    %3479 = vmatpush1.msra.mxu0 0.0
    %3480 = vmatprep.subr.mxu0 0.0
    %3481 = vmatpush1.msra.mxu0 0.0
    %3482 = vmatprep.subr.mxu0 0.0
    %3483 = vmatpush1.msra.mxu0 0.0
    %3484 = vmatprep.subr.mxu0 0.0
    %3485 = vmatpush1.msra.mxu0 0.0
    %3486 = vmatprep.subr.mxu0 0.0
    %3487 = vmatpush1.msra.mxu0 0.0
    %3488 = vmatprep.subr.mxu0 0.0
    %3489 = vmatpush1.msra.mxu0 0.0
    %3490 = vmatprep.subr.mxu0 0.0
    %3491 = vmatpush1.msra.mxu0 0.0
    %3492 = vmatprep.subr.mxu0 0.0
    %3493 = vmatpush1.msra.mxu0 0.0
    %3494 = vmatprep.subr.mxu0 0.0
    %3495 = vmatpush1.msra.mxu0 0.0
    %3496 = vmatprep.subr.mxu0 0.0
    %3497 = vmatpush1.msra.mxu0 0.0
    %3498 = vmatprep.subr.mxu0 0.0
    %3499 = vmatpush1.msra.mxu0 0.0
    %3500 = vmatprep.subr.mxu0 0.0
    %3501 = vmatpush1.msra.mxu0 0.0
    %3502 = vmatprep.subr.mxu0 0.0
    %3503 = vmatpush1.msra.mxu0 %v96
    %3504 = vmatprep.subr.mxu0 0.0
    %3505 = vmatpush1.msra.mxu0 %v95
    %3506 = vmatprep.subr.mxu0 0.0
    %3507 = vmatpush1.msra.mxu0 %v94
    %3508 = vmatprep.subr.mxu0 0.0
    %3509 = vmatpush1.msra.mxu0 %v93
    %3510 = vmatprep.subr.mxu0 0.0
    %3511 = vmatpush2.msra.mxu0 0.0
    %3512 = vmatprep.subr.mxu0 0.0
    %3513 = vmatpush2.msra.mxu0 0.0
    %3514 = vmatprep.subr.mxu0 0.0
    %3515 = vmatpush2.msra.mxu0 0.0
    %3516 = vmatprep.subr.mxu0 0.0
    %3517 = vmatpush2.msra.mxu0 0.0
    %3518 = vmatprep.subr.mxu0 0.0
    %3519 = vmatpush2.msra.mxu0 0.0
    %3520 = vmatprep.subr.mxu0 0.0
    %3521 = vmatpush2.msra.mxu0 0.0
    %3522 = vmatprep.subr.mxu0 0.0
    %3523 = vmatpush2.msra.mxu0 0.0
    %3524 = vmatprep.subr.mxu0 0.0
    %3525 = vmatpush2.msra.mxu0 0.0
    %3526 = vmatprep.subr.mxu0 0.0
    %3527 = vmatpush2.msra.mxu0 0.0
    %3528 = vmatprep.subr.mxu0 0.0
    %3529 = vmatpush2.msra.mxu0 0.0
    %3530 = vmatprep.subr.mxu0 0.0
    %3531 = vmatpush2.msra.mxu0 0.0
    %3532 = vmatprep.subr.mxu0 0.0
    %3533 = vmatpush2.msra.mxu0 0.0
    %3534 = vmatprep.subr.mxu0 0.0
    %3535 = vmatpush2.msra.mxu0 0.0
    %3536 = vmatprep.subr.mxu0 0.0
    %3537 = vmatpush2.msra.mxu0 0.0
    %3538 = vmatprep.subr.mxu0 0.0
    %3539 = vmatpush2.msra.mxu0 0.0
    %3540 = vmatprep.subr.mxu0 0.0
    %3541 = vmatpush2.msra.mxu0 0.0
    %3542 = vmatprep.mubr.f32.mxu0 0.0
    %3543 = vmatmul.mubr.f32.gmra.mxu0 %v3476
    %v3544 = vpop.f32.mrf.mxu0
    %v3545 = vadd.f32 %v102, %v3544
    %v3546 = vpop.f32.mrf.mxu0
    %3547 = vdwg.mxu0
    %v3549 = vrot.slane %v3545, 4
    %v3551 = vsub.f32 %v3545, %v3549
    %v3552 = vand.u32 2147483647, %v3551
    %v3553 = vsel %vm528, %v3552, 0.0
    %3554 = vadd.xlane.f32.xlu0 %v3553
    %v3555 = vpop.xlane.xlu0 %3554
    %v3556 = vrot.slane %v3555, 4
    %v3557 = vadd.f32 %v3555, %v3556
    %v3558 = vrot.slane %v3557, 2
    %v3559 = vadd.f32 %v3557, %v3558
    %v3560 = vrot.slane %v3559, 1
    %v3561 = vadd.f32 %v3559, %v3560
    %s3562 = vtos %v3561
    %v3563 = vstv %s3562
    %v3564 = vadd.f32 %v3132, %v3563
    %v3565 = vsub.f32 0.0, %v3564
    %v3566 = vmul.f32 %v3565, 1.442695
    %v3567 = vpow.pop %v3566
    %v3568 = vld [vmem:[%s9] sm:$0xff]
    %v3569 = vmul.f32 %v3567, %v3568
    %vm3570 = vcmask 64512
    %v3571 = vsel %vm3570, %v3569, 0.0
    %v3572 = vrot.slane %v3571, 4
    %v3573 = vadd.f32 %v3571, %v3572
    %v3574 = vrot.slane %v3573, 2
    %v3575 = vadd.f32 %v3573, %v3574
    %v3576 = vrot.slane %v3575, 1
    %v3577 = vadd.f32 %v3575, %v3576
    %v3578 = vld [vmem:[%s10] sm:$0x1]
    %v3579 = vadd.f32 %v3577, %v3578
    %v3580 = vxor.u32 %v3579, 2147483648
    %v3581 = vmul.f32 %v3580, 1.442695
    %v3582 = vpow.pop %v3581
    %v3583 = vadd.f32 %v3582, 1.0
    %v3584 = vrcp.pop %v3583
    %v3585 = vmul.f32 1.0, %v3584
    %vm3586 = vcmask 57344
    %3587 = vst.msk [vmem:[#allocation7] sm:$0x1] %vm3586, %v3585
    // Predicated region
    $region54: #{siamese_forward.1} parent=1 // pred_check
      _
    $region55: #{siamese_forward.1} parent=1 // pred_check_branch
      %3589 = sbr.rel (0) target = $region57
    $region56: #{siamese_forward.1} parent=1 // pred_region
      %s3591 = ssub.s32 16, 16
      %3592 = vsyncadd [#allocation4], %s3591
      %s3594 = sshll.u32 [#allocation7], 4
      %s3595 = int_to_ptr.vmem [resolvable:$true] %s3594
      %3597 = dma.vmem_to_hbm [thread:$0]  %s3595, 16, %s11, [#allocation4]
    $region57: #{siamese_forward.1} parent=1 // pred_fallthru
      _
    // Predicated region
    $region58: #{siamese_forward.1} parent=1 // pred_check
      _
    $region59: #{siamese_forward.1} parent=1 // pred_check_branch
      %3599 = sbr.rel (0) target = $region61
    $region60: #{siamese_forward.1} parent=1 // pred_region
      %3600 = dma.done [#allocation4], 16
    $region61: #{siamese_forward.1} parent=1 // pred_fallthru
      _
    %3601 = vsyncpa [#allocation3], 1
    %3602 = vsyncpa [#allocation6], 1
    %3603 = vsyncpa [#allocation4], 1

</llo_original>
